<compile_context>
chip_gen: v6e
topology: v6e:2x2x1
jax: 0.10.0
libtpu: 0.0.40
codegen_flags: <defaults>
</compile_context>

<pallas_src>
import jax
import jax.numpy as jnp
from jax.experimental import pallas as pl
from jax.experimental.pallas import tpu as pltpu

LANE = 128
SUBLANE = 8
GATE_COLS = 2 * LANE          # packed [r|z] tile + [n] tile


def _round_up(x, m):
    return ((x + m - 1) // m) * m


# ------------------------------ Fused kernel ---------------------------------

def _gru_model_kernel(
    x_ref,                                          # (T*Bp, Ip)  f32
    wih1_ref, whh1_ref, b1_ref, bhn1_ref,           # layer 1 (packed, bf16 W)
    wih2_ref, whh2_ref, b2_ref, bhn2_ref,           # layer 2
    wih3_ref, whh3_ref, b3_ref, bhn3_ref,           # layer 3
    wfc_ref, bfc_ref,                               # final linear (packed)
    out_ref,                                        # (Bp, Op)  f32
    gi1_ref,                                        # VMEM scratch (T*Bp, 256)
):
    Bp = out_ref.shape[0]
    T = x_ref.shape[0] // Bp
    f32 = jnp.float32
    bf16 = jnp.bfloat16

    # ---- Hoisted layer-1 input projection (+ folded r/z/n input biases),
    # streamed to VMEM scratch so it is never held in vregs across the loop.
    gi1_ref[...] = (
        jnp.dot(x_ref[...].astype(bf16), wih1_ref[...],
                preferred_element_type=f32)
        + b1_ref[...]
    )

    # ---- Bias broadcasts hoisted out of the unrolled loop
    # (JAX does not CSE broadcast_in_dim).
    bhn1 = jnp.broadcast_to(bhn1_ref[...], (Bp, LANE))
    bhn2 = jnp.broadcast_to(bhn2_ref[...], (Bp, LANE))
    bhn3 = jnp.broadcast_to(bhn3_ref[...], (Bp, LANE))
    b2 = jnp.broadcast_to(b2_ref[...], (Bp, GATE_COLS))
    b3 = jnp.broadcast_to(b3_ref[...], (Bp, GATE_COLS))

    def gru_step(gi, h, whh_ref, bhn):
        """One GRU timestep.  `gi` already holds x@W_ih + folded input biases.

        Gate lane layout over the 256 packed gate columns:
          tile A (lanes [0,128)):   r at [0,H), z at [64, 64+H)
          tile B (lanes [128,256)): n at [0,H)
        Weight matrix is read from its VMEM ref here (inside the unrolled
        loop) so its live range stays short.
        """
        gh = jnp.dot(h.astype(bf16), whh_ref[...], preferred_element_type=f32)
        rz = jax.nn.sigmoid(gi[:, :LANE] + gh[:, :LANE])     # r|z: 1 EUP op
        z = pltpu.roll(rz, shift=LANE // 2, axis=1)          # z -> lanes [0,H)
        n = jnp.tanh(gi[:, LANE:] + rz * (gh[:, LANE:] + bhn))
        return n + z * (h - n)
        # Padded lanes/rows provably stay zero: zero weight columns + zero
        # biases give n=0 and h-n=0 there, so h_new = 0.

    def project(h, wih_ref, b):
        """Next layer's input projection for this timestep (off the h->h chain)."""
        return jnp.dot(h.astype(bf16), wih_ref[...], preferred_element_type=f32) + b

    h1 = jnp.zeros((Bp, LANE), f32)
    h2 = jnp.zeros((Bp, LANE), f32)
    h3 = jnp.zeros((Bp, LANE), f32)
    gi2 = jnp.zeros((Bp, GATE_COLS), f32)
    gi3 = jnp.zeros((Bp, GATE_COLS), f32)

    # ---- Wavefront over timesteps.  All guards are static Python conditions
    # on the fully-unrolled loop.  Within one global step the three layer
    # updates are mutually independent (each reads previous-step bindings), so
    # their MXU / EUP chains interleave.
    for s in range(T + 2):
        if s >= 2:                       # layer 3 @ t = s-2
            h3 = gru_step(gi3, h3, whh3_ref, bhn3)
        if 1 <= s <= T:                  # layer 2 @ t = s-1
            h2 = gru_step(gi2, h2, whh2_ref, bhn2)
            gi3 = project(h2, wih3_ref, b3)      # feeds layer 3 at step s+1
        if s < T:                        # layer 1 @ t = s
            gi1_t = gi1_ref[s * Bp:(s + 1) * Bp, :]     # streamed from VMEM
            h1 = gru_step(gi1_t, h1, whh1_ref, bhn1)
            gi2 = project(h1, wih2_ref, b2)      # feeds layer 2 at step s+1

    # ---- Final Linear on layer-3's last hidden state.
    out_ref[...] = (
        jnp.dot(h3.astype(bf16), wfc_ref[...], preferred_element_type=f32)
        + bfc_ref[...]
    )


# --------------------------- Parameter init / prep ----------------------------

def init_gru_params(key, input_size, hidden_size):
    """Raw PyTorch-layout nn.GRU params: U(-1/sqrt(H), 1/sqrt(H)), gates [r,z,n]."""
    k = 1.0 / jnp.sqrt(float(hidden_size))
    k1, k2, k3, k4 = jax.random.split(key, 4)
    return dict(
        w_ih=jax.random.uniform(k1, (3 * hidden_size, input_size), jnp.float32, -k, k),
        w_hh=jax.random.uniform(k2, (3 * hidden_size, hidden_size), jnp.float32, -k, k),
        b_ih=jax.random.uniform(k3, (3 * hidden_size,), jnp.float32, -k, k),
        b_hh=jax.random.uniform(k4, (3 * hidden_size,), jnp.float32, -k, k),
    )


def init_linear_params(key, in_features, out_features):
    k = 1.0 / jnp.sqrt(float(in_features))
    k1, k2 = jax.random.split(key, 2)
    return dict(
        w=jax.random.uniform(k1, (out_features, in_features), jnp.float32, -k, k),
        b=jax.random.uniform(k2, (out_features,), jnp.float32, -k, k),
    )


def prep_gru_params(p, in_pad):
    """Pack PyTorch GRU params for the kernel (x @ W layout, bf16 weights).

    Packed gate layout over 2*LANE = 256 columns:
      tile A (cols [0,128)):   r at [0,H), z at [64, 64+H)
      tile B (cols [128,256)): n at [0,H)
    r/z biases are pre-folded (b_ih + b_hh); the n gate keeps b_ih in the slab
    and b_hh separately (it sits inside the r* term in PyTorch's equations).
    """
    three_h, in_f = p["w_ih"].shape
    H = three_h // 3
    assert H <= LANE // 2, "r|z one-tile packing requires H <= 64"
    assert in_f <= in_pad

    col_r, col_z, col_n = 0, LANE // 2, LANE

    def pack_w(w, rows_pad):             # w: (3H, rows_real), PyTorch layout
        rows_real = w.shape[1]
        out = jnp.zeros((rows_pad, GATE_COLS), jnp.float32)
        out = out.at[:rows_real, col_r:col_r + H].set(w[0:H, :].T)
        out = out.at[:rows_real, col_z:col_z + H].set(w[H:2 * H, :].T)
        out = out.at[:rows_real, col_n:col_n + H].set(w[2 * H:3 * H, :].T)
        return out.astype(jnp.bfloat16)

    wih = pack_w(p["w_ih"], in_pad)
    whh = pack_w(p["w_hh"], LANE)

    b_ih, b_hh = p["b_ih"], p["b_hh"]
    b = jnp.zeros((1, GATE_COLS), jnp.float32)
    b = b.at[0, col_r:col_r + H].set(b_ih[0:H] + b_hh[0:H])                   # r
    b = b.at[0, col_z:col_z + H].set(b_ih[H:2 * H] + b_hh[H:2 * H])           # z
    b = b.at[0, col_n:col_n + H].set(b_ih[2 * H:3 * H])                       # n (b_ih)
    bhn = jnp.zeros((1, LANE), jnp.float32).at[0, :H].set(b_hh[2 * H:3 * H])  # n (b_hh)
    return dict(wih=wih, whh=whh, b=b, bhn=bhn)


def prep_fc_params(p, out_pad):
    out_f, H = p["w"].shape
    w = jnp.zeros((LANE, out_pad), jnp.float32).at[:H, :out_f].set(p["w"].T)
    b = jnp.zeros((1, out_pad), jnp.float32).at[0, :out_f].set(p["b"])
    return dict(w=w.astype(jnp.bfloat16), b=b)


# ------------------------------- Forward pass ---------------------------------

@jax.jit
def _forward_padded(kp, x_btc):
    """x_btc: (B, T, In) batch-first.  Returns padded (Bp, Op) f32 output."""
    B, T, In = x_btc.shape
    Bp = _round_up(max(B, SUBLANE), SUBLANE)
    Ip = kp["gru1"]["wih"].shape[0]
    Op = kp["fc"]["w"].shape[1]

    # batch-first -> time-major, pad batch to Bp sublanes / features to Ip
    # lanes, flatten to one lane-dense (T*Bp, Ip) slab.
    # TODO(synk): fuse this tiny layout prep into the pallas_call input via
    # CompilerParams(allow_input_fusion=...) to drop the extra XLA launches.
    x_tb = jnp.transpose(x_btc.astype(jnp.float32), (1, 0, 2))       # (T, B, In)
    x2d = jnp.zeros((T, Bp, Ip), jnp.float32).at[:, :B, :In].set(x_tb)
    x2d = x2d.reshape(T * Bp, Ip)

    return pl.pallas_call(
        _gru_model_kernel,
        out_shape=jax.ShapeDtypeStruct((Bp, Op), jnp.float32),
        in_specs=[pl.BlockSpec(memory_space=pltpu.MemorySpace.VMEM)] * 15,
        out_specs=pl.BlockSpec(memory_space=pltpu.MemorySpace.VMEM),
        scratch_shapes=[
            pltpu.VMEM((T * Bp, GATE_COLS), jnp.float32),   # layer-1 gi stream
        ],
    )(
        x2d,
        kp["gru1"]["wih"], kp["gru1"]["whh"], kp["gru1"]["b"], kp["gru1"]["bhn"],
        kp["gru2"]["wih"], kp["gru2"]["whh"], kp["gru2"]["b"], kp["gru2"]["bhn"],
        kp["gru3"]["wih"], kp["gru3"]["whh"], kp["gru3"]["b"], kp["gru3"]["bhn"],
        kp["fc"]["w"], kp["fc"]["b"],
    )


def gru_model_forward(kparams, x_btc, output_size):
    out = _forward_padded(kparams, x_btc)
    return out[: x_btc.shape[0], :output_size]


# ---------------------------- Pure-JAX reference -------------------------------

def _gru_layer_ref(x_tbc, p):
    H = p["w_hh"].shape[1]
    w_ih_t, w_hh_t = p["w_ih"].T, p["w_hh"].T

    def step(h, x_t):
        gi = x_t @ w_ih_t + p["b_ih"]
        gh = h @ w_hh_t + p["b_hh"]
        i_r, i_z, i_n = gi[:, :H], gi[:, H:2 * H], gi[:, 2 * H:]
        h_r, h_z, h_n = gh[:, :H], gh[:, H:2 * H], gh[:, 2 * H:]
        r = jax.nn.sigmoid(i_r + h_r)
        z = jax.nn.sigmoid(i_z + h_z)
        n = jnp.tanh(i_n + r * h_n)
        h_new = (1.0 - z) * n + z * h
        return h_new, h_new

    h0 = jnp.zeros((x_tbc.shape[1], H), jnp.float32)
    _, outs = jax.lax.scan(step, h0, x_tbc)
    return outs


def gru_model_ref(raw, x_btc):
    x_tbc = jnp.transpose(x_btc, (1, 0, 2)).astype(jnp.float32)
    out1 = _gru_layer_ref(x_tbc, raw["gru1"])
    out2 = _gru_layer_ref(out1, raw["gru2"])
    out3 = _gru_layer_ref(out2, raw["gru3"])
    return out3[-1] @ raw["fc"]["w"].T + raw["fc"]["b"]


# ----------------------------------- Main --------------------------------------

if __name__ == "__main__":
    input_size = 1
    hidden_size = 32
    output_size = 1
    batch = 2
    seq = 8

    root = jax.random.PRNGKey(0)
    k_x, k1, k2, k3, k4 = jax.random.split(root, 5)

    raw_params = {
        "gru1": init_gru_params(k1, input_size, hidden_size),
        "gru2": init_gru_params(k2, hidden_size, 2 * hidden_size),
        "gru3": init_gru_params(k3, 2 * hidden_size, hidden_size),
        "fc": init_linear_params(k4, hidden_size, output_size),
    }

    Ip = _round_up(input_size, LANE)
    Op = _round_up(output_size, LANE)

    kernel_params = {
        "gru1": prep_gru_params(raw_params["gru1"], Ip),
        "gru2": prep_gru_params(raw_params["gru2"], LANE),
        "gru3": prep_gru_params(raw_params["gru3"], LANE),
        "fc": prep_fc_params(raw_params["fc"], Op),
    }

    x = jax.random.normal(k_x, (batch, seq, input_size), jnp.float32)

    out = gru_model_forward(kernel_params, x, output_size)
    out = jax.block_until_ready(out)

    ref = gru_model_ref(raw_params, x)
    assert out.shape == (batch, output_size), out.shape
    # Tolerance loosened vs. the f32 reference because weights and the MXU LHS
    # are fed in bf16 (element-wise math stays f32); typical error is ~1e-3.
    assert jnp.allclose(out, ref, atol=3e-2, rtol=3e-2), (out, ref)

    print("KERNEL_OK")
</pallas_src>

<mosaic_0001>
module attributes {stable_mosaic.version = 11 : i64} {
  func.func @_gru_model_kernel(%arg0: memref<64x128xf32, #tpu.memory_space<vmem>>, %arg1: memref<128x256xbf16, #tpu.memory_space<vmem>>, %arg2: memref<128x256xbf16, #tpu.memory_space<vmem>>, %arg3: memref<1x256xf32, #tpu.memory_space<vmem>>, %arg4: memref<1x128xf32, #tpu.memory_space<vmem>>, %arg5: memref<128x256xbf16, #tpu.memory_space<vmem>>, %arg6: memref<128x256xbf16, #tpu.memory_space<vmem>>, %arg7: memref<1x256xf32, #tpu.memory_space<vmem>>, %arg8: memref<1x128xf32, #tpu.memory_space<vmem>>, %arg9: memref<128x256xbf16, #tpu.memory_space<vmem>>, %arg10: memref<128x256xbf16, #tpu.memory_space<vmem>>, %arg11: memref<1x256xf32, #tpu.memory_space<vmem>>, %arg12: memref<1x128xf32, #tpu.memory_space<vmem>>, %arg13: memref<128x128xbf16, #tpu.memory_space<vmem>>, %arg14: memref<1x128xf32, #tpu.memory_space<vmem>>, %arg15: memref<8x128xf32, #tpu.memory_space<vmem>>, %arg16: memref<64x256xf32, #tpu.memory_space<vmem>>) attributes {dimension_semantics = [], scalar_prefetch = 0 : i64, scratch_operands = 1 : i64, tpu.core_type = #tpu.core_type<tc>} {
    %c0 = arith.constant 0 : index
    %c0_0 = arith.constant 0 : index
    %0 = vector.load %arg0[%c0, %c0_0] : memref<64x128xf32, #tpu.memory_space<vmem>>, vector<64x128xf32>
    %1 = arith.truncf %0 : vector<64x128xf32> to vector<64x128xbf16>
    %c0_1 = arith.constant 0 : index
    %c0_2 = arith.constant 0 : index
    %2 = vector.load %arg1[%c0_1, %c0_2] : memref<128x256xbf16, #tpu.memory_space<vmem>>, vector<128x256xbf16>
    %cst = arith.constant dense<0.000000e+00> : vector<64x256xf32>
    %3 = tpu.matmul %1, %2, %cst {dimension_numbers = #tpu.dot_dimension_numbers<[1], [0], [0], [1], [0, 0, 1, 1], [], []>} : vector<64x128xbf16>, vector<128x256xbf16>, vector<64x256xf32> -> vector<64x256xf32>
    %c0_3 = arith.constant 0 : index
    %c0_4 = arith.constant 0 : index
    %4 = vector.load %arg3[%c0_3, %c0_4] : memref<1x256xf32, #tpu.memory_space<vmem>>, vector<1x256xf32>
    %5 = vector.broadcast %4 : vector<1x256xf32> to vector<64x256xf32>
    %6 = arith.addf %3, %5 : vector<64x256xf32>
    %c0_5 = arith.constant 0 : index
    %c0_6 = arith.constant 0 : index
    %7 = vector.load %arg16[%c0_5, %c0_6] : memref<64x256xf32, #tpu.memory_space<vmem>>, vector<64x256xf32>
    tpu.vector_store %arg16[%c0_5, %c0_6], %6 {strides = array<i32>} : memref<64x256xf32, #tpu.memory_space<vmem>>, vector<64x256xf32>,
    %c0_7 = arith.constant 0 : index
    %c0_8 = arith.constant 0 : index
    %8 = vector.load %arg4[%c0_7, %c0_8] : memref<1x128xf32, #tpu.memory_space<vmem>>, vector<1x128xf32>
    %9 = vector.shape_cast %8 : vector<1x128xf32> to vector<1x128xf32>
    %10 = vector.broadcast %9 : vector<1x128xf32> to vector<8x128xf32>
    %c0_9 = arith.constant 0 : index
    %c0_10 = arith.constant 0 : index
    %11 = vector.load %arg8[%c0_9, %c0_10] : memref<1x128xf32, #tpu.memory_space<vmem>>, vector<1x128xf32>
    %12 = vector.shape_cast %11 : vector<1x128xf32> to vector<1x128xf32>
    %13 = vector.broadcast %12 : vector<1x128xf32> to vector<8x128xf32>
    %c0_11 = arith.constant 0 : index
    %c0_12 = arith.constant 0 : index
    %14 = vector.load %arg12[%c0_11, %c0_12] : memref<1x128xf32, #tpu.memory_space<vmem>>, vector<1x128xf32>
    %15 = vector.shape_cast %14 : vector<1x128xf32> to vector<1x128xf32>
    %16 = vector.broadcast %15 : vector<1x128xf32> to vector<8x128xf32>
    %c0_13 = arith.constant 0 : index
    %c0_14 = arith.constant 0 : index
    %17 = vector.load %arg7[%c0_13, %c0_14] : memref<1x256xf32, #tpu.memory_space<vmem>>, vector<1x256xf32>
    %18 = vector.shape_cast %17 : vector<1x256xf32> to vector<1x256xf32>
    %19 = vector.broadcast %18 : vector<1x256xf32> to vector<8x256xf32>
    %c0_15 = arith.constant 0 : index
    %c0_16 = arith.constant 0 : index
    %20 = vector.load %arg11[%c0_15, %c0_16] : memref<1x256xf32, #tpu.memory_space<vmem>>, vector<1x256xf32>
    %21 = vector.shape_cast %20 : vector<1x256xf32> to vector<1x256xf32>
    %22 = vector.broadcast %21 : vector<1x256xf32> to vector<8x256xf32>
    %cst_17 = arith.constant 0.000000e+00 : f32
    %23 = vector.broadcast %cst_17 : f32 to vector<8x128xf32>
    %cst_18 = arith.constant 0.000000e+00 : f32
    %24 = vector.broadcast %cst_18 : f32 to vector<8x128xf32>
    %cst_19 = arith.constant 0.000000e+00 : f32
    %25 = vector.broadcast %cst_19 : f32 to vector<8x128xf32>
    %c0_20 = arith.constant 0 : index
    %c0_21 = arith.constant 0 : index
    %26 = vector.load %arg16[%c0_20, %c0_21] : memref<64x256xf32, #tpu.memory_space<vmem>>, vector<8x256xf32>
    %27 = arith.truncf %23 : vector<8x128xf32> to vector<8x128xbf16>
    %c0_22 = arith.constant 0 : index
    %c0_23 = arith.constant 0 : index
    %28 = vector.load %arg2[%c0_22, %c0_23] : memref<128x256xbf16, #tpu.memory_space<vmem>>, vector<128x256xbf16>
    %cst_24 = arith.constant dense<0.000000e+00> : vector<8x256xf32>
    %29 = tpu.matmul %27, %28, %cst_24 {dimension_numbers = #tpu.dot_dimension_numbers<[1], [0], [0], [1], [0, 0, 1, 1], [], []>} : vector<8x128xbf16>, vector<128x256xbf16>, vector<8x256xf32> -> vector<8x256xf32>
    %30 = vector.extract_strided_slice %26 {offsets = [0, 0], sizes = [8, 128], strides = [1, 1]} : vector<8x256xf32> to vector<8x128xf32>
    %31 = vector.extract_strided_slice %29 {offsets = [0, 0], sizes = [8, 128], strides = [1, 1]} : vector<8x256xf32> to vector<8x128xf32>
    %32 = arith.addf %30, %31 : vector<8x128xf32>
    %33 = arith.negf %32 : vector<8x128xf32>
    %34 = math.exp %33 : vector<8x128xf32>
    %cst_25 = arith.constant 1.000000e+00 : f32
    %35 = vector.broadcast %cst_25 : f32 to vector<8x128xf32>
    %36 = arith.addf %35, %34 : vector<8x128xf32>
    %37 = arith.divf %35, %36 : vector<8x128xf32>
    %c64_i32 = arith.constant 64 : i32
    %38 = tpu.dynamic_rotate %37 by %c64_i32 dim 1 : vector<8x128xf32>, i32 -> vector<8x128xf32>
    %39 = vector.extract_strided_slice %26 {offsets = [0, 128], sizes = [8, 128], strides = [1, 1]} : vector<8x256xf32> to vector<8x128xf32>
    %40 = vector.extract_strided_slice %29 {offsets = [0, 128], sizes = [8, 128], strides = [1, 1]} : vector<8x256xf32> to vector<8x128xf32>
    %41 = arith.addf %40, %10 : vector<8x128xf32>
    %42 = arith.mulf %37, %41 : vector<8x128xf32>
    %43 = arith.addf %39, %42 : vector<8x128xf32>
    %44 = math.tanh %43 : vector<8x128xf32>
    %45 = arith.subf %23, %44 : vector<8x128xf32>
    %46 = arith.mulf %38, %45 : vector<8x128xf32>
    %47 = arith.addf %44, %46 : vector<8x128xf32>
    %48 = arith.truncf %47 : vector<8x128xf32> to vector<8x128xbf16>
    %c0_26 = arith.constant 0 : index
    %c0_27 = arith.constant 0 : index
    %49 = vector.load %arg5[%c0_26, %c0_27] : memref<128x256xbf16, #tpu.memory_space<vmem>>, vector<128x256xbf16>
    %cst_28 = arith.constant dense<0.000000e+00> : vector<8x256xf32>
    %50 = tpu.matmul %48, %49, %cst_28 {dimension_numbers = #tpu.dot_dimension_numbers<[1], [0], [0], [1], [0, 0, 1, 1], [], []>} : vector<8x128xbf16>, vector<128x256xbf16>, vector<8x256xf32> -> vector<8x256xf32>
    %51 = arith.addf %50, %19 : vector<8x256xf32>
    %52 = arith.truncf %24 : vector<8x128xf32> to vector<8x128xbf16>
    %c0_29 = arith.constant 0 : index
    %c0_30 = arith.constant 0 : index
    %53 = vector.load %arg6[%c0_29, %c0_30] : memref<128x256xbf16, #tpu.memory_space<vmem>>, vector<128x256xbf16>
    %cst_31 = arith.constant dense<0.000000e+00> : vector<8x256xf32>
    %54 = tpu.matmul %52, %53, %cst_31 {dimension_numbers = #tpu.dot_dimension_numbers<[1], [0], [0], [1], [0, 0, 1, 1], [], []>} : vector<8x128xbf16>, vector<128x256xbf16>, vector<8x256xf32> -> vector<8x256xf32>
    %55 = vector.extract_strided_slice %51 {offsets = [0, 0], sizes = [8, 128], strides = [1, 1]} : vector<8x256xf32> to vector<8x128xf32>
    %56 = vector.extract_strided_slice %54 {offsets = [0, 0], sizes = [8, 128], strides = [1, 1]} : vector<8x256xf32> to vector<8x128xf32>
    %57 = arith.addf %55, %56 : vector<8x128xf32>
    %58 = arith.negf %57 : vector<8x128xf32>
    %59 = math.exp %58 : vector<8x128xf32>
    %cst_32 = arith.constant 1.000000e+00 : f32
    %60 = vector.broadcast %cst_32 : f32 to vector<8x128xf32>
    %61 = arith.addf %60, %59 : vector<8x128xf32>
    %62 = arith.divf %60, %61 : vector<8x128xf32>
    %c64_i32_33 = arith.constant 64 : i32
    %63 = tpu.dynamic_rotate %62 by %c64_i32_33 dim 1 : vector<8x128xf32>, i32 -> vector<8x128xf32>
    %64 = vector.extract_strided_slice %51 {offsets = [0, 128], sizes = [8, 128], strides = [1, 1]} : vector<8x256xf32> to vector<8x128xf32>
    %65 = vector.extract_strided_slice %54 {offsets = [0, 128], sizes = [8, 128], strides = [1, 1]} : vector<8x256xf32> to vector<8x128xf32>
    %66 = arith.addf %65, %13 : vector<8x128xf32>
    %67 = arith.mulf %62, %66 : vector<8x128xf32>
    %68 = arith.addf %64, %67 : vector<8x128xf32>
    %69 = math.tanh %68 : vector<8x128xf32>
    %70 = arith.subf %24, %69 : vector<8x128xf32>
    %71 = arith.mulf %63, %70 : vector<8x128xf32>
    %72 = arith.addf %69, %71 : vector<8x128xf32>
    %73 = arith.truncf %72 : vector<8x128xf32> to vector<8x128xbf16>
    %c0_34 = arith.constant 0 : index
    %c0_35 = arith.constant 0 : index
    %74 = vector.load %arg9[%c0_34, %c0_35] : memref<128x256xbf16, #tpu.memory_space<vmem>>, vector<128x256xbf16>
    %cst_36 = arith.constant dense<0.000000e+00> : vector<8x256xf32>
    %75 = tpu.matmul %73, %74, %cst_36 {dimension_numbers = #tpu.dot_dimension_numbers<[1], [0], [0], [1], [0, 0, 1, 1], [], []>} : vector<8x128xbf16>, vector<128x256xbf16>, vector<8x256xf32> -> vector<8x256xf32>
    %76 = arith.addf %75, %22 : vector<8x256xf32>
    %c8 = arith.constant 8 : index
    %c0_37 = arith.constant 0 : index
    %77 = vector.load %arg16[%c8, %c0_37] : memref<64x256xf32, #tpu.memory_space<vmem>>, vector<8x256xf32>
    %78 = arith.truncf %47 : vector<8x128xf32> to vector<8x128xbf16>
    %c0_38 = arith.constant 0 : index
    %c0_39 = arith.constant 0 : index
    %79 = vector.load %arg2[%c0_38, %c0_39] : memref<128x256xbf16, #tpu.memory_space<vmem>>, vector<128x256xbf16>
    %cst_40 = arith.constant dense<0.000000e+00> : vector<8x256xf32>
    %80 = tpu.matmul %78, %79, %cst_40 {dimension_numbers = #tpu.dot_dimension_numbers<[1], [0], [0], [1], [0, 0, 1, 1], [], []>} : vector<8x128xbf16>, vector<128x256xbf16>, vector<8x256xf32> -> vector<8x256xf32>
    %81 = vector.extract_strided_slice %77 {offsets = [0, 0], sizes = [8, 128], strides = [1, 1]} : vector<8x256xf32> to vector<8x128xf32>
    %82 = vector.extract_strided_slice %80 {offsets = [0, 0], sizes = [8, 128], strides = [1, 1]} : vector<8x256xf32> to vector<8x128xf32>
    %83 = arith.addf %81, %82 : vector<8x128xf32>
    %84 = arith.negf %83 : vector<8x128xf32>
    %85 = math.exp %84 : vector<8x128xf32>
    %cst_41 = arith.constant 1.000000e+00 : f32
    %86 = vector.broadcast %cst_41 : f32 to vector<8x128xf32>
    %87 = arith.addf %86, %85 : vector<8x128xf32>
    %88 = arith.divf %86, %87 : vector<8x128xf32>
    %c64_i32_42 = arith.constant 64 : i32
    %89 = tpu.dynamic_rotate %88 by %c64_i32_42 dim 1 : vector<8x128xf32>, i32 -> vector<8x128xf32>
    %90 = vector.extract_strided_slice %77 {offsets = [0, 128], sizes = [8, 128], strides = [1, 1]} : vector<8x256xf32> to vector<8x128xf32>
    %91 = vector.extract_strided_slice %80 {offsets = [0, 128], sizes = [8, 128], strides = [1, 1]} : vector<8x256xf32> to vector<8x128xf32>
    %92 = arith.addf %91, %10 : vector<8x128xf32>
    %93 = arith.mulf %88, %92 : vector<8x128xf32>
    %94 = arith.addf %90, %93 : vector<8x128xf32>
    %95 = math.tanh %94 : vector<8x128xf32>
    %96 = arith.subf %47, %95 : vector<8x128xf32>
    %97 = arith.mulf %89, %96 : vector<8x128xf32>
    %98 = arith.addf %95, %97 : vector<8x128xf32>
    %99 = arith.truncf %98 : vector<8x128xf32> to vector<8x128xbf16>
    %c0_43 = arith.constant 0 : index
    %c0_44 = arith.constant 0 : index
    %100 = vector.load %arg5[%c0_43, %c0_44] : memref<128x256xbf16, #tpu.memory_space<vmem>>, vector<128x256xbf16>
    %cst_45 = arith.constant dense<0.000000e+00> : vector<8x256xf32>
    %101 = tpu.matmul %99, %100, %cst_45 {dimension_numbers = #tpu.dot_dimension_numbers<[1], [0], [0], [1], [0, 0, 1, 1], [], []>} : vector<8x128xbf16>, vector<128x256xbf16>, vector<8x256xf32> -> vector<8x256xf32>
    %102 = arith.addf %101, %19 : vector<8x256xf32>
    %103 = arith.truncf %25 : vector<8x128xf32> to vector<8x128xbf16>
    %c0_46 = arith.constant 0 : index
    %c0_47 = arith.constant 0 : index
    %104 = vector.load %arg10[%c0_46, %c0_47] : memref<128x256xbf16, #tpu.memory_space<vmem>>, vector<128x256xbf16>
    %cst_48 = arith.constant dense<0.000000e+00> : vector<8x256xf32>
    %105 = tpu.matmul %103, %104, %cst_48 {dimension_numbers = #tpu.dot_dimension_numbers<[1], [0], [0], [1], [0, 0, 1, 1], [], []>} : vector<8x128xbf16>, vector<128x256xbf16>, vector<8x256xf32> -> vector<8x256xf32>
    %106 = vector.extract_strided_slice %76 {offsets = [0, 0], sizes = [8, 128], strides = [1, 1]} : vector<8x256xf32> to vector<8x128xf32>
    %107 = vector.extract_strided_slice %105 {offsets = [0, 0], sizes = [8, 128], strides = [1, 1]} : vector<8x256xf32> to vector<8x128xf32>
    %108 = arith.addf %106, %107 : vector<8x128xf32>
    %109 = arith.negf %108 : vector<8x128xf32>
    %110 = math.exp %109 : vector<8x128xf32>
    %cst_49 = arith.constant 1.000000e+00 : f32
    %111 = vector.broadcast %cst_49 : f32 to vector<8x128xf32>
    %112 = arith.addf %111, %110 : vector<8x128xf32>
    %113 = arith.divf %111, %112 : vector<8x128xf32>
    %c64_i32_50 = arith.constant 64 : i32
    %114 = tpu.dynamic_rotate %113 by %c64_i32_50 dim 1 : vector<8x128xf32>, i32 -> vector<8x128xf32>
    %115 = vector.extract_strided_slice %76 {offsets = [0, 128], sizes = [8, 128], strides = [1, 1]} : vector<8x256xf32> to vector<8x128xf32>
    %116 = vector.extract_strided_slice %105 {offsets = [0, 128], sizes = [8, 128], strides = [1, 1]} : vector<8x256xf32> to vector<8x128xf32>
    %117 = arith.addf %116, %16 : vector<8x128xf32>
    %118 = arith.mulf %113, %117 : vector<8x128xf32>
    %119 = arith.addf %115, %118 : vector<8x128xf32>
    %120 = math.tanh %119 : vector<8x128xf32>
    %121 = arith.subf %25, %120 : vector<8x128xf32>
    %122 = arith.mulf %114, %121 : vector<8x128xf32>
    %123 = arith.addf %120, %122 : vector<8x128xf32>
    %124 = arith.truncf %72 : vector<8x128xf32> to vector<8x128xbf16>
    %c0_51 = arith.constant 0 : index
    %c0_52 = arith.constant 0 : index
    %125 = vector.load %arg6[%c0_51, %c0_52] : memref<128x256xbf16, #tpu.memory_space<vmem>>, vector<128x256xbf16>
    %cst_53 = arith.constant dense<0.000000e+00> : vector<8x256xf32>
    %126 = tpu.matmul %124, %125, %cst_53 {dimension_numbers = #tpu.dot_dimension_numbers<[1], [0], [0], [1], [0, 0, 1, 1], [], []>} : vector<8x128xbf16>, vector<128x256xbf16>, vector<8x256xf32> -> vector<8x256xf32>
    %127 = vector.extract_strided_slice %102 {offsets = [0, 0], sizes = [8, 128], strides = [1, 1]} : vector<8x256xf32> to vector<8x128xf32>
    %128 = vector.extract_strided_slice %126 {offsets = [0, 0], sizes = [8, 128], strides = [1, 1]} : vector<8x256xf32> to vector<8x128xf32>
    %129 = arith.addf %127, %128 : vector<8x128xf32>
    %130 = arith.negf %129 : vector<8x128xf32>
    %131 = math.exp %130 : vector<8x128xf32>
    %cst_54 = arith.constant 1.000000e+00 : f32
    %132 = vector.broadcast %cst_54 : f32 to vector<8x128xf32>
    %133 = arith.addf %132, %131 : vector<8x128xf32>
    %134 = arith.divf %132, %133 : vector<8x128xf32>
    %c64_i32_55 = arith.constant 64 : i32
    %135 = tpu.dynamic_rotate %134 by %c64_i32_55 dim 1 : vector<8x128xf32>, i32 -> vector<8x128xf32>
    %136 = vector.extract_strided_slice %102 {offsets = [0, 128], sizes = [8, 128], strides = [1, 1]} : vector<8x256xf32> to vector<8x128xf32>
    %137 = vector.extract_strided_slice %126 {offsets = [0, 128], sizes = [8, 128], strides = [1, 1]} : vector<8x256xf32> to vector<8x128xf32>
    %138 = arith.addf %137, %13 : vector<8x128xf32>
    %139 = arith.mulf %134, %138 : vector<8x128xf32>
    %140 = arith.addf %136, %139 : vector<8x128xf32>
    %141 = math.tanh %140 : vector<8x128xf32>
    %142 = arith.subf %72, %141 : vector<8x128xf32>
    %143 = arith.mulf %135, %142 : vector<8x128xf32>
    %144 = arith.addf %141, %143 : vector<8x128xf32>
    %145 = arith.truncf %144 : vector<8x128xf32> to vector<8x128xbf16>
    %c0_56 = arith.constant 0 : index
    %c0_57 = arith.constant 0 : index
    %146 = vector.load %arg9[%c0_56, %c0_57] : memref<128x256xbf16, #tpu.memory_space<vmem>>, vector<128x256xbf16>
    %cst_58 = arith.constant dense<0.000000e+00> : vector<8x256xf32>
    %147 = tpu.matmul %145, %146, %cst_58 {dimension_numbers = #tpu.dot_dimension_numbers<[1], [0], [0], [1], [0, 0, 1, 1], [], []>} : vector<8x128xbf16>, vector<128x256xbf16>, vector<8x256xf32> -> vector<8x256xf32>
    %148 = arith.addf %147, %22 : vector<8x256xf32>
    %c16 = arith.constant 16 : index
    %c0_59 = arith.constant 0 : index
    %149 = vector.load %arg16[%c16, %c0_59] : memref<64x256xf32, #tpu.memory_space<vmem>>, vector<8x256xf32>
    %150 = arith.truncf %98 : vector<8x128xf32> to vector<8x128xbf16>
    %c0_60 = arith.constant 0 : index
    %c0_61 = arith.constant 0 : index
    %151 = vector.load %arg2[%c0_60, %c0_61] : memref<128x256xbf16, #tpu.memory_space<vmem>>, vector<128x256xbf16>
    %cst_62 = arith.constant dense<0.000000e+00> : vector<8x256xf32>
    %152 = tpu.matmul %150, %151, %cst_62 {dimension_numbers = #tpu.dot_dimension_numbers<[1], [0], [0], [1], [0, 0, 1, 1], [], []>} : vector<8x128xbf16>, vector<128x256xbf16>, vector<8x256xf32> -> vector<8x256xf32>
    %153 = vector.extract_strided_slice %149 {offsets = [0, 0], sizes = [8, 128], strides = [1, 1]} : vector<8x256xf32> to vector<8x128xf32>
    %154 = vector.extract_strided_slice %152 {offsets = [0, 0], sizes = [8, 128], strides = [1, 1]} : vector<8x256xf32> to vector<8x128xf32>
    %155 = arith.addf %153, %154 : vector<8x128xf32>
    %156 = arith.negf %155 : vector<8x128xf32>
    %157 = math.exp %156 : vector<8x128xf32>
    %cst_63 = arith.constant 1.000000e+00 : f32
    %158 = vector.broadcast %cst_63 : f32 to vector<8x128xf32>
    %159 = arith.addf %158, %157 : vector<8x128xf32>
    %160 = arith.divf %158, %159 : vector<8x128xf32>
    %c64_i32_64 = arith.constant 64 : i32
    %161 = tpu.dynamic_rotate %160 by %c64_i32_64 dim 1 : vector<8x128xf32>, i32 -> vector<8x128xf32>
    %162 = vector.extract_strided_slice %149 {offsets = [0, 128], sizes = [8, 128], strides = [1, 1]} : vector<8x256xf32> to vector<8x128xf32>
    %163 = vector.extract_strided_slice %152 {offsets = [0, 128], sizes = [8, 128], strides = [1, 1]} : vector<8x256xf32> to vector<8x128xf32>
    %164 = arith.addf %163, %10 : vector<8x128xf32>
    %165 = arith.mulf %160, %164 : vector<8x128xf32>
    %166 = arith.addf %162, %165 : vector<8x128xf32>
    %167 = math.tanh %166 : vector<8x128xf32>
    %168 = arith.subf %98, %167 : vector<8x128xf32>
    %169 = arith.mulf %161, %168 : vector<8x128xf32>
    %170 = arith.addf %167, %169 : vector<8x128xf32>
    %171 = arith.truncf %170 : vector<8x128xf32> to vector<8x128xbf16>
    %c0_65 = arith.constant 0 : index
    %c0_66 = arith.constant 0 : index
    %172 = vector.load %arg5[%c0_65, %c0_66] : memref<128x256xbf16, #tpu.memory_space<vmem>>, vector<128x256xbf16>
    %cst_67 = arith.constant dense<0.000000e+00> : vector<8x256xf32>
    %173 = tpu.matmul %171, %172, %cst_67 {dimension_numbers = #tpu.dot_dimension_numbers<[1], [0], [0], [1], [0, 0, 1, 1], [], []>} : vector<8x128xbf16>, vector<128x256xbf16>, vector<8x256xf32> -> vector<8x256xf32>
    %174 = arith.addf %173, %19 : vector<8x256xf32>
    %175 = arith.truncf %123 : vector<8x128xf32> to vector<8x128xbf16>
    %c0_68 = arith.constant 0 : index
    %c0_69 = arith.constant 0 : index
    %176 = vector.load %arg10[%c0_68, %c0_69] : memref<128x256xbf16, #tpu.memory_space<vmem>>, vector<128x256xbf16>
    %cst_70 = arith.constant dense<0.000000e+00> : vector<8x256xf32>
    %177 = tpu.matmul %175, %176, %cst_70 {dimension_numbers = #tpu.dot_dimension_numbers<[1], [0], [0], [1], [0, 0, 1, 1], [], []>} : vector<8x128xbf16>, vector<128x256xbf16>, vector<8x256xf32> -> vector<8x256xf32>
    %178 = vector.extract_strided_slice %148 {offsets = [0, 0], sizes = [8, 128], strides = [1, 1]} : vector<8x256xf32> to vector<8x128xf32>
    %179 = vector.extract_strided_slice %177 {offsets = [0, 0], sizes = [8, 128], strides = [1, 1]} : vector<8x256xf32> to vector<8x128xf32>
    %180 = arith.addf %178, %179 : vector<8x128xf32>
    %181 = arith.negf %180 : vector<8x128xf32>
    %182 = math.exp %181 : vector<8x128xf32>
    %cst_71 = arith.constant 1.000000e+00 : f32
    %183 = vector.broadcast %cst_71 : f32 to vector<8x128xf32>
    %184 = arith.addf %183, %182 : vector<8x128xf32>
    %185 = arith.divf %183, %184 : vector<8x128xf32>
    %c64_i32_72 = arith.constant 64 : i32
    %186 = tpu.dynamic_rotate %185 by %c64_i32_72 dim 1 : vector<8x128xf32>, i32 -> vector<8x128xf32>
    %187 = vector.extract_strided_slice %148 {offsets = [0, 128], sizes = [8, 128], strides = [1, 1]} : vector<8x256xf32> to vector<8x128xf32>
    %188 = vector.extract_strided_slice %177 {offsets = [0, 128], sizes = [8, 128], strides = [1, 1]} : vector<8x256xf32> to vector<8x128xf32>
    %189 = arith.addf %188, %16 : vector<8x128xf32>
    %190 = arith.mulf %185, %189 : vector<8x128xf32>
    %191 = arith.addf %187, %190 : vector<8x128xf32>
    %192 = math.tanh %191 : vector<8x128xf32>
    %193 = arith.subf %123, %192 : vector<8x128xf32>
    %194 = arith.mulf %186, %193 : vector<8x128xf32>
    %195 = arith.addf %192, %194 : vector<8x128xf32>
    %196 = arith.truncf %144 : vector<8x128xf32> to vector<8x128xbf16>
    %c0_73 = arith.constant 0 : index
    %c0_74 = arith.constant 0 : index
    %197 = vector.load %arg6[%c0_73, %c0_74] : memref<128x256xbf16, #tpu.memory_space<vmem>>, vector<128x256xbf16>
    %cst_75 = arith.constant dense<0.000000e+00> : vector<8x256xf32>
    %198 = tpu.matmul %196, %197, %cst_75 {dimension_numbers = #tpu.dot_dimension_numbers<[1], [0], [0], [1], [0, 0, 1, 1], [], []>} : vector<8x128xbf16>, vector<128x256xbf16>, vector<8x256xf32> -> vector<8x256xf32>
    %199 = vector.extract_strided_slice %174 {offsets = [0, 0], sizes = [8, 128], strides = [1, 1]} : vector<8x256xf32> to vector<8x128xf32>
    %200 = vector.extract_strided_slice %198 {offsets = [0, 0], sizes = [8, 128], strides = [1, 1]} : vector<8x256xf32> to vector<8x128xf32>
    %201 = arith.addf %199, %200 : vector<8x128xf32>
    %202 = arith.negf %201 : vector<8x128xf32>
    %203 = math.exp %202 : vector<8x128xf32>
    %cst_76 = arith.constant 1.000000e+00 : f32
    %204 = vector.broadcast %cst_76 : f32 to vector<8x128xf32>
    %205 = arith.addf %204, %203 : vector<8x128xf32>
    %206 = arith.divf %204, %205 : vector<8x128xf32>
    %c64_i32_77 = arith.constant 64 : i32
    %207 = tpu.dynamic_rotate %206 by %c64_i32_77 dim 1 : vector<8x128xf32>, i32 -> vector<8x128xf32>
    %208 = vector.extract_strided_slice %174 {offsets = [0, 128], sizes = [8, 128], strides = [1, 1]} : vector<8x256xf32> to vector<8x128xf32>
    %209 = vector.extract_strided_slice %198 {offsets = [0, 128], sizes = [8, 128], strides = [1, 1]} : vector<8x256xf32> to vector<8x128xf32>
    %210 = arith.addf %209, %13 : vector<8x128xf32>
    %211 = arith.mulf %206, %210 : vector<8x128xf32>
    %212 = arith.addf %208, %211 : vector<8x128xf32>
    %213 = math.tanh %212 : vector<8x128xf32>
    %214 = arith.subf %144, %213 : vector<8x128xf32>
    %215 = arith.mulf %207, %214 : vector<8x128xf32>
    %216 = arith.addf %213, %215 : vector<8x128xf32>
    %217 = arith.truncf %216 : vector<8x128xf32> to vector<8x128xbf16>
    %c0_78 = arith.constant 0 : index
    %c0_79 = arith.constant 0 : index
    %218 = vector.load %arg9[%c0_78, %c0_79] : memref<128x256xbf16, #tpu.memory_space<vmem>>, vector<128x256xbf16>
    %cst_80 = arith.constant dense<0.000000e+00> : vector<8x256xf32>
    %219 = tpu.matmul %217, %218, %cst_80 {dimension_numbers = #tpu.dot_dimension_numbers<[1], [0], [0], [1], [0, 0, 1, 1], [], []>} : vector<8x128xbf16>, vector<128x256xbf16>, vector<8x256xf32> -> vector<8x256xf32>
    %220 = arith.addf %219, %22 : vector<8x256xf32>
    %c24 = arith.constant 24 : index
    %c0_81 = arith.constant 0 : index
    %221 = vector.load %arg16[%c24, %c0_81] : memref<64x256xf32, #tpu.memory_space<vmem>>, vector<8x256xf32>
    %222 = arith.truncf %170 : vector<8x128xf32> to vector<8x128xbf16>
    %c0_82 = arith.constant 0 : index
    %c0_83 = arith.constant 0 : index
    %223 = vector.load %arg2[%c0_82, %c0_83] : memref<128x256xbf16, #tpu.memory_space<vmem>>, vector<128x256xbf16>
    %cst_84 = arith.constant dense<0.000000e+00> : vector<8x256xf32>
    %224 = tpu.matmul %222, %223, %cst_84 {dimension_numbers = #tpu.dot_dimension_numbers<[1], [0], [0], [1], [0, 0, 1, 1], [], []>} : vector<8x128xbf16>, vector<128x256xbf16>, vector<8x256xf32> -> vector<8x256xf32>
    %225 = vector.extract_strided_slice %221 {offsets = [0, 0], sizes = [8, 128], strides = [1, 1]} : vector<8x256xf32> to vector<8x128xf32>
    %226 = vector.extract_strided_slice %224 {offsets = [0, 0], sizes = [8, 128], strides = [1, 1]} : vector<8x256xf32> to vector<8x128xf32>
    %227 = arith.addf %225, %226 : vector<8x128xf32>
    %228 = arith.negf %227 : vector<8x128xf32>
    %229 = math.exp %228 : vector<8x128xf32>
    %cst_85 = arith.constant 1.000000e+00 : f32
    %230 = vector.broadcast %cst_85 : f32 to vector<8x128xf32>
    %231 = arith.addf %230, %229 : vector<8x128xf32>
    %232 = arith.divf %230, %231 : vector<8x128xf32>
    %c64_i32_86 = arith.constant 64 : i32
    %233 = tpu.dynamic_rotate %232 by %c64_i32_86 dim 1 : vector<8x128xf32>, i32 -> vector<8x128xf32>
    %234 = vector.extract_strided_slice %221 {offsets = [0, 128], sizes = [8, 128], strides = [1, 1]} : vector<8x256xf32> to vector<8x128xf32>
    %235 = vector.extract_strided_slice %224 {offsets = [0, 128], sizes = [8, 128], strides = [1, 1]} : vector<8x256xf32> to vector<8x128xf32>
    %236 = arith.addf %235, %10 : vector<8x128xf32>
    %237 = arith.mulf %232, %236 : vector<8x128xf32>
    %238 = arith.addf %234, %237 : vector<8x128xf32>
    %239 = math.tanh %238 : vector<8x128xf32>
    %240 = arith.subf %170, %239 : vector<8x128xf32>
    %241 = arith.mulf %233, %240 : vector<8x128xf32>
    %242 = arith.addf %239, %241 : vector<8x128xf32>
    %243 = arith.truncf %242 : vector<8x128xf32> to vector<8x128xbf16>
    %c0_87 = arith.constant 0 : index
    %c0_88 = arith.constant 0 : index
    %244 = vector.load %arg5[%c0_87, %c0_88] : memref<128x256xbf16, #tpu.memory_space<vmem>>, vector<128x256xbf16>
    %cst_89 = arith.constant dense<0.000000e+00> : vector<8x256xf32>
    %245 = tpu.matmul %243, %244, %cst_89 {dimension_numbers = #tpu.dot_dimension_numbers<[1], [0], [0], [1], [0, 0, 1, 1], [], []>} : vector<8x128xbf16>, vector<128x256xbf16>, vector<8x256xf32> -> vector<8x256xf32>
    %246 = arith.addf %245, %19 : vector<8x256xf32>
    %247 = arith.truncf %195 : vector<8x128xf32> to vector<8x128xbf16>
    %c0_90 = arith.constant 0 : index
    %c0_91 = arith.constant 0 : index
    %248 = vector.load %arg10[%c0_90, %c0_91] : memref<128x256xbf16, #tpu.memory_space<vmem>>, vector<128x256xbf16>
    %cst_92 = arith.constant dense<0.000000e+00> : vector<8x256xf32>
    %249 = tpu.matmul %247, %248, %cst_92 {dimension_numbers = #tpu.dot_dimension_numbers<[1], [0], [0], [1], [0, 0, 1, 1], [], []>} : vector<8x128xbf16>, vector<128x256xbf16>, vector<8x256xf32> -> vector<8x256xf32>
    %250 = vector.extract_strided_slice %220 {offsets = [0, 0], sizes = [8, 128], strides = [1, 1]} : vector<8x256xf32> to vector<8x128xf32>
    %251 = vector.extract_strided_slice %249 {offsets = [0, 0], sizes = [8, 128], strides = [1, 1]} : vector<8x256xf32> to vector<8x128xf32>
    %252 = arith.addf %250, %251 : vector<8x128xf32>
    %253 = arith.negf %252 : vector<8x128xf32>
    %254 = math.exp %253 : vector<8x128xf32>
    %cst_93 = arith.constant 1.000000e+00 : f32
    %255 = vector.broadcast %cst_93 : f32 to vector<8x128xf32>
    %256 = arith.addf %255, %254 : vector<8x128xf32>
    %257 = arith.divf %255, %256 : vector<8x128xf32>
    %c64_i32_94 = arith.constant 64 : i32
    %258 = tpu.dynamic_rotate %257 by %c64_i32_94 dim 1 : vector<8x128xf32>, i32 -> vector<8x128xf32>
    %259 = vector.extract_strided_slice %220 {offsets = [0, 128], sizes = [8, 128], strides = [1, 1]} : vector<8x256xf32> to vector<8x128xf32>
    %260 = vector.extract_strided_slice %249 {offsets = [0, 128], sizes = [8, 128], strides = [1, 1]} : vector<8x256xf32> to vector<8x128xf32>
    %261 = arith.addf %260, %16 : vector<8x128xf32>
    %262 = arith.mulf %257, %261 : vector<8x128xf32>
    %263 = arith.addf %259, %262 : vector<8x128xf32>
    %264 = math.tanh %263 : vector<8x128xf32>
    %265 = arith.subf %195, %264 : vector<8x128xf32>
    %266 = arith.mulf %258, %265 : vector<8x128xf32>
    %267 = arith.addf %264, %266 : vector<8x128xf32>
    %268 = arith.truncf %216 : vector<8x128xf32> to vector<8x128xbf16>
    %c0_95 = arith.constant 0 : index
    %c0_96 = arith.constant 0 : index
    %269 = vector.load %arg6[%c0_95, %c0_96] : memref<128x256xbf16, #tpu.memory_space<vmem>>, vector<128x256xbf16>
    %cst_97 = arith.constant dense<0.000000e+00> : vector<8x256xf32>
    %270 = tpu.matmul %268, %269, %cst_97 {dimension_numbers = #tpu.dot_dimension_numbers<[1], [0], [0], [1], [0, 0, 1, 1], [], []>} : vector<8x128xbf16>, vector<128x256xbf16>, vector<8x256xf32> -> vector<8x256xf32>
    %271 = vector.extract_strided_slice %246 {offsets = [0, 0], sizes = [8, 128], strides = [1, 1]} : vector<8x256xf32> to vector<8x128xf32>
    %272 = vector.extract_strided_slice %270 {offsets = [0, 0], sizes = [8, 128], strides = [1, 1]} : vector<8x256xf32> to vector<8x128xf32>
    %273 = arith.addf %271, %272 : vector<8x128xf32>
    %274 = arith.negf %273 : vector<8x128xf32>
    %275 = math.exp %274 : vector<8x128xf32>
    %cst_98 = arith.constant 1.000000e+00 : f32
    %276 = vector.broadcast %cst_98 : f32 to vector<8x128xf32>
    %277 = arith.addf %276, %275 : vector<8x128xf32>
    %278 = arith.divf %276, %277 : vector<8x128xf32>
    %c64_i32_99 = arith.constant 64 : i32
    %279 = tpu.dynamic_rotate %278 by %c64_i32_99 dim 1 : vector<8x128xf32>, i32 -> vector<8x128xf32>
    %280 = vector.extract_strided_slice %246 {offsets = [0, 128], sizes = [8, 128], strides = [1, 1]} : vector<8x256xf32> to vector<8x128xf32>
    %281 = vector.extract_strided_slice %270 {offsets = [0, 128], sizes = [8, 128], strides = [1, 1]} : vector<8x256xf32> to vector<8x128xf32>
    %282 = arith.addf %281, %13 : vector<8x128xf32>
    %283 = arith.mulf %278, %282 : vector<8x128xf32>
    %284 = arith.addf %280, %283 : vector<8x128xf32>
    %285 = math.tanh %284 : vector<8x128xf32>
    %286 = arith.subf %216, %285 : vector<8x128xf32>
    %287 = arith.mulf %279, %286 : vector<8x128xf32>
    %288 = arith.addf %285, %287 : vector<8x128xf32>
    %289 = arith.truncf %288 : vector<8x128xf32> to vector<8x128xbf16>
    %c0_100 = arith.constant 0 : index
    %c0_101 = arith.constant 0 : index
    %290 = vector.load %arg9[%c0_100, %c0_101] : memref<128x256xbf16, #tpu.memory_space<vmem>>, vector<128x256xbf16>
    %cst_102 = arith.constant dense<0.000000e+00> : vector<8x256xf32>
    %291 = tpu.matmul %289, %290, %cst_102 {dimension_numbers = #tpu.dot_dimension_numbers<[1], [0], [0], [1], [0, 0, 1, 1], [], []>} : vector<8x128xbf16>, vector<128x256xbf16>, vector<8x256xf32> -> vector<8x256xf32>
    %292 = arith.addf %291, %22 : vector<8x256xf32>
    %c32 = arith.constant 32 : index
    %c0_103 = arith.constant 0 : index
    %293 = vector.load %arg16[%c32, %c0_103] : memref<64x256xf32, #tpu.memory_space<vmem>>, vector<8x256xf32>
    %294 = arith.truncf %242 : vector<8x128xf32> to vector<8x128xbf16>
    %c0_104 = arith.constant 0 : index
    %c0_105 = arith.constant 0 : index
    %295 = vector.load %arg2[%c0_104, %c0_105] : memref<128x256xbf16, #tpu.memory_space<vmem>>, vector<128x256xbf16>
    %cst_106 = arith.constant dense<0.000000e+00> : vector<8x256xf32>
    %296 = tpu.matmul %294, %295, %cst_106 {dimension_numbers = #tpu.dot_dimension_numbers<[1], [0], [0], [1], [0, 0, 1, 1], [], []>} : vector<8x128xbf16>, vector<128x256xbf16>, vector<8x256xf32> -> vector<8x256xf32>
    %297 = vector.extract_strided_slice %293 {offsets = [0, 0], sizes = [8, 128], strides = [1, 1]} : vector<8x256xf32> to vector<8x128xf32>
    %298 = vector.extract_strided_slice %296 {offsets = [0, 0], sizes = [8, 128], strides = [1, 1]} : vector<8x256xf32> to vector<8x128xf32>
    %299 = arith.addf %297, %298 : vector<8x128xf32>
    %300 = arith.negf %299 : vector<8x128xf32>
    %301 = math.exp %300 : vector<8x128xf32>
    %cst_107 = arith.constant 1.000000e+00 : f32
    %302 = vector.broadcast %cst_107 : f32 to vector<8x128xf32>
    %303 = arith.addf %302, %301 : vector<8x128xf32>
    %304 = arith.divf %302, %303 : vector<8x128xf32>
    %c64_i32_108 = arith.constant 64 : i32
    %305 = tpu.dynamic_rotate %304 by %c64_i32_108 dim 1 : vector<8x128xf32>, i32 -> vector<8x128xf32>
    %306 = vector.extract_strided_slice %293 {offsets = [0, 128], sizes = [8, 128], strides = [1, 1]} : vector<8x256xf32> to vector<8x128xf32>
    %307 = vector.extract_strided_slice %296 {offsets = [0, 128], sizes = [8, 128], strides = [1, 1]} : vector<8x256xf32> to vector<8x128xf32>
    %308 = arith.addf %307, %10 : vector<8x128xf32>
    %309 = arith.mulf %304, %308 : vector<8x128xf32>
    %310 = arith.addf %306, %309 : vector<8x128xf32>
    %311 = math.tanh %310 : vector<8x128xf32>
    %312 = arith.subf %242, %311 : vector<8x128xf32>
    %313 = arith.mulf %305, %312 : vector<8x128xf32>
    %314 = arith.addf %311, %313 : vector<8x128xf32>
    %315 = arith.truncf %314 : vector<8x128xf32> to vector<8x128xbf16>
    %c0_109 = arith.constant 0 : index
    %c0_110 = arith.constant 0 : index
    %316 = vector.load %arg5[%c0_109, %c0_110] : memref<128x256xbf16, #tpu.memory_space<vmem>>, vector<128x256xbf16>
    %cst_111 = arith.constant dense<0.000000e+00> : vector<8x256xf32>
    %317 = tpu.matmul %315, %316, %cst_111 {dimension_numbers = #tpu.dot_dimension_numbers<[1], [0], [0], [1], [0, 0, 1, 1], [], []>} : vector<8x128xbf16>, vector<128x256xbf16>, vector<8x256xf32> -> vector<8x256xf32>
    %318 = arith.addf %317, %19 : vector<8x256xf32>
    %319 = arith.truncf %267 : vector<8x128xf32> to vector<8x128xbf16>
    %c0_112 = arith.constant 0 : index
    %c0_113 = arith.constant 0 : index
    %320 = vector.load %arg10[%c0_112, %c0_113] : memref<128x256xbf16, #tpu.memory_space<vmem>>, vector<128x256xbf16>
    %cst_114 = arith.constant dense<0.000000e+00> : vector<8x256xf32>
    %321 = tpu.matmul %319, %320, %cst_114 {dimension_numbers = #tpu.dot_dimension_numbers<[1], [0], [0], [1], [0, 0, 1, 1], [], []>} : vector<8x128xbf16>, vector<128x256xbf16>, vector<8x256xf32> -> vector<8x256xf32>
    %322 = vector.extract_strided_slice %292 {offsets = [0, 0], sizes = [8, 128], strides = [1, 1]} : vector<8x256xf32> to vector<8x128xf32>
    %323 = vector.extract_strided_slice %321 {offsets = [0, 0], sizes = [8, 128], strides = [1, 1]} : vector<8x256xf32> to vector<8x128xf32>
    %324 = arith.addf %322, %323 : vector<8x128xf32>
    %325 = arith.negf %324 : vector<8x128xf32>
    %326 = math.exp %325 : vector<8x128xf32>
    %cst_115 = arith.constant 1.000000e+00 : f32
    %327 = vector.broadcast %cst_115 : f32 to vector<8x128xf32>
    %328 = arith.addf %327, %326 : vector<8x128xf32>
    %329 = arith.divf %327, %328 : vector<8x128xf32>
    %c64_i32_116 = arith.constant 64 : i32
    %330 = tpu.dynamic_rotate %329 by %c64_i32_116 dim 1 : vector<8x128xf32>, i32 -> vector<8x128xf32>
    %331 = vector.extract_strided_slice %292 {offsets = [0, 128], sizes = [8, 128], strides = [1, 1]} : vector<8x256xf32> to vector<8x128xf32>
    %332 = vector.extract_strided_slice %321 {offsets = [0, 128], sizes = [8, 128], strides = [1, 1]} : vector<8x256xf32> to vector<8x128xf32>
    %333 = arith.addf %332, %16 : vector<8x128xf32>
    %334 = arith.mulf %329, %333 : vector<8x128xf32>
    %335 = arith.addf %331, %334 : vector<8x128xf32>
    %336 = math.tanh %335 : vector<8x128xf32>
    %337 = arith.subf %267, %336 : vector<8x128xf32>
    %338 = arith.mulf %330, %337 : vector<8x128xf32>
    %339 = arith.addf %336, %338 : vector<8x128xf32>
    %340 = arith.truncf %288 : vector<8x128xf32> to vector<8x128xbf16>
    %c0_117 = arith.constant 0 : index
    %c0_118 = arith.constant 0 : index
    %341 = vector.load %arg6[%c0_117, %c0_118] : memref<128x256xbf16, #tpu.memory_space<vmem>>, vector<128x256xbf16>
    %cst_119 = arith.constant dense<0.000000e+00> : vector<8x256xf32>
    %342 = tpu.matmul %340, %341, %cst_119 {dimension_numbers = #tpu.dot_dimension_numbers<[1], [0], [0], [1], [0, 0, 1, 1], [], []>} : vector<8x128xbf16>, vector<128x256xbf16>, vector<8x256xf32> -> vector<8x256xf32>
    %343 = vector.extract_strided_slice %318 {offsets = [0, 0], sizes = [8, 128], strides = [1, 1]} : vector<8x256xf32> to vector<8x128xf32>
    %344 = vector.extract_strided_slice %342 {offsets = [0, 0], sizes = [8, 128], strides = [1, 1]} : vector<8x256xf32> to vector<8x128xf32>
    %345 = arith.addf %343, %344 : vector<8x128xf32>
    %346 = arith.negf %345 : vector<8x128xf32>
    %347 = math.exp %346 : vector<8x128xf32>
    %cst_120 = arith.constant 1.000000e+00 : f32
    %348 = vector.broadcast %cst_120 : f32 to vector<8x128xf32>
    %349 = arith.addf %348, %347 : vector<8x128xf32>
    %350 = arith.divf %348, %349 : vector<8x128xf32>
    %c64_i32_121 = arith.constant 64 : i32
    %351 = tpu.dynamic_rotate %350 by %c64_i32_121 dim 1 : vector<8x128xf32>, i32 -> vector<8x128xf32>
    %352 = vector.extract_strided_slice %318 {offsets = [0, 128], sizes = [8, 128], strides = [1, 1]} : vector<8x256xf32> to vector<8x128xf32>
    %353 = vector.extract_strided_slice %342 {offsets = [0, 128], sizes = [8, 128], strides = [1, 1]} : vector<8x256xf32> to vector<8x128xf32>
    %354 = arith.addf %353, %13 : vector<8x128xf32>
    %355 = arith.mulf %350, %354 : vector<8x128xf32>
    %356 = arith.addf %352, %355 : vector<8x128xf32>
    %357 = math.tanh %356 : vector<8x128xf32>
    %358 = arith.subf %288, %357 : vector<8x128xf32>
    %359 = arith.mulf %351, %358 : vector<8x128xf32>
    %360 = arith.addf %357, %359 : vector<8x128xf32>
    %361 = arith.truncf %360 : vector<8x128xf32> to vector<8x128xbf16>
    %c0_122 = arith.constant 0 : index
    %c0_123 = arith.constant 0 : index
    %362 = vector.load %arg9[%c0_122, %c0_123] : memref<128x256xbf16, #tpu.memory_space<vmem>>, vector<128x256xbf16>
    %cst_124 = arith.constant dense<0.000000e+00> : vector<8x256xf32>
    %363 = tpu.matmul %361, %362, %cst_124 {dimension_numbers = #tpu.dot_dimension_numbers<[1], [0], [0], [1], [0, 0, 1, 1], [], []>} : vector<8x128xbf16>, vector<128x256xbf16>, vector<8x256xf32> -> vector<8x256xf32>
    %364 = arith.addf %363, %22 : vector<8x256xf32>
    %c40 = arith.constant 40 : index
    %c0_125 = arith.constant 0 : index
    %365 = vector.load %arg16[%c40, %c0_125] : memref<64x256xf32, #tpu.memory_space<vmem>>, vector<8x256xf32>
    %366 = arith.truncf %314 : vector<8x128xf32> to vector<8x128xbf16>
    %c0_126 = arith.constant 0 : index
    %c0_127 = arith.constant 0 : index
    %367 = vector.load %arg2[%c0_126, %c0_127] : memref<128x256xbf16, #tpu.memory_space<vmem>>, vector<128x256xbf16>
    %cst_128 = arith.constant dense<0.000000e+00> : vector<8x256xf32>
    %368 = tpu.matmul %366, %367, %cst_128 {dimension_numbers = #tpu.dot_dimension_numbers<[1], [0], [0], [1], [0, 0, 1, 1], [], []>} : vector<8x128xbf16>, vector<128x256xbf16>, vector<8x256xf32> -> vector<8x256xf32>
    %369 = vector.extract_strided_slice %365 {offsets = [0, 0], sizes = [8, 128], strides = [1, 1]} : vector<8x256xf32> to vector<8x128xf32>
    %370 = vector.extract_strided_slice %368 {offsets = [0, 0], sizes = [8, 128], strides = [1, 1]} : vector<8x256xf32> to vector<8x128xf32>
    %371 = arith.addf %369, %370 : vector<8x128xf32>
    %372 = arith.negf %371 : vector<8x128xf32>
    %373 = math.exp %372 : vector<8x128xf32>
    %cst_129 = arith.constant 1.000000e+00 : f32
    %374 = vector.broadcast %cst_129 : f32 to vector<8x128xf32>
    %375 = arith.addf %374, %373 : vector<8x128xf32>
    %376 = arith.divf %374, %375 : vector<8x128xf32>
    %c64_i32_130 = arith.constant 64 : i32
    %377 = tpu.dynamic_rotate %376 by %c64_i32_130 dim 1 : vector<8x128xf32>, i32 -> vector<8x128xf32>
    %378 = vector.extract_strided_slice %365 {offsets = [0, 128], sizes = [8, 128], strides = [1, 1]} : vector<8x256xf32> to vector<8x128xf32>
    %379 = vector.extract_strided_slice %368 {offsets = [0, 128], sizes = [8, 128], strides = [1, 1]} : vector<8x256xf32> to vector<8x128xf32>
    %380 = arith.addf %379, %10 : vector<8x128xf32>
    %381 = arith.mulf %376, %380 : vector<8x128xf32>
    %382 = arith.addf %378, %381 : vector<8x128xf32>
    %383 = math.tanh %382 : vector<8x128xf32>
    %384 = arith.subf %314, %383 : vector<8x128xf32>
    %385 = arith.mulf %377, %384 : vector<8x128xf32>
    %386 = arith.addf %383, %385 : vector<8x128xf32>
    %387 = arith.truncf %386 : vector<8x128xf32> to vector<8x128xbf16>
    %c0_131 = arith.constant 0 : index
    %c0_132 = arith.constant 0 : index
    %388 = vector.load %arg5[%c0_131, %c0_132] : memref<128x256xbf16, #tpu.memory_space<vmem>>, vector<128x256xbf16>
    %cst_133 = arith.constant dense<0.000000e+00> : vector<8x256xf32>
    %389 = tpu.matmul %387, %388, %cst_133 {dimension_numbers = #tpu.dot_dimension_numbers<[1], [0], [0], [1], [0, 0, 1, 1], [], []>} : vector<8x128xbf16>, vector<128x256xbf16>, vector<8x256xf32> -> vector<8x256xf32>
    %390 = arith.addf %389, %19 : vector<8x256xf32>
    %391 = arith.truncf %339 : vector<8x128xf32> to vector<8x128xbf16>
    %c0_134 = arith.constant 0 : index
    %c0_135 = arith.constant 0 : index
    %392 = vector.load %arg10[%c0_134, %c0_135] : memref<128x256xbf16, #tpu.memory_space<vmem>>, vector<128x256xbf16>
    %cst_136 = arith.constant dense<0.000000e+00> : vector<8x256xf32>
    %393 = tpu.matmul %391, %392, %cst_136 {dimension_numbers = #tpu.dot_dimension_numbers<[1], [0], [0], [1], [0, 0, 1, 1], [], []>} : vector<8x128xbf16>, vector<128x256xbf16>, vector<8x256xf32> -> vector<8x256xf32>
    %394 = vector.extract_strided_slice %364 {offsets = [0, 0], sizes = [8, 128], strides = [1, 1]} : vector<8x256xf32> to vector<8x128xf32>
    %395 = vector.extract_strided_slice %393 {offsets = [0, 0], sizes = [8, 128], strides = [1, 1]} : vector<8x256xf32> to vector<8x128xf32>
    %396 = arith.addf %394, %395 : vector<8x128xf32>
    %397 = arith.negf %396 : vector<8x128xf32>
    %398 = math.exp %397 : vector<8x128xf32>
    %cst_137 = arith.constant 1.000000e+00 : f32
    %399 = vector.broadcast %cst_137 : f32 to vector<8x128xf32>
    %400 = arith.addf %399, %398 : vector<8x128xf32>
    %401 = arith.divf %399, %400 : vector<8x128xf32>
    %c64_i32_138 = arith.constant 64 : i32
    %402 = tpu.dynamic_rotate %401 by %c64_i32_138 dim 1 : vector<8x128xf32>, i32 -> vector<8x128xf32>
    %403 = vector.extract_strided_slice %364 {offsets = [0, 128], sizes = [8, 128], strides = [1, 1]} : vector<8x256xf32> to vector<8x128xf32>
    %404 = vector.extract_strided_slice %393 {offsets = [0, 128], sizes = [8, 128], strides = [1, 1]} : vector<8x256xf32> to vector<8x128xf32>
    %405 = arith.addf %404, %16 : vector<8x128xf32>
    %406 = arith.mulf %401, %405 : vector<8x128xf32>
    %407 = arith.addf %403, %406 : vector<8x128xf32>
    %408 = math.tanh %407 : vector<8x128xf32>
    %409 = arith.subf %339, %408 : vector<8x128xf32>
    %410 = arith.mulf %402, %409 : vector<8x128xf32>
    %411 = arith.addf %408, %410 : vector<8x128xf32>
    %412 = arith.truncf %360 : vector<8x128xf32> to vector<8x128xbf16>
    %c0_139 = arith.constant 0 : index
    %c0_140 = arith.constant 0 : index
    %413 = vector.load %arg6[%c0_139, %c0_140] : memref<128x256xbf16, #tpu.memory_space<vmem>>, vector<128x256xbf16>
    %cst_141 = arith.constant dense<0.000000e+00> : vector<8x256xf32>
    %414 = tpu.matmul %412, %413, %cst_141 {dimension_numbers = #tpu.dot_dimension_numbers<[1], [0], [0], [1], [0, 0, 1, 1], [], []>} : vector<8x128xbf16>, vector<128x256xbf16>, vector<8x256xf32> -> vector<8x256xf32>
    %415 = vector.extract_strided_slice %390 {offsets = [0, 0], sizes = [8, 128], strides = [1, 1]} : vector<8x256xf32> to vector<8x128xf32>
    %416 = vector.extract_strided_slice %414 {offsets = [0, 0], sizes = [8, 128], strides = [1, 1]} : vector<8x256xf32> to vector<8x128xf32>
    %417 = arith.addf %415, %416 : vector<8x128xf32>
    %418 = arith.negf %417 : vector<8x128xf32>
    %419 = math.exp %418 : vector<8x128xf32>
    %cst_142 = arith.constant 1.000000e+00 : f32
    %420 = vector.broadcast %cst_142 : f32 to vector<8x128xf32>
    %421 = arith.addf %420, %419 : vector<8x128xf32>
    %422 = arith.divf %420, %421 : vector<8x128xf32>
    %c64_i32_143 = arith.constant 64 : i32
    %423 = tpu.dynamic_rotate %422 by %c64_i32_143 dim 1 : vector<8x128xf32>, i32 -> vector<8x128xf32>
    %424 = vector.extract_strided_slice %390 {offsets = [0, 128], sizes = [8, 128], strides = [1, 1]} : vector<8x256xf32> to vector<8x128xf32>
    %425 = vector.extract_strided_slice %414 {offsets = [0, 128], sizes = [8, 128], strides = [1, 1]} : vector<8x256xf32> to vector<8x128xf32>
    %426 = arith.addf %425, %13 : vector<8x128xf32>
    %427 = arith.mulf %422, %426 : vector<8x128xf32>
    %428 = arith.addf %424, %427 : vector<8x128xf32>
    %429 = math.tanh %428 : vector<8x128xf32>
    %430 = arith.subf %360, %429 : vector<8x128xf32>
    %431 = arith.mulf %423, %430 : vector<8x128xf32>
    %432 = arith.addf %429, %431 : vector<8x128xf32>
    %433 = arith.truncf %432 : vector<8x128xf32> to vector<8x128xbf16>
    %c0_144 = arith.constant 0 : index
    %c0_145 = arith.constant 0 : index
    %434 = vector.load %arg9[%c0_144, %c0_145] : memref<128x256xbf16, #tpu.memory_space<vmem>>, vector<128x256xbf16>
    %cst_146 = arith.constant dense<0.000000e+00> : vector<8x256xf32>
    %435 = tpu.matmul %433, %434, %cst_146 {dimension_numbers = #tpu.dot_dimension_numbers<[1], [0], [0], [1], [0, 0, 1, 1], [], []>} : vector<8x128xbf16>, vector<128x256xbf16>, vector<8x256xf32> -> vector<8x256xf32>
    %436 = arith.addf %435, %22 : vector<8x256xf32>
    %c48 = arith.constant 48 : index
    %c0_147 = arith.constant 0 : index
    %437 = vector.load %arg16[%c48, %c0_147] : memref<64x256xf32, #tpu.memory_space<vmem>>, vector<8x256xf32>
    %438 = arith.truncf %386 : vector<8x128xf32> to vector<8x128xbf16>
    %c0_148 = arith.constant 0 : index
    %c0_149 = arith.constant 0 : index
    %439 = vector.load %arg2[%c0_148, %c0_149] : memref<128x256xbf16, #tpu.memory_space<vmem>>, vector<128x256xbf16>
    %cst_150 = arith.constant dense<0.000000e+00> : vector<8x256xf32>
    %440 = tpu.matmul %438, %439, %cst_150 {dimension_numbers = #tpu.dot_dimension_numbers<[1], [0], [0], [1], [0, 0, 1, 1], [], []>} : vector<8x128xbf16>, vector<128x256xbf16>, vector<8x256xf32> -> vector<8x256xf32>
    %441 = vector.extract_strided_slice %437 {offsets = [0, 0], sizes = [8, 128], strides = [1, 1]} : vector<8x256xf32> to vector<8x128xf32>
    %442 = vector.extract_strided_slice %440 {offsets = [0, 0], sizes = [8, 128], strides = [1, 1]} : vector<8x256xf32> to vector<8x128xf32>
    %443 = arith.addf %441, %442 : vector<8x128xf32>
    %444 = arith.negf %443 : vector<8x128xf32>
    %445 = math.exp %444 : vector<8x128xf32>
    %cst_151 = arith.constant 1.000000e+00 : f32
    %446 = vector.broadcast %cst_151 : f32 to vector<8x128xf32>
    %447 = arith.addf %446, %445 : vector<8x128xf32>
    %448 = arith.divf %446, %447 : vector<8x128xf32>
    %c64_i32_152 = arith.constant 64 : i32
    %449 = tpu.dynamic_rotate %448 by %c64_i32_152 dim 1 : vector<8x128xf32>, i32 -> vector<8x128xf32>
    %450 = vector.extract_strided_slice %437 {offsets = [0, 128], sizes = [8, 128], strides = [1, 1]} : vector<8x256xf32> to vector<8x128xf32>
    %451 = vector.extract_strided_slice %440 {offsets = [0, 128], sizes = [8, 128], strides = [1, 1]} : vector<8x256xf32> to vector<8x128xf32>
    %452 = arith.addf %451, %10 : vector<8x128xf32>
    %453 = arith.mulf %448, %452 : vector<8x128xf32>
    %454 = arith.addf %450, %453 : vector<8x128xf32>
    %455 = math.tanh %454 : vector<8x128xf32>
    %456 = arith.subf %386, %455 : vector<8x128xf32>
    %457 = arith.mulf %449, %456 : vector<8x128xf32>
    %458 = arith.addf %455, %457 : vector<8x128xf32>
    %459 = arith.truncf %458 : vector<8x128xf32> to vector<8x128xbf16>
    %c0_153 = arith.constant 0 : index
    %c0_154 = arith.constant 0 : index
    %460 = vector.load %arg5[%c0_153, %c0_154] : memref<128x256xbf16, #tpu.memory_space<vmem>>, vector<128x256xbf16>
    %cst_155 = arith.constant dense<0.000000e+00> : vector<8x256xf32>
    %461 = tpu.matmul %459, %460, %cst_155 {dimension_numbers = #tpu.dot_dimension_numbers<[1], [0], [0], [1], [0, 0, 1, 1], [], []>} : vector<8x128xbf16>, vector<128x256xbf16>, vector<8x256xf32> -> vector<8x256xf32>
    %462 = arith.addf %461, %19 : vector<8x256xf32>
    %463 = arith.truncf %411 : vector<8x128xf32> to vector<8x128xbf16>
    %c0_156 = arith.constant 0 : index
    %c0_157 = arith.constant 0 : index
    %464 = vector.load %arg10[%c0_156, %c0_157] : memref<128x256xbf16, #tpu.memory_space<vmem>>, vector<128x256xbf16>
    %cst_158 = arith.constant dense<0.000000e+00> : vector<8x256xf32>
    %465 = tpu.matmul %463, %464, %cst_158 {dimension_numbers = #tpu.dot_dimension_numbers<[1], [0], [0], [1], [0, 0, 1, 1], [], []>} : vector<8x128xbf16>, vector<128x256xbf16>, vector<8x256xf32> -> vector<8x256xf32>
    %466 = vector.extract_strided_slice %436 {offsets = [0, 0], sizes = [8, 128], strides = [1, 1]} : vector<8x256xf32> to vector<8x128xf32>
    %467 = vector.extract_strided_slice %465 {offsets = [0, 0], sizes = [8, 128], strides = [1, 1]} : vector<8x256xf32> to vector<8x128xf32>
    %468 = arith.addf %466, %467 : vector<8x128xf32>
    %469 = arith.negf %468 : vector<8x128xf32>
    %470 = math.exp %469 : vector<8x128xf32>
    %cst_159 = arith.constant 1.000000e+00 : f32
    %471 = vector.broadcast %cst_159 : f32 to vector<8x128xf32>
    %472 = arith.addf %471, %470 : vector<8x128xf32>
    %473 = arith.divf %471, %472 : vector<8x128xf32>
    %c64_i32_160 = arith.constant 64 : i32
    %474 = tpu.dynamic_rotate %473 by %c64_i32_160 dim 1 : vector<8x128xf32>, i32 -> vector<8x128xf32>
    %475 = vector.extract_strided_slice %436 {offsets = [0, 128], sizes = [8, 128], strides = [1, 1]} : vector<8x256xf32> to vector<8x128xf32>
    %476 = vector.extract_strided_slice %465 {offsets = [0, 128], sizes = [8, 128], strides = [1, 1]} : vector<8x256xf32> to vector<8x128xf32>
    %477 = arith.addf %476, %16 : vector<8x128xf32>
    %478 = arith.mulf %473, %477 : vector<8x128xf32>
    %479 = arith.addf %475, %478 : vector<8x128xf32>
    %480 = math.tanh %479 : vector<8x128xf32>
    %481 = arith.subf %411, %480 : vector<8x128xf32>
    %482 = arith.mulf %474, %481 : vector<8x128xf32>
    %483 = arith.addf %480, %482 : vector<8x128xf32>
    %484 = arith.truncf %432 : vector<8x128xf32> to vector<8x128xbf16>
    %c0_161 = arith.constant 0 : index
    %c0_162 = arith.constant 0 : index
    %485 = vector.load %arg6[%c0_161, %c0_162] : memref<128x256xbf16, #tpu.memory_space<vmem>>, vector<128x256xbf16>
    %cst_163 = arith.constant dense<0.000000e+00> : vector<8x256xf32>
    %486 = tpu.matmul %484, %485, %cst_163 {dimension_numbers = #tpu.dot_dimension_numbers<[1], [0], [0], [1], [0, 0, 1, 1], [], []>} : vector<8x128xbf16>, vector<128x256xbf16>, vector<8x256xf32> -> vector<8x256xf32>
    %487 = vector.extract_strided_slice %462 {offsets = [0, 0], sizes = [8, 128], strides = [1, 1]} : vector<8x256xf32> to vector<8x128xf32>
    %488 = vector.extract_strided_slice %486 {offsets = [0, 0], sizes = [8, 128], strides = [1, 1]} : vector<8x256xf32> to vector<8x128xf32>
    %489 = arith.addf %487, %488 : vector<8x128xf32>
    %490 = arith.negf %489 : vector<8x128xf32>
    %491 = math.exp %490 : vector<8x128xf32>
    %cst_164 = arith.constant 1.000000e+00 : f32
    %492 = vector.broadcast %cst_164 : f32 to vector<8x128xf32>
    %493 = arith.addf %492, %491 : vector<8x128xf32>
    %494 = arith.divf %492, %493 : vector<8x128xf32>
    %c64_i32_165 = arith.constant 64 : i32
    %495 = tpu.dynamic_rotate %494 by %c64_i32_165 dim 1 : vector<8x128xf32>, i32 -> vector<8x128xf32>
    %496 = vector.extract_strided_slice %462 {offsets = [0, 128], sizes = [8, 128], strides = [1, 1]} : vector<8x256xf32> to vector<8x128xf32>
    %497 = vector.extract_strided_slice %486 {offsets = [0, 128], sizes = [8, 128], strides = [1, 1]} : vector<8x256xf32> to vector<8x128xf32>
    %498 = arith.addf %497, %13 : vector<8x128xf32>
    %499 = arith.mulf %494, %498 : vector<8x128xf32>
    %500 = arith.addf %496, %499 : vector<8x128xf32>
    %501 = math.tanh %500 : vector<8x128xf32>
    %502 = arith.subf %432, %501 : vector<8x128xf32>
    %503 = arith.mulf %495, %502 : vector<8x128xf32>
    %504 = arith.addf %501, %503 : vector<8x128xf32>
    %505 = arith.truncf %504 : vector<8x128xf32> to vector<8x128xbf16>
    %c0_166 = arith.constant 0 : index
    %c0_167 = arith.constant 0 : index
    %506 = vector.load %arg9[%c0_166, %c0_167] : memref<128x256xbf16, #tpu.memory_space<vmem>>, vector<128x256xbf16>
    %cst_168 = arith.constant dense<0.000000e+00> : vector<8x256xf32>
    %507 = tpu.matmul %505, %506, %cst_168 {dimension_numbers = #tpu.dot_dimension_numbers<[1], [0], [0], [1], [0, 0, 1, 1], [], []>} : vector<8x128xbf16>, vector<128x256xbf16>, vector<8x256xf32> -> vector<8x256xf32>
    %508 = arith.addf %507, %22 : vector<8x256xf32>
    %c56 = arith.constant 56 : index
    %c0_169 = arith.constant 0 : index
    %509 = vector.load %arg16[%c56, %c0_169] : memref<64x256xf32, #tpu.memory_space<vmem>>, vector<8x256xf32>
    %510 = arith.truncf %458 : vector<8x128xf32> to vector<8x128xbf16>
    %c0_170 = arith.constant 0 : index
    %c0_171 = arith.constant 0 : index
    %511 = vector.load %arg2[%c0_170, %c0_171] : memref<128x256xbf16, #tpu.memory_space<vmem>>, vector<128x256xbf16>
    %cst_172 = arith.constant dense<0.000000e+00> : vector<8x256xf32>
    %512 = tpu.matmul %510, %511, %cst_172 {dimension_numbers = #tpu.dot_dimension_numbers<[1], [0], [0], [1], [0, 0, 1, 1], [], []>} : vector<8x128xbf16>, vector<128x256xbf16>, vector<8x256xf32> -> vector<8x256xf32>
    %513 = vector.extract_strided_slice %509 {offsets = [0, 0], sizes = [8, 128], strides = [1, 1]} : vector<8x256xf32> to vector<8x128xf32>
    %514 = vector.extract_strided_slice %512 {offsets = [0, 0], sizes = [8, 128], strides = [1, 1]} : vector<8x256xf32> to vector<8x128xf32>
    %515 = arith.addf %513, %514 : vector<8x128xf32>
    %516 = arith.negf %515 : vector<8x128xf32>
    %517 = math.exp %516 : vector<8x128xf32>
    %cst_173 = arith.constant 1.000000e+00 : f32
    %518 = vector.broadcast %cst_173 : f32 to vector<8x128xf32>
    %519 = arith.addf %518, %517 : vector<8x128xf32>
    %520 = arith.divf %518, %519 : vector<8x128xf32>
    %c64_i32_174 = arith.constant 64 : i32
    %521 = tpu.dynamic_rotate %520 by %c64_i32_174 dim 1 : vector<8x128xf32>, i32 -> vector<8x128xf32>
    %522 = vector.extract_strided_slice %509 {offsets = [0, 128], sizes = [8, 128], strides = [1, 1]} : vector<8x256xf32> to vector<8x128xf32>
    %523 = vector.extract_strided_slice %512 {offsets = [0, 128], sizes = [8, 128], strides = [1, 1]} : vector<8x256xf32> to vector<8x128xf32>
    %524 = arith.addf %523, %10 : vector<8x128xf32>
    %525 = arith.mulf %520, %524 : vector<8x128xf32>
    %526 = arith.addf %522, %525 : vector<8x128xf32>
    %527 = math.tanh %526 : vector<8x128xf32>
    %528 = arith.subf %458, %527 : vector<8x128xf32>
    %529 = arith.mulf %521, %528 : vector<8x128xf32>
    %530 = arith.addf %527, %529 : vector<8x128xf32>
    %531 = arith.truncf %530 : vector<8x128xf32> to vector<8x128xbf16>
    %c0_175 = arith.constant 0 : index
    %c0_176 = arith.constant 0 : index
    %532 = vector.load %arg5[%c0_175, %c0_176] : memref<128x256xbf16, #tpu.memory_space<vmem>>, vector<128x256xbf16>
    %cst_177 = arith.constant dense<0.000000e+00> : vector<8x256xf32>
    %533 = tpu.matmul %531, %532, %cst_177 {dimension_numbers = #tpu.dot_dimension_numbers<[1], [0], [0], [1], [0, 0, 1, 1], [], []>} : vector<8x128xbf16>, vector<128x256xbf16>, vector<8x256xf32> -> vector<8x256xf32>
    %534 = arith.addf %533, %19 : vector<8x256xf32>
    %535 = arith.truncf %483 : vector<8x128xf32> to vector<8x128xbf16>
    %c0_178 = arith.constant 0 : index
    %c0_179 = arith.constant 0 : index
    %536 = vector.load %arg10[%c0_178, %c0_179] : memref<128x256xbf16, #tpu.memory_space<vmem>>, vector<128x256xbf16>
    %cst_180 = arith.constant dense<0.000000e+00> : vector<8x256xf32>
    %537 = tpu.matmul %535, %536, %cst_180 {dimension_numbers = #tpu.dot_dimension_numbers<[1], [0], [0], [1], [0, 0, 1, 1], [], []>} : vector<8x128xbf16>, vector<128x256xbf16>, vector<8x256xf32> -> vector<8x256xf32>
    %538 = vector.extract_strided_slice %508 {offsets = [0, 0], sizes = [8, 128], strides = [1, 1]} : vector<8x256xf32> to vector<8x128xf32>
    %539 = vector.extract_strided_slice %537 {offsets = [0, 0], sizes = [8, 128], strides = [1, 1]} : vector<8x256xf32> to vector<8x128xf32>
    %540 = arith.addf %538, %539 : vector<8x128xf32>
    %541 = arith.negf %540 : vector<8x128xf32>
    %542 = math.exp %541 : vector<8x128xf32>
    %cst_181 = arith.constant 1.000000e+00 : f32
    %543 = vector.broadcast %cst_181 : f32 to vector<8x128xf32>
    %544 = arith.addf %543, %542 : vector<8x128xf32>
    %545 = arith.divf %543, %544 : vector<8x128xf32>
    %c64_i32_182 = arith.constant 64 : i32
    %546 = tpu.dynamic_rotate %545 by %c64_i32_182 dim 1 : vector<8x128xf32>, i32 -> vector<8x128xf32>
    %547 = vector.extract_strided_slice %508 {offsets = [0, 128], sizes = [8, 128], strides = [1, 1]} : vector<8x256xf32> to vector<8x128xf32>
    %548 = vector.extract_strided_slice %537 {offsets = [0, 128], sizes = [8, 128], strides = [1, 1]} : vector<8x256xf32> to vector<8x128xf32>
    %549 = arith.addf %548, %16 : vector<8x128xf32>
    %550 = arith.mulf %545, %549 : vector<8x128xf32>
    %551 = arith.addf %547, %550 : vector<8x128xf32>
    %552 = math.tanh %551 : vector<8x128xf32>
    %553 = arith.subf %483, %552 : vector<8x128xf32>
    %554 = arith.mulf %546, %553 : vector<8x128xf32>
    %555 = arith.addf %552, %554 : vector<8x128xf32>
    %556 = arith.truncf %504 : vector<8x128xf32> to vector<8x128xbf16>
    %c0_183 = arith.constant 0 : index
    %c0_184 = arith.constant 0 : index
    %557 = vector.load %arg6[%c0_183, %c0_184] : memref<128x256xbf16, #tpu.memory_space<vmem>>, vector<128x256xbf16>
    %cst_185 = arith.constant dense<0.000000e+00> : vector<8x256xf32>
    %558 = tpu.matmul %556, %557, %cst_185 {dimension_numbers = #tpu.dot_dimension_numbers<[1], [0], [0], [1], [0, 0, 1, 1], [], []>} : vector<8x128xbf16>, vector<128x256xbf16>, vector<8x256xf32> -> vector<8x256xf32>
    %559 = vector.extract_strided_slice %534 {offsets = [0, 0], sizes = [8, 128], strides = [1, 1]} : vector<8x256xf32> to vector<8x128xf32>
    %560 = vector.extract_strided_slice %558 {offsets = [0, 0], sizes = [8, 128], strides = [1, 1]} : vector<8x256xf32> to vector<8x128xf32>
    %561 = arith.addf %559, %560 : vector<8x128xf32>
    %562 = arith.negf %561 : vector<8x128xf32>
    %563 = math.exp %562 : vector<8x128xf32>
    %cst_186 = arith.constant 1.000000e+00 : f32
    %564 = vector.broadcast %cst_186 : f32 to vector<8x128xf32>
    %565 = arith.addf %564, %563 : vector<8x128xf32>
    %566 = arith.divf %564, %565 : vector<8x128xf32>
    %c64_i32_187 = arith.constant 64 : i32
    %567 = tpu.dynamic_rotate %566 by %c64_i32_187 dim 1 : vector<8x128xf32>, i32 -> vector<8x128xf32>
    %568 = vector.extract_strided_slice %534 {offsets = [0, 128], sizes = [8, 128], strides = [1, 1]} : vector<8x256xf32> to vector<8x128xf32>
    %569 = vector.extract_strided_slice %558 {offsets = [0, 128], sizes = [8, 128], strides = [1, 1]} : vector<8x256xf32> to vector<8x128xf32>
    %570 = arith.addf %569, %13 : vector<8x128xf32>
    %571 = arith.mulf %566, %570 : vector<8x128xf32>
    %572 = arith.addf %568, %571 : vector<8x128xf32>
    %573 = math.tanh %572 : vector<8x128xf32>
    %574 = arith.subf %504, %573 : vector<8x128xf32>
    %575 = arith.mulf %567, %574 : vector<8x128xf32>
    %576 = arith.addf %573, %575 : vector<8x128xf32>
    %577 = arith.truncf %576 : vector<8x128xf32> to vector<8x128xbf16>
    %c0_188 = arith.constant 0 : index
    %c0_189 = arith.constant 0 : index
    %578 = vector.load %arg9[%c0_188, %c0_189] : memref<128x256xbf16, #tpu.memory_space<vmem>>, vector<128x256xbf16>
    %cst_190 = arith.constant dense<0.000000e+00> : vector<8x256xf32>
    %579 = tpu.matmul %577, %578, %cst_190 {dimension_numbers = #tpu.dot_dimension_numbers<[1], [0], [0], [1], [0, 0, 1, 1], [], []>} : vector<8x128xbf16>, vector<128x256xbf16>, vector<8x256xf32> -> vector<8x256xf32>
    %580 = arith.addf %579, %22 : vector<8x256xf32>
    %581 = arith.truncf %555 : vector<8x128xf32> to vector<8x128xbf16>
    %c0_191 = arith.constant 0 : index
    %c0_192 = arith.constant 0 : index
    %582 = vector.load %arg10[%c0_191, %c0_192] : memref<128x256xbf16, #tpu.memory_space<vmem>>, vector<128x256xbf16>
    %cst_193 = arith.constant dense<0.000000e+00> : vector<8x256xf32>
    %583 = tpu.matmul %581, %582, %cst_193 {dimension_numbers = #tpu.dot_dimension_numbers<[1], [0], [0], [1], [0, 0, 1, 1], [], []>} : vector<8x128xbf16>, vector<128x256xbf16>, vector<8x256xf32> -> vector<8x256xf32>
    %584 = vector.extract_strided_slice %580 {offsets = [0, 0], sizes = [8, 128], strides = [1, 1]} : vector<8x256xf32> to vector<8x128xf32>
    %585 = vector.extract_strided_slice %583 {offsets = [0, 0], sizes = [8, 128], strides = [1, 1]} : vector<8x256xf32> to vector<8x128xf32>
    %586 = arith.addf %584, %585 : vector<8x128xf32>
    %587 = arith.negf %586 : vector<8x128xf32>
    %588 = math.exp %587 : vector<8x128xf32>
    %cst_194 = arith.constant 1.000000e+00 : f32
    %589 = vector.broadcast %cst_194 : f32 to vector<8x128xf32>
    %590 = arith.addf %589, %588 : vector<8x128xf32>
    %591 = arith.divf %589, %590 : vector<8x128xf32>
    %c64_i32_195 = arith.constant 64 : i32
    %592 = tpu.dynamic_rotate %591 by %c64_i32_195 dim 1 : vector<8x128xf32>, i32 -> vector<8x128xf32>
    %593 = vector.extract_strided_slice %580 {offsets = [0, 128], sizes = [8, 128], strides = [1, 1]} : vector<8x256xf32> to vector<8x128xf32>
    %594 = vector.extract_strided_slice %583 {offsets = [0, 128], sizes = [8, 128], strides = [1, 1]} : vector<8x256xf32> to vector<8x128xf32>
    %595 = arith.addf %594, %16 : vector<8x128xf32>
    %596 = arith.mulf %591, %595 : vector<8x128xf32>
    %597 = arith.addf %593, %596 : vector<8x128xf32>
    %598 = math.tanh %597 : vector<8x128xf32>
    %599 = arith.subf %555, %598 : vector<8x128xf32>
    %600 = arith.mulf %592, %599 : vector<8x128xf32>
    %601 = arith.addf %598, %600 : vector<8x128xf32>
    %602 = arith.truncf %601 : vector<8x128xf32> to vector<8x128xbf16>
    %c0_196 = arith.constant 0 : index
    %c0_197 = arith.constant 0 : index
    %603 = vector.load %arg13[%c0_196, %c0_197] : memref<128x128xbf16, #tpu.memory_space<vmem>>, vector<128x128xbf16>
    %cst_198 = arith.constant dense<0.000000e+00> : vector<8x128xf32>
    %604 = tpu.matmul %602, %603, %cst_198 {dimension_numbers = #tpu.dot_dimension_numbers<[1], [0], [0], [1], [0, 0, 1, 1], [], []>} : vector<8x128xbf16>, vector<128x128xbf16>, vector<8x128xf32> -> vector<8x128xf32>
    %c0_199 = arith.constant 0 : index
    %c0_200 = arith.constant 0 : index
    %605 = vector.load %arg14[%c0_199, %c0_200] : memref<1x128xf32, #tpu.memory_space<vmem>>, vector<1x128xf32>
    %606 = vector.broadcast %605 : vector<1x128xf32> to vector<8x128xf32>
    %607 = arith.addf %604, %606 : vector<8x128xf32>
    %c0_201 = arith.constant 0 : index
    %c0_202 = arith.constant 0 : index
    %608 = vector.load %arg15[%c0_201, %c0_202] : memref<8x128xf32, #tpu.memory_space<vmem>>, vector<8x128xf32>
    tpu.vector_store %arg15[%c0_201, %c0_202], %607 {strides = array<i32>} : memref<8x128xf32, #tpu.memory_space<vmem>>, vector<8x128xf32>,
    return
  }
}

</mosaic_0001>

<llo_original>
// kernel: _forward_padded.1
$region0: #{_forward_padded.1}
  #allocation0 [shape = 'u32[]', space=smem, size = 0x4, offset = 0x4, fixed_abs, tag = 'smem constant byte address 0x4 - core index']
  #allocation1 [shape = 'u32[144,128]{1,0:T(1,128)}', space=vmem, size = 0x12000, scoped, tag = 'internal scratch']
  #allocation2 [shape = 'f32[64,256]{1,0:T(8,128)}', space=vmem, size = 0x10000, scoped, tag = 'scratch operand']
  %s0 = inlined_call_operand.vmem [shape: f32[64,128], index: 0, kind: input, shape index: {}]
  %s1 = inlined_call_operand.hbm [shape: bf16[128,256], index: 1, kind: input, shape index: {}]
  %s2 = inlined_call_operand.hbm [shape: bf16[128,256], index: 2, kind: input, shape index: {}]
  %s3 = inlined_call_operand.vmem [shape: f32[1,256], index: 3, kind: input, shape index: {}]
  %s4 = inlined_call_operand.vmem [shape: f32[1,128], index: 4, kind: input, shape index: {}]
  %s5 = inlined_call_operand.hbm [shape: bf16[128,256], index: 5, kind: input, shape index: {}]
  %s6 = inlined_call_operand.hbm [shape: bf16[128,256], index: 6, kind: input, shape index: {}]
  %s7 = inlined_call_operand.vmem [shape: f32[1,256], index: 7, kind: input, shape index: {}]
  %s8 = inlined_call_operand.vmem [shape: f32[1,128], index: 8, kind: input, shape index: {}]
  %s9 = inlined_call_operand.hbm [shape: bf16[128,256], index: 9, kind: input, shape index: {}]
  %s10 = inlined_call_operand.hbm [shape: bf16[128,256], index: 10, kind: input, shape index: {}]
  %s11 = inlined_call_operand.vmem [shape: f32[1,256], index: 11, kind: input, shape index: {}]
  %s12 = inlined_call_operand.vmem [shape: f32[1,128], index: 12, kind: input, shape index: {}]
  %s13 = inlined_call_operand.vmem [shape: bf16[128,128], index: 13, kind: input, shape index: {}]
  %s14 = inlined_call_operand.vmem [shape: f32[1,128], index: 14, kind: input, shape index: {}]
  %s15 = inlined_call_operand.hbm [shape: f32[8,128], index: 15, kind: output, shape index: {}]
  %s16 = sld [smem:[#allocation0]]
  $region94: #{_forward_padded.1} parent=0
    _
  %s18 = ssub.s32 1, %s16
  %s19 = scalar_select 0, %s18, %s16
  $region1: #{_forward_padded.1} parent=0
    #allocation3 [shape = 'u8[65536]{0}', space=vmem, size = 0x10000, scoped, tag = 'input window, operand 1, single buffered']
    #allocation4 [shape = 's32[1]{0}', space=sflag, size = 0x4, scoped, tag = 'scoped memory for _forward_padded.1']
    #allocation5 [shape = 's32[1]{0}', space=sflag, size = 0x4, scoped, tag = 'scoped memory for _forward_padded.1']
    #allocation6 [shape = 'u8[65536]{0}', space=vmem, size = 0x10000, scoped, tag = 'input window, operand 2, single buffered']
    #allocation7 [shape = 's32[1]{0}', space=sflag, size = 0x4, scoped, tag = 'scoped memory for _forward_padded.1']
    #allocation8 [shape = 'u8[65536]{0}', space=vmem, size = 0x10000, scoped, tag = 'input window, operand 5, single buffered']
    #allocation9 [shape = 'u8[65536]{0}', space=vmem, size = 0x10000, scoped, tag = 'input window, operand 6, single buffered']
    #allocation10 [shape = 's32[1]{0}', space=sflag, size = 0x4, scoped, tag = 'scoped memory for _forward_padded.1']
    #allocation11 [shape = 'u8[65536]{0}', space=vmem, size = 0x10000, scoped, tag = 'input window, operand 9, single buffered']
    #allocation12 [shape = 'u8[65536]{0}', space=vmem, size = 0x10000, scoped, tag = 'input window, operand 10, single buffered']
    #allocation13 [shape = 's32[1]{0}', space=sflag, size = 0x4, scoped, tag = 'scoped memory for _forward_padded.1']
    #allocation14 [shape = 'u8[4096]{0}', space=vmem, size = 0x1000, scoped, tag = 'output window, operand 0, single buffered']
    %20 = vsyncpa [#allocation4], 0
    %21 = vsyncpa [#allocation7], 0
    %22 = vsyncpa [#allocation10], 0
    %23 = vsyncpa [#allocation13], 0
    %24 = vsyncpa [#allocation5], 0
    // Predicated region
    $region2: #{_forward_padded.1} parent=1 // pred_check
      _
    $region3: #{_forward_padded.1} parent=1 // pred_check_branch
      %26 = sbr.rel (0) target = $region5
    $region4: #{_forward_padded.1} parent=1 // pred_region
      _
    $region5: #{_forward_padded.1} parent=1 // pred_fallthru
      _
    // Predicated region
    $region6: #{_forward_padded.1} parent=1 // pred_check
      _
    $region7: #{_forward_padded.1} parent=1 // pred_check_branch
      %28 = sbr.rel (0) target = $region9
    $region8: #{_forward_padded.1} parent=1 // pred_region
      %s30 = ssub.s32 2048, 2048
      %31 = vsyncadd [#allocation4], %s30
      %s32 = sshll.u32 [#allocation3], 4
      %s33 = int_to_ptr.vmem [resolvable:$true] %s32
      %38 = dma.hbm_to_vmem [thread:$0]  %s1, 2048, %s33, [#allocation4], 128, 128, 8
    $region9: #{_forward_padded.1} parent=1 // pred_fallthru
      _
    // Predicated region
    $region10: #{_forward_padded.1} parent=1 // pred_check
      _
    $region11: #{_forward_padded.1} parent=1 // pred_check_branch
      %40 = sbr.rel (0) target = $region13
    $region12: #{_forward_padded.1} parent=1 // pred_region
      %s42 = ssub.s32 2048, 2048
      %43 = vsyncadd [#allocation7], %s42
      %s44 = sshll.u32 [#allocation6], 4
      %s45 = int_to_ptr.vmem [resolvable:$true] %s44
      %50 = dma.hbm_to_vmem [thread:$0]  %s2, 2048, %s45, [#allocation7], 128, 128, 8
    $region13: #{_forward_padded.1} parent=1 // pred_fallthru
      _
    // Predicated region
    $region14: #{_forward_padded.1} parent=1 // pred_check
      _
    $region15: #{_forward_padded.1} parent=1 // pred_check_branch
      %52 = sbr.rel (0) target = $region17
    $region16: #{_forward_padded.1} parent=1 // pred_region
      _
    $region17: #{_forward_padded.1} parent=1 // pred_fallthru
      _
    // Predicated region
    $region18: #{_forward_padded.1} parent=1 // pred_check
      _
    $region19: #{_forward_padded.1} parent=1 // pred_check_branch
      %54 = sbr.rel (0) target = $region21
    $region20: #{_forward_padded.1} parent=1 // pred_region
      _
    $region21: #{_forward_padded.1} parent=1 // pred_fallthru
      _
    // Predicated region
    $region22: #{_forward_padded.1} parent=1 // pred_check
      _
    $region23: #{_forward_padded.1} parent=1 // pred_check_branch
      %56 = sbr.rel (0) target = $region25
    $region24: #{_forward_padded.1} parent=1 // pred_region
      %s58 = ssub.s32 2048, 2048
      %59 = vsyncadd [#allocation7], %s58
      %s60 = sshll.u32 [#allocation8], 4
      %s61 = int_to_ptr.vmem [resolvable:$true] %s60
      %66 = dma.hbm_to_vmem [thread:$0]  %s5, 2048, %s61, [#allocation7], 128, 128, 8
    $region25: #{_forward_padded.1} parent=1 // pred_fallthru
      _
    // Predicated region
    $region26: #{_forward_padded.1} parent=1 // pred_check
      _
    $region27: #{_forward_padded.1} parent=1 // pred_check_branch
      %68 = sbr.rel (0) target = $region29
    $region28: #{_forward_padded.1} parent=1 // pred_region
      %s70 = ssub.s32 2048, 2048
      %71 = vsyncadd [#allocation10], %s70
      %s72 = sshll.u32 [#allocation9], 4
      %s73 = int_to_ptr.vmem [resolvable:$true] %s72
      %78 = dma.hbm_to_vmem [thread:$0]  %s6, 2048, %s73, [#allocation10], 128, 128, 8
    $region29: #{_forward_padded.1} parent=1 // pred_fallthru
      _
    // Predicated region
    $region30: #{_forward_padded.1} parent=1 // pred_check
      _
    $region31: #{_forward_padded.1} parent=1 // pred_check_branch
      %80 = sbr.rel (0) target = $region33
    $region32: #{_forward_padded.1} parent=1 // pred_region
      _
    $region33: #{_forward_padded.1} parent=1 // pred_fallthru
      _
    // Predicated region
    $region34: #{_forward_padded.1} parent=1 // pred_check
      _
    $region35: #{_forward_padded.1} parent=1 // pred_check_branch
      %82 = sbr.rel (0) target = $region37
    $region36: #{_forward_padded.1} parent=1 // pred_region
      _
    $region37: #{_forward_padded.1} parent=1 // pred_fallthru
      _
    // Predicated region
    $region38: #{_forward_padded.1} parent=1 // pred_check
      _
    $region39: #{_forward_padded.1} parent=1 // pred_check_branch
      %84 = sbr.rel (0) target = $region41
    $region40: #{_forward_padded.1} parent=1 // pred_region
      %s86 = ssub.s32 2048, 2048
      %87 = vsyncadd [#allocation10], %s86
      %s88 = sshll.u32 [#allocation11], 4
      %s89 = int_to_ptr.vmem [resolvable:$true] %s88
      %94 = dma.hbm_to_vmem [thread:$0]  %s9, 2048, %s89, [#allocation10], 128, 128, 8
    $region41: #{_forward_padded.1} parent=1 // pred_fallthru
      _
    // Predicated region
    $region42: #{_forward_padded.1} parent=1 // pred_check
      _
    $region43: #{_forward_padded.1} parent=1 // pred_check_branch
      %96 = sbr.rel (0) target = $region45
    $region44: #{_forward_padded.1} parent=1 // pred_region
      %s98 = ssub.s32 2048, 2048
      %99 = vsyncadd [#allocation13], %s98
      %s100 = sshll.u32 [#allocation12], 4
      %s101 = int_to_ptr.vmem [resolvable:$true] %s100
      %106 = dma.hbm_to_vmem [thread:$0]  %s10, 2048, %s101, [#allocation13], 128, 128, 8
    $region45: #{_forward_padded.1} parent=1 // pred_fallthru
      _
    // Predicated region
    $region46: #{_forward_padded.1} parent=1 // pred_check
      _
    $region47: #{_forward_padded.1} parent=1 // pred_check_branch
      %108 = sbr.rel (0) target = $region49
    $region48: #{_forward_padded.1} parent=1 // pred_region
      _
    $region49: #{_forward_padded.1} parent=1 // pred_fallthru
      _
    // Predicated region
    $region50: #{_forward_padded.1} parent=1 // pred_check
      _
    $region51: #{_forward_padded.1} parent=1 // pred_check_branch
      %110 = sbr.rel (0) target = $region53
    $region52: #{_forward_padded.1} parent=1 // pred_region
      _
    $region53: #{_forward_padded.1} parent=1 // pred_fallthru
      _
    // Predicated region
    $region54: #{_forward_padded.1} parent=1 // pred_check
      _
    $region55: #{_forward_padded.1} parent=1 // pred_check_branch
      %112 = sbr.rel (0) target = $region57
    $region56: #{_forward_padded.1} parent=1 // pred_region
      _
    $region57: #{_forward_padded.1} parent=1 // pred_fallthru
      _
    // Predicated region
    $region58: #{_forward_padded.1} parent=1 // pred_check
      _
    $region59: #{_forward_padded.1} parent=1 // pred_check_branch
      %114 = sbr.rel (0) target = $region61
    $region60: #{_forward_padded.1} parent=1 // pred_region
      _
    $region61: #{_forward_padded.1} parent=1 // pred_fallthru
      _
    // Predicated region
    $region62: #{_forward_padded.1} parent=1 // pred_check
      _
    $region63: #{_forward_padded.1} parent=1 // pred_check_branch
      %116 = sbr.rel (0) target = $region65
    $region64: #{_forward_padded.1} parent=1 // pred_region
      %117 = dma.done [#allocation4], 2048
    $region65: #{_forward_padded.1} parent=1 // pred_fallthru
      _
    // Predicated region
    $region66: #{_forward_padded.1} parent=1 // pred_check
      _
    $region67: #{_forward_padded.1} parent=1 // pred_check_branch
      %119 = sbr.rel (0) target = $region69
    $region68: #{_forward_padded.1} parent=1 // pred_region
      %120 = dma.done [#allocation7], 2048
    $region69: #{_forward_padded.1} parent=1 // pred_fallthru
      _
    // Predicated region
    $region70: #{_forward_padded.1} parent=1 // pred_check
      _
    $region71: #{_forward_padded.1} parent=1 // pred_check_branch
      %122 = sbr.rel (0) target = $region73
    $region72: #{_forward_padded.1} parent=1 // pred_region
      %123 = dma.done [#allocation7], 2048
    $region73: #{_forward_padded.1} parent=1 // pred_fallthru
      _
    // Predicated region
    $region74: #{_forward_padded.1} parent=1 // pred_check
      _
    $region75: #{_forward_padded.1} parent=1 // pred_check_branch
      %125 = sbr.rel (0) target = $region77
    $region76: #{_forward_padded.1} parent=1 // pred_region
      %126 = dma.done [#allocation10], 2048
    $region77: #{_forward_padded.1} parent=1 // pred_fallthru
      _
    // Predicated region
    $region78: #{_forward_padded.1} parent=1 // pred_check
      _
    $region79: #{_forward_padded.1} parent=1 // pred_check_branch
      %128 = sbr.rel (0) target = $region81
    $region80: #{_forward_padded.1} parent=1 // pred_region
      %129 = dma.done [#allocation10], 2048
    $region81: #{_forward_padded.1} parent=1 // pred_fallthru
      _
    // Predicated region
    $region82: #{_forward_padded.1} parent=1 // pred_check
      _
    $region83: #{_forward_padded.1} parent=1 // pred_check_branch
      %131 = sbr.rel (0) target = $region85
    $region84: #{_forward_padded.1} parent=1 // pred_region
      %132 = dma.done [#allocation13], 2048
    $region85: #{_forward_padded.1} parent=1 // pred_fallthru
      _
    %v134 = vld [vmem:[%s0] sm:$0xff]
    %v135 = vld [vmem:[%s0 + $0x8] sm:$0xff]
    %v136 = vld [vmem:[%s0 + $0x10] sm:$0xff]
    %v137 = vld [vmem:[%s0 + $0x18] sm:$0xff]
    %v138 = vld [vmem:[%s0 + $0x20] sm:$0xff]
    %v139 = vld [vmem:[%s0 + $0x28] sm:$0xff]
    %v140 = vld [vmem:[%s0 + $0x30] sm:$0xff]
    %v141 = vld [vmem:[%s0 + $0x38] sm:$0xff]
    %v142 = vpack.c.bf16 %v135, %v134
    %v143 = vpack.c.bf16 %v137, %v136
    %v144 = vpack.c.bf16 %v139, %v138
    %v145 = vpack.c.bf16 %v141, %v140
    %v146 = vld [vmem:[#allocation3] sm:$0xff]
    %v147 = vld [vmem:[#allocation3 + $0x8] sm:$0xff]
    %v148 = vld [vmem:[#allocation3 + $0x10] sm:$0xff]
    %v149 = vld [vmem:[#allocation3 + $0x18] sm:$0xff]
    %v150 = vld [vmem:[#allocation3 + $0x20] sm:$0xff]
    %v151 = vld [vmem:[#allocation3 + $0x28] sm:$0xff]
    %v152 = vld [vmem:[#allocation3 + $0x30] sm:$0xff]
    %v153 = vld [vmem:[#allocation3 + $0x38] sm:$0xff]
    %v154 = vld [vmem:[#allocation3 + $0x40] sm:$0xff]
    %v155 = vld [vmem:[#allocation3 + $0x48] sm:$0xff]
    %v156 = vld [vmem:[#allocation3 + $0x50] sm:$0xff]
    %v157 = vld [vmem:[#allocation3 + $0x58] sm:$0xff]
    %v158 = vld [vmem:[#allocation3 + $0x60] sm:$0xff]
    %v159 = vld [vmem:[#allocation3 + $0x68] sm:$0xff]
    %v160 = vld [vmem:[#allocation3 + $0x70] sm:$0xff]
    %v161 = vld [vmem:[#allocation3 + $0x78] sm:$0xff]
    %v162 = vld [vmem:[%s3] sm:$0x3]
    %v164 = vlaneseq
    %v165 = vshrl.u32 %v164, 7
    %v166 = vsub.s32 0, %v165
    %v167 = vrot.slane %v162, %v166
    %v168 = vlaneseq
    %v169 = vshrl.u32 %v168, 7
    %v170 = vsub.s32 1, %v169
    %v171 = vrot.slane %v162, %v170
    %v190 = vunpack.c.l.b16 %v146
    %v191 = vunpack.c.h.b16 %v146
    %v192 = vunpack.c.l.b16 %v147
    %v193 = vunpack.c.h.b16 %v147
    %v194 = vunpack.c.l.b16 %v148
    %v195 = vunpack.c.h.b16 %v148
    %v196 = vunpack.c.l.b16 %v149
    %v197 = vunpack.c.h.b16 %v149
    %v198 = vunpack.c.l.b16 %v150
    %v199 = vunpack.c.h.b16 %v150
    %v200 = vunpack.c.l.b16 %v151
    %v201 = vunpack.c.h.b16 %v151
    %v202 = vunpack.c.l.b16 %v152
    %v203 = vunpack.c.h.b16 %v152
    %v204 = vunpack.c.l.b16 %v153
    %v205 = vunpack.c.h.b16 %v153
    %v206 = vunpack.c.l.b16 %v154
    %v207 = vunpack.c.h.b16 %v154
    %v208 = vunpack.c.l.b16 %v155
    %v209 = vunpack.c.h.b16 %v155
    %v210 = vunpack.c.l.b16 %v156
    %v211 = vunpack.c.h.b16 %v156
    %v212 = vunpack.c.l.b16 %v157
    %v213 = vunpack.c.h.b16 %v157
    %v214 = vunpack.c.l.b16 %v158
    %v215 = vunpack.c.h.b16 %v158
    %v216 = vunpack.c.l.b16 %v159
    %v217 = vunpack.c.h.b16 %v159
    %v218 = vunpack.c.l.b16 %v160
    %v219 = vunpack.c.h.b16 %v160
    %v220 = vunpack.c.l.b16 %v161
    %v221 = vunpack.c.h.b16 %v161
    %v222 = vpack.c.b16 %v192, %v190
    %v223 = vpack.c.b16 %v193, %v191
    %v224 = vpack.c.b16 %v196, %v194
    %v225 = vpack.c.b16 %v197, %v195
    %v226 = vpack.c.b16 %v200, %v198
    %v227 = vpack.c.b16 %v201, %v199
    %v228 = vpack.c.b16 %v204, %v202
    %v229 = vpack.c.b16 %v205, %v203
    %v230 = vpack.c.b16 %v208, %v206
    %v231 = vpack.c.b16 %v209, %v207
    %v232 = vpack.c.b16 %v212, %v210
    %v233 = vpack.c.b16 %v213, %v211
    %v234 = vpack.c.b16 %v216, %v214
    %v235 = vpack.c.b16 %v217, %v215
    %v236 = vpack.c.b16 %v220, %v218
    %v237 = vpack.c.b16 %v221, %v219
    %254 = vmatprep.subr.bf16.mxu0 %v237
    %255 = vmatpush1.bf16.msra.mxu0 %v236
    %256 = vmatprep.subr.bf16.mxu0 %v235
    %257 = vmatpush1.bf16.msra.mxu0 %v234
    %258 = vmatprep.subr.bf16.mxu0 %v233
    %259 = vmatpush1.bf16.msra.mxu0 %v232
    %260 = vmatprep.subr.bf16.mxu0 %v231
    %261 = vmatpush1.bf16.msra.mxu0 %v230
    %262 = vmatprep.subr.bf16.mxu0 %v229
    %263 = vmatpush1.bf16.msra.mxu0 %v228
    %264 = vmatprep.subr.bf16.mxu0 %v227
    %265 = vmatpush1.bf16.msra.mxu0 %v226
    %266 = vmatprep.subr.bf16.mxu0 %v225
    %267 = vmatpush1.bf16.msra.mxu0 %v224
    %268 = vmatprep.subr.bf16.mxu0 %v223
    %269 = vmatpush1.bf16.msra.mxu0 %v222
    %270 = vmatprep.subr.bf16.mxu0 0
    %271 = vmatpush2.bf16.msra.mxu0 0
    %272 = vmatprep.subr.bf16.mxu0 0
    %273 = vmatpush2.bf16.msra.mxu0 0
    %274 = vmatprep.subr.bf16.mxu0 0
    %275 = vmatpush2.bf16.msra.mxu0 0
    %276 = vmatprep.subr.bf16.mxu0 0
    %277 = vmatpush2.bf16.msra.mxu0 0
    %278 = vmatprep.subr.bf16.mxu0 0
    %279 = vmatpush2.bf16.msra.mxu0 0
    %280 = vmatprep.subr.bf16.mxu0 0
    %281 = vmatpush2.bf16.msra.mxu0 0
    %282 = vmatprep.subr.bf16.mxu0 0
    %283 = vmatpush2.bf16.msra.mxu0 0
    %284 = vmatprep.subr.bf16.mxu0 0
    %285 = vmatpush2.bf16.msra.mxu0 0
    %286 = vmatprep.mubr.bf16.mxu0 0
    %287 = vmatmul.mubr.bf16.gmra.mxu0 %v142
    %v288 = vpop.f32.mrf.mxu0
    %v289 = vadd.f32 %v167, %v288
    %v290 = vpop.f32.mrf.mxu0
    %v291 = vadd.f32 %v171, %v290
    %v292 = vpop.f32.mrf.mxu0
    %v293 = vadd.f32 %v167, %v292
    %v294 = vpop.f32.mrf.mxu0
    %v295 = vadd.f32 %v171, %v294
    %296 = vmatprep.mubr.bf16.mxu0 0
    %297 = vmatmul.mubr.bf16.gmra.mxu0 %v143
    %v298 = vpop.f32.mrf.mxu0
    %v299 = vadd.f32 %v167, %v298
    %v300 = vpop.f32.mrf.mxu0
    %v301 = vadd.f32 %v171, %v300
    %v302 = vpop.f32.mrf.mxu0
    %v303 = vadd.f32 %v167, %v302
    %v304 = vpop.f32.mrf.mxu0
    %v305 = vadd.f32 %v171, %v304
    %306 = vmatprep.mubr.bf16.mxu0 0
    %307 = vmatmul.mubr.bf16.gmra.mxu0 %v144
    %v308 = vpop.f32.mrf.mxu0
    %v309 = vadd.f32 %v167, %v308
    %v310 = vpop.f32.mrf.mxu0
    %v311 = vadd.f32 %v171, %v310
    %v312 = vpop.f32.mrf.mxu0
    %v313 = vadd.f32 %v167, %v312
    %v314 = vpop.f32.mrf.mxu0
    %v315 = vadd.f32 %v171, %v314
    %316 = vmatprep.mubr.bf16.mxu0 0
    %317 = vmatmul.mubr.bf16.gmra.mxu0 %v145
    %v318 = vpop.f32.mrf.mxu0
    %v319 = vadd.f32 %v167, %v318
    %v320 = vpop.f32.mrf.mxu0
    %v321 = vadd.f32 %v171, %v320
    %v322 = vpop.f32.mrf.mxu0
    %v323 = vadd.f32 %v167, %v322
    %v324 = vpop.f32.mrf.mxu0
    %v325 = vadd.f32 %v171, %v324
    %326 = vdwg.mxu0
    %327 = vst [vmem:[#allocation2] sm:$0xff] %v289
    %328 = vst [vmem:[#allocation2 + $0x8] sm:$0xff] %v291
    %329 = vst [vmem:[#allocation2 + $0x10] sm:$0xff] %v293
    %330 = vst [vmem:[#allocation2 + $0x18] sm:$0xff] %v295
    %331 = vst [vmem:[#allocation2 + $0x20] sm:$0xff] %v299
    %332 = vst [vmem:[#allocation2 + $0x28] sm:$0xff] %v301
    %333 = vst [vmem:[#allocation2 + $0x30] sm:$0xff] %v303
    %334 = vst [vmem:[#allocation2 + $0x38] sm:$0xff] %v305
    %335 = vst [vmem:[#allocation2 + $0x40] sm:$0xff] %v309
    %336 = vst [vmem:[#allocation2 + $0x48] sm:$0xff] %v311
    %337 = vst [vmem:[#allocation2 + $0x50] sm:$0xff] %v313
    %338 = vst [vmem:[#allocation2 + $0x58] sm:$0xff] %v315
    %339 = vst [vmem:[#allocation2 + $0x60] sm:$0xff] %v319
    %340 = vst [vmem:[#allocation2 + $0x68] sm:$0xff] %v321
    %341 = vst [vmem:[#allocation2 + $0x70] sm:$0xff] %v323
    %342 = vst [vmem:[#allocation2 + $0x78] sm:$0xff] %v325
    %v343 = vld [vmem:[%s4] sm:$0x1]
    %v345 = vlaneseq
    %v346 = vshrl.u32 %v345, 7
    %v347 = vsub.s32 0, %v346
    %v348 = vrot.slane %v343, %v347
    %v350 = vld [vmem:[%s8] sm:$0x1]
    %v352 = vlaneseq
    %v353 = vshrl.u32 %v352, 7
    %v354 = vsub.s32 0, %v353
    %v355 = vrot.slane %v350, %v354
    %v357 = vld [vmem:[%s12] sm:$0x1]
    %v359 = vlaneseq
    %v360 = vshrl.u32 %v359, 7
    %v361 = vsub.s32 0, %v360
    %v362 = vrot.slane %v357, %v361
    %v364 = vld [vmem:[%s7] sm:$0x3]
    %v366 = vlaneseq
    %v367 = vshrl.u32 %v366, 7
    %v368 = vsub.s32 0, %v367
    %v369 = vrot.slane %v364, %v368
    %v370 = vlaneseq
    %v371 = vshrl.u32 %v370, 7
    %v372 = vsub.s32 1, %v371
    %v373 = vrot.slane %v364, %v372
    %v376 = vld [vmem:[%s11] sm:$0x3]
    %v378 = vlaneseq
    %v379 = vshrl.u32 %v378, 7
    %v380 = vsub.s32 0, %v379
    %v381 = vrot.slane %v376, %v380
    %v382 = vlaneseq
    %v383 = vshrl.u32 %v382, 7
    %v384 = vsub.s32 1, %v383
    %v385 = vrot.slane %v376, %v384
    %v388 = vld [vmem:[#allocation2] sm:$0xff]
    %v389 = vld [vmem:[#allocation2 + $0x8] sm:$0xff]
    %v390 = vld [vmem:[#allocation6] sm:$0xff]
    %v391 = vld [vmem:[#allocation6 + $0x8] sm:$0xff]
    %v392 = vld [vmem:[#allocation6 + $0x10] sm:$0xff]
    %v393 = vld [vmem:[#allocation6 + $0x18] sm:$0xff]
    %v394 = vld [vmem:[#allocation6 + $0x20] sm:$0xff]
    %v395 = vld [vmem:[#allocation6 + $0x28] sm:$0xff]
    %v396 = vld [vmem:[#allocation6 + $0x30] sm:$0xff]
    %v397 = vld [vmem:[#allocation6 + $0x38] sm:$0xff]
    %v398 = vld [vmem:[#allocation6 + $0x40] sm:$0xff]
    %v399 = vld [vmem:[#allocation6 + $0x48] sm:$0xff]
    %v400 = vld [vmem:[#allocation6 + $0x50] sm:$0xff]
    %v401 = vld [vmem:[#allocation6 + $0x58] sm:$0xff]
    %v402 = vld [vmem:[#allocation6 + $0x60] sm:$0xff]
    %v403 = vld [vmem:[#allocation6 + $0x68] sm:$0xff]
    %v404 = vld [vmem:[#allocation6 + $0x70] sm:$0xff]
    %v405 = vld [vmem:[#allocation6 + $0x78] sm:$0xff]
    %v422 = vunpack.c.l.b16 %v390
    %v423 = vunpack.c.h.b16 %v390
    %v424 = vunpack.c.l.b16 %v391
    %v425 = vunpack.c.h.b16 %v391
    %v426 = vunpack.c.l.b16 %v392
    %v427 = vunpack.c.h.b16 %v392
    %v428 = vunpack.c.l.b16 %v393
    %v429 = vunpack.c.h.b16 %v393
    %v430 = vunpack.c.l.b16 %v394
    %v431 = vunpack.c.h.b16 %v394
    %v432 = vunpack.c.l.b16 %v395
    %v433 = vunpack.c.h.b16 %v395
    %v434 = vunpack.c.l.b16 %v396
    %v435 = vunpack.c.h.b16 %v396
    %v436 = vunpack.c.l.b16 %v397
    %v437 = vunpack.c.h.b16 %v397
    %v438 = vunpack.c.l.b16 %v398
    %v439 = vunpack.c.h.b16 %v398
    %v440 = vunpack.c.l.b16 %v399
    %v441 = vunpack.c.h.b16 %v399
    %v442 = vunpack.c.l.b16 %v400
    %v443 = vunpack.c.h.b16 %v400
    %v444 = vunpack.c.l.b16 %v401
    %v445 = vunpack.c.h.b16 %v401
    %v446 = vunpack.c.l.b16 %v402
    %v447 = vunpack.c.h.b16 %v402
    %v448 = vunpack.c.l.b16 %v403
    %v449 = vunpack.c.h.b16 %v403
    %v450 = vunpack.c.l.b16 %v404
    %v451 = vunpack.c.h.b16 %v404
    %v452 = vunpack.c.l.b16 %v405
    %v453 = vunpack.c.h.b16 %v405
    %v454 = vpack.c.b16 %v424, %v422
    %v455 = vpack.c.b16 %v425, %v423
    %v456 = vpack.c.b16 %v428, %v426
    %v457 = vpack.c.b16 %v429, %v427
    %v458 = vpack.c.b16 %v432, %v430
    %v459 = vpack.c.b16 %v433, %v431
    %v460 = vpack.c.b16 %v436, %v434
    %v461 = vpack.c.b16 %v437, %v435
    %v462 = vpack.c.b16 %v440, %v438
    %v463 = vpack.c.b16 %v441, %v439
    %v464 = vpack.c.b16 %v444, %v442
    %v465 = vpack.c.b16 %v445, %v443
    %v466 = vpack.c.b16 %v448, %v446
    %v467 = vpack.c.b16 %v449, %v447
    %v468 = vpack.c.b16 %v452, %v450
    %v469 = vpack.c.b16 %v453, %v451
    %486 = vmatprep.subr.bf16.mxu0 %v469
    %487 = vmatpush1.bf16.msra.mxu0 %v468
    %488 = vmatprep.subr.bf16.mxu0 %v467
    %489 = vmatpush1.bf16.msra.mxu0 %v466
    %490 = vmatprep.subr.bf16.mxu0 %v465
    %491 = vmatpush1.bf16.msra.mxu0 %v464
    %492 = vmatprep.subr.bf16.mxu0 %v463
    %493 = vmatpush1.bf16.msra.mxu0 %v462
    %494 = vmatprep.subr.bf16.mxu0 %v461
    %495 = vmatpush1.bf16.msra.mxu0 %v460
    %496 = vmatprep.subr.bf16.mxu0 %v459
    %497 = vmatpush1.bf16.msra.mxu0 %v458
    %498 = vmatprep.subr.bf16.mxu0 %v457
    %499 = vmatpush1.bf16.msra.mxu0 %v456
    %500 = vmatprep.subr.bf16.mxu0 %v455
    %501 = vmatpush1.bf16.msra.mxu0 %v454
    %502 = vmatprep.subr.bf16.mxu0 0
    %503 = vmatpush2.bf16.msra.mxu0 0
    %504 = vmatprep.subr.bf16.mxu0 0
    %505 = vmatpush2.bf16.msra.mxu0 0
    %506 = vmatprep.subr.bf16.mxu0 0
    %507 = vmatpush2.bf16.msra.mxu0 0
    %508 = vmatprep.subr.bf16.mxu0 0
    %509 = vmatpush2.bf16.msra.mxu0 0
    %510 = vmatprep.subr.bf16.mxu0 0
    %511 = vmatpush2.bf16.msra.mxu0 0
    %512 = vmatprep.subr.bf16.mxu0 0
    %513 = vmatpush2.bf16.msra.mxu0 0
    %514 = vmatprep.subr.bf16.mxu0 0
    %515 = vmatpush2.bf16.msra.mxu0 0
    %516 = vmatprep.subr.bf16.mxu0 0
    %517 = vmatpush2.bf16.msra.mxu0 0
    %518 = vmatprep.mubr.bf16.mxu0 0
    %519 = vmatmul.mubr.bf16.gmra.mxu0 0
    %v520 = vpop.f32.mrf.mxu0
    %v521 = vadd.f32 0.0, %v520
    %v522 = vpop.f32.mrf.mxu0
    %v523 = vadd.f32 0.0, %v522
    %v524 = vpop.f32.mrf.mxu0
    %v525 = vpop.f32.mrf.mxu0
    %526 = vdwg.mxu0
    %v527 = vadd.f32 %v388, %v521
    %v528 = vxor.u32 %v527, 2147483648
    %v529 = vmul.f32 %v528, 1.442695
    %v530 = vpow.pop %v529
    %v531 = vadd.f32 %v530, 1.0
    %v532 = vrcp.pop %v531
    %v533 = vmul.f32 1.0, %v532
    %534 = vrot.lane.b32.xlu0 %v533, 64
    %v535 = vpop.permute.xlu0 %534
    %v536 = vadd.f32 %v523, %v348
    %v537 = vmul.f32 %v533, %v536
    %v538 = vadd.f32 %v389, %v537
    %v539 = vtanh.pop %v538
    %v540 = vsub.f32 0.0, %v539
    %v541 = vmul.f32 %v535, %v540
    %v542 = vadd.f32 %v539, %v541
    %v543 = vpack.c.bf16 %v542, %v542
    %v544 = vld [vmem:[#allocation8] sm:$0xff]
    %v545 = vld [vmem:[#allocation8 + $0x8] sm:$0xff]
    %v546 = vld [vmem:[#allocation8 + $0x10] sm:$0xff]
    %v547 = vld [vmem:[#allocation8 + $0x18] sm:$0xff]
    %v548 = vld [vmem:[#allocation8 + $0x20] sm:$0xff]
    %v549 = vld [vmem:[#allocation8 + $0x28] sm:$0xff]
    %v550 = vld [vmem:[#allocation8 + $0x30] sm:$0xff]
    %v551 = vld [vmem:[#allocation8 + $0x38] sm:$0xff]
    %v552 = vld [vmem:[#allocation8 + $0x40] sm:$0xff]
    %v553 = vld [vmem:[#allocation8 + $0x48] sm:$0xff]
    %v554 = vld [vmem:[#allocation8 + $0x50] sm:$0xff]
    %v555 = vld [vmem:[#allocation8 + $0x58] sm:$0xff]
    %v556 = vld [vmem:[#allocation8 + $0x60] sm:$0xff]
    %v557 = vld [vmem:[#allocation8 + $0x68] sm:$0xff]
    %v558 = vld [vmem:[#allocation8 + $0x70] sm:$0xff]
    %v559 = vld [vmem:[#allocation8 + $0x78] sm:$0xff]
    %v576 = vunpack.c.l.b16 %v544
    %v577 = vunpack.c.h.b16 %v544
    %v578 = vunpack.c.l.b16 %v545
    %v579 = vunpack.c.h.b16 %v545
    %v580 = vunpack.c.l.b16 %v546
    %v581 = vunpack.c.h.b16 %v546
    %v582 = vunpack.c.l.b16 %v547
    %v583 = vunpack.c.h.b16 %v547
    %v584 = vunpack.c.l.b16 %v548
    %v585 = vunpack.c.h.b16 %v548
    %v586 = vunpack.c.l.b16 %v549
    %v587 = vunpack.c.h.b16 %v549
    %v588 = vunpack.c.l.b16 %v550
    %v589 = vunpack.c.h.b16 %v550
    %v590 = vunpack.c.l.b16 %v551
    %v591 = vunpack.c.h.b16 %v551
    %v592 = vunpack.c.l.b16 %v552
    %v593 = vunpack.c.h.b16 %v552
    %v594 = vunpack.c.l.b16 %v553
    %v595 = vunpack.c.h.b16 %v553
    %v596 = vunpack.c.l.b16 %v554
    %v597 = vunpack.c.h.b16 %v554
    %v598 = vunpack.c.l.b16 %v555
    %v599 = vunpack.c.h.b16 %v555
    %v600 = vunpack.c.l.b16 %v556
    %v601 = vunpack.c.h.b16 %v556
    %v602 = vunpack.c.l.b16 %v557
    %v603 = vunpack.c.h.b16 %v557
    %v604 = vunpack.c.l.b16 %v558
    %v605 = vunpack.c.h.b16 %v558
    %v606 = vunpack.c.l.b16 %v559
    %v607 = vunpack.c.h.b16 %v559
    %v608 = vpack.c.b16 %v578, %v576
    %v609 = vpack.c.b16 %v579, %v577
    %v610 = vpack.c.b16 %v582, %v580
    %v611 = vpack.c.b16 %v583, %v581
    %v612 = vpack.c.b16 %v586, %v584
    %v613 = vpack.c.b16 %v587, %v585
    %v614 = vpack.c.b16 %v590, %v588
    %v615 = vpack.c.b16 %v591, %v589
    %v616 = vpack.c.b16 %v594, %v592
    %v617 = vpack.c.b16 %v595, %v593
    %v618 = vpack.c.b16 %v598, %v596
    %v619 = vpack.c.b16 %v599, %v597
    %v620 = vpack.c.b16 %v602, %v600
    %v621 = vpack.c.b16 %v603, %v601
    %v622 = vpack.c.b16 %v606, %v604
    %v623 = vpack.c.b16 %v607, %v605
    %640 = vmatprep.subr.bf16.mxu0 %v623
    %641 = vmatpush1.bf16.msra.mxu0 %v622
    %642 = vmatprep.subr.bf16.mxu0 %v621
    %643 = vmatpush1.bf16.msra.mxu0 %v620
    %644 = vmatprep.subr.bf16.mxu0 %v619
    %645 = vmatpush1.bf16.msra.mxu0 %v618
    %646 = vmatprep.subr.bf16.mxu0 %v617
    %647 = vmatpush1.bf16.msra.mxu0 %v616
    %648 = vmatprep.subr.bf16.mxu0 %v615
    %649 = vmatpush1.bf16.msra.mxu0 %v614
    %650 = vmatprep.subr.bf16.mxu0 %v613
    %651 = vmatpush1.bf16.msra.mxu0 %v612
    %652 = vmatprep.subr.bf16.mxu0 %v611
    %653 = vmatpush1.bf16.msra.mxu0 %v610
    %654 = vmatprep.subr.bf16.mxu0 %v609
    %655 = vmatpush1.bf16.msra.mxu0 %v608
    %656 = vmatprep.subr.bf16.mxu0 0
    %657 = vmatpush2.bf16.msra.mxu0 0
    %658 = vmatprep.subr.bf16.mxu0 0
    %659 = vmatpush2.bf16.msra.mxu0 0
    %660 = vmatprep.subr.bf16.mxu0 0
    %661 = vmatpush2.bf16.msra.mxu0 0
    %662 = vmatprep.subr.bf16.mxu0 0
    %663 = vmatpush2.bf16.msra.mxu0 0
    %664 = vmatprep.subr.bf16.mxu0 0
    %665 = vmatpush2.bf16.msra.mxu0 0
    %666 = vmatprep.subr.bf16.mxu0 0
    %667 = vmatpush2.bf16.msra.mxu0 0
    %668 = vmatprep.subr.bf16.mxu0 0
    %669 = vmatpush2.bf16.msra.mxu0 0
    %670 = vmatprep.subr.bf16.mxu0 0
    %671 = vmatpush2.bf16.msra.mxu0 0
    %672 = vmatprep.mubr.bf16.mxu0 0
    %673 = vmatmul.mubr.bf16.gmra.mxu0 %v543
    %v674 = vpop.f32.mrf.mxu0
    %v675 = vadd.f32 %v369, %v674
    %v676 = vpop.f32.mrf.mxu0
    %v677 = vadd.f32 %v373, %v676
    %v678 = vpop.f32.mrf.mxu0
    %v679 = vpop.f32.mrf.mxu0
    %680 = vdwg.mxu0
    %v681 = vld [vmem:[#allocation9] sm:$0xff]
    %v682 = vld [vmem:[#allocation9 + $0x8] sm:$0xff]
    %v683 = vld [vmem:[#allocation9 + $0x10] sm:$0xff]
    %v684 = vld [vmem:[#allocation9 + $0x18] sm:$0xff]
    %v685 = vld [vmem:[#allocation9 + $0x20] sm:$0xff]
    %v686 = vld [vmem:[#allocation9 + $0x28] sm:$0xff]
    %v687 = vld [vmem:[#allocation9 + $0x30] sm:$0xff]
    %v688 = vld [vmem:[#allocation9 + $0x38] sm:$0xff]
    %v689 = vld [vmem:[#allocation9 + $0x40] sm:$0xff]
    %v690 = vld [vmem:[#allocation9 + $0x48] sm:$0xff]
    %v691 = vld [vmem:[#allocation9 + $0x50] sm:$0xff]
    %v692 = vld [vmem:[#allocation9 + $0x58] sm:$0xff]
    %v693 = vld [vmem:[#allocation9 + $0x60] sm:$0xff]
    %v694 = vld [vmem:[#allocation9 + $0x68] sm:$0xff]
    %v695 = vld [vmem:[#allocation9 + $0x70] sm:$0xff]
    %v696 = vld [vmem:[#allocation9 + $0x78] sm:$0xff]
    %v713 = vunpack.c.l.b16 %v681
    %v714 = vunpack.c.h.b16 %v681
    %v715 = vunpack.c.l.b16 %v682
    %v716 = vunpack.c.h.b16 %v682
    %v717 = vunpack.c.l.b16 %v683
    %v718 = vunpack.c.h.b16 %v683
    %v719 = vunpack.c.l.b16 %v684
    %v720 = vunpack.c.h.b16 %v684
    %v721 = vunpack.c.l.b16 %v685
    %v722 = vunpack.c.h.b16 %v685
    %v723 = vunpack.c.l.b16 %v686
    %v724 = vunpack.c.h.b16 %v686
    %v725 = vunpack.c.l.b16 %v687
    %v726 = vunpack.c.h.b16 %v687
    %v727 = vunpack.c.l.b16 %v688
    %v728 = vunpack.c.h.b16 %v688
    %v729 = vunpack.c.l.b16 %v689
    %v730 = vunpack.c.h.b16 %v689
    %v731 = vunpack.c.l.b16 %v690
    %v732 = vunpack.c.h.b16 %v690
    %v733 = vunpack.c.l.b16 %v691
    %v734 = vunpack.c.h.b16 %v691
    %v735 = vunpack.c.l.b16 %v692
    %v736 = vunpack.c.h.b16 %v692
    %v737 = vunpack.c.l.b16 %v693
    %v738 = vunpack.c.h.b16 %v693
    %v739 = vunpack.c.l.b16 %v694
    %v740 = vunpack.c.h.b16 %v694
    %v741 = vunpack.c.l.b16 %v695
    %v742 = vunpack.c.h.b16 %v695
    %v743 = vunpack.c.l.b16 %v696
    %v744 = vunpack.c.h.b16 %v696
    %v745 = vpack.c.b16 %v715, %v713
    %v746 = vpack.c.b16 %v716, %v714
    %v747 = vpack.c.b16 %v719, %v717
    %v748 = vpack.c.b16 %v720, %v718
    %v749 = vpack.c.b16 %v723, %v721
    %v750 = vpack.c.b16 %v724, %v722
    %v751 = vpack.c.b16 %v727, %v725
    %v752 = vpack.c.b16 %v728, %v726
    %v753 = vpack.c.b16 %v731, %v729
    %v754 = vpack.c.b16 %v732, %v730
    %v755 = vpack.c.b16 %v735, %v733
    %v756 = vpack.c.b16 %v736, %v734
    %v757 = vpack.c.b16 %v739, %v737
    %v758 = vpack.c.b16 %v740, %v738
    %v759 = vpack.c.b16 %v743, %v741
    %v760 = vpack.c.b16 %v744, %v742
    %777 = vmatprep.subr.bf16.mxu0 %v760
    %778 = vmatpush1.bf16.msra.mxu0 %v759
    %779 = vmatprep.subr.bf16.mxu0 %v758
    %780 = vmatpush1.bf16.msra.mxu0 %v757
    %781 = vmatprep.subr.bf16.mxu0 %v756
    %782 = vmatpush1.bf16.msra.mxu0 %v755
    %783 = vmatprep.subr.bf16.mxu0 %v754
    %784 = vmatpush1.bf16.msra.mxu0 %v753
    %785 = vmatprep.subr.bf16.mxu0 %v752
    %786 = vmatpush1.bf16.msra.mxu0 %v751
    %787 = vmatprep.subr.bf16.mxu0 %v750
    %788 = vmatpush1.bf16.msra.mxu0 %v749
    %789 = vmatprep.subr.bf16.mxu0 %v748
    %790 = vmatpush1.bf16.msra.mxu0 %v747
    %791 = vmatprep.subr.bf16.mxu0 %v746
    %792 = vmatpush1.bf16.msra.mxu0 %v745
    %793 = vmatprep.subr.bf16.mxu0 0
    %794 = vmatpush2.bf16.msra.mxu0 0
    %795 = vmatprep.subr.bf16.mxu0 0
    %796 = vmatpush2.bf16.msra.mxu0 0
    %797 = vmatprep.subr.bf16.mxu0 0
    %798 = vmatpush2.bf16.msra.mxu0 0
    %799 = vmatprep.subr.bf16.mxu0 0
    %800 = vmatpush2.bf16.msra.mxu0 0
    %801 = vmatprep.subr.bf16.mxu0 0
    %802 = vmatpush2.bf16.msra.mxu0 0
    %803 = vmatprep.subr.bf16.mxu0 0
    %804 = vmatpush2.bf16.msra.mxu0 0
    %805 = vmatprep.subr.bf16.mxu0 0
    %806 = vmatpush2.bf16.msra.mxu0 0
    %807 = vmatprep.subr.bf16.mxu0 0
    %808 = vmatpush2.bf16.msra.mxu0 0
    %809 = vmatprep.mubr.bf16.mxu0 0
    %810 = vmatmul.mubr.bf16.gmra.mxu0 0
    %v811 = vpop.f32.mrf.mxu0
    %v812 = vadd.f32 0.0, %v811
    %v813 = vpop.f32.mrf.mxu0
    %v814 = vadd.f32 0.0, %v813
    %v815 = vpop.f32.mrf.mxu0
    %v816 = vpop.f32.mrf.mxu0
    %817 = vdwg.mxu0
    %v818 = vadd.f32 %v675, %v812
    %v819 = vxor.u32 %v818, 2147483648
    %v820 = vmul.f32 %v819, 1.442695
    %v821 = vpow.pop %v820
    %v822 = vadd.f32 %v821, 1.0
    %v823 = vrcp.pop %v822
    %v824 = vmul.f32 1.0, %v823
    %825 = vrot.lane.b32.xlu0 %v824, 64
    %v826 = vpop.permute.xlu0 %825
    %v827 = vadd.f32 %v814, %v355
    %v828 = vmul.f32 %v824, %v827
    %v829 = vadd.f32 %v677, %v828
    %v830 = vtanh.pop %v829
    %v831 = vsub.f32 0.0, %v830
    %v832 = vmul.f32 %v826, %v831
    %v833 = vadd.f32 %v830, %v832
    %v834 = vpack.c.bf16 %v833, %v833
    %v835 = vld [vmem:[#allocation11] sm:$0xff]
    %v836 = vld [vmem:[#allocation11 + $0x8] sm:$0xff]
    %v837 = vld [vmem:[#allocation11 + $0x10] sm:$0xff]
    %v838 = vld [vmem:[#allocation11 + $0x18] sm:$0xff]
    %v839 = vld [vmem:[#allocation11 + $0x20] sm:$0xff]
    %v840 = vld [vmem:[#allocation11 + $0x28] sm:$0xff]
    %v841 = vld [vmem:[#allocation11 + $0x30] sm:$0xff]
    %v842 = vld [vmem:[#allocation11 + $0x38] sm:$0xff]
    %v843 = vld [vmem:[#allocation11 + $0x40] sm:$0xff]
    %v844 = vld [vmem:[#allocation11 + $0x48] sm:$0xff]
    %v845 = vld [vmem:[#allocation11 + $0x50] sm:$0xff]
    %v846 = vld [vmem:[#allocation11 + $0x58] sm:$0xff]
    %v847 = vld [vmem:[#allocation11 + $0x60] sm:$0xff]
    %v848 = vld [vmem:[#allocation11 + $0x68] sm:$0xff]
    %v849 = vld [vmem:[#allocation11 + $0x70] sm:$0xff]
    %v850 = vld [vmem:[#allocation11 + $0x78] sm:$0xff]
    %v867 = vunpack.c.l.b16 %v835
    %v868 = vunpack.c.h.b16 %v835
    %v869 = vunpack.c.l.b16 %v836
    %v870 = vunpack.c.h.b16 %v836
    %v871 = vunpack.c.l.b16 %v837
    %v872 = vunpack.c.h.b16 %v837
    %v873 = vunpack.c.l.b16 %v838
    %v874 = vunpack.c.h.b16 %v838
    %v875 = vunpack.c.l.b16 %v839
    %v876 = vunpack.c.h.b16 %v839
    %v877 = vunpack.c.l.b16 %v840
    %v878 = vunpack.c.h.b16 %v840
    %v879 = vunpack.c.l.b16 %v841
    %v880 = vunpack.c.h.b16 %v841
    %v881 = vunpack.c.l.b16 %v842
    %v882 = vunpack.c.h.b16 %v842
    %v883 = vunpack.c.l.b16 %v843
    %v884 = vunpack.c.h.b16 %v843
    %v885 = vunpack.c.l.b16 %v844
    %v886 = vunpack.c.h.b16 %v844
    %v887 = vunpack.c.l.b16 %v845
    %v888 = vunpack.c.h.b16 %v845
    %v889 = vunpack.c.l.b16 %v846
    %v890 = vunpack.c.h.b16 %v846
    %v891 = vunpack.c.l.b16 %v847
    %v892 = vunpack.c.h.b16 %v847
    %v893 = vunpack.c.l.b16 %v848
    %v894 = vunpack.c.h.b16 %v848
    %v895 = vunpack.c.l.b16 %v849
    %v896 = vunpack.c.h.b16 %v849
    %v897 = vunpack.c.l.b16 %v850
    %v898 = vunpack.c.h.b16 %v850
    %v899 = vpack.c.b16 %v869, %v867
    %v900 = vpack.c.b16 %v870, %v868
    %v901 = vpack.c.b16 %v873, %v871
    %v902 = vpack.c.b16 %v874, %v872
    %v903 = vpack.c.b16 %v877, %v875
    %v904 = vpack.c.b16 %v878, %v876
    %v905 = vpack.c.b16 %v881, %v879
    %v906 = vpack.c.b16 %v882, %v880
    %v907 = vpack.c.b16 %v885, %v883
    %v908 = vpack.c.b16 %v886, %v884
    %v909 = vpack.c.b16 %v889, %v887
    %v910 = vpack.c.b16 %v890, %v888
    %v911 = vpack.c.b16 %v893, %v891
    %v912 = vpack.c.b16 %v894, %v892
    %v913 = vpack.c.b16 %v897, %v895
    %v914 = vpack.c.b16 %v898, %v896
    %931 = vmatprep.subr.bf16.mxu0 %v914
    %932 = vmatpush1.bf16.msra.mxu0 %v913
    %933 = vmatprep.subr.bf16.mxu0 %v912
    %934 = vmatpush1.bf16.msra.mxu0 %v911
    %935 = vmatprep.subr.bf16.mxu0 %v910
    %936 = vmatpush1.bf16.msra.mxu0 %v909
    %937 = vmatprep.subr.bf16.mxu0 %v908
    %938 = vmatpush1.bf16.msra.mxu0 %v907
    %939 = vmatprep.subr.bf16.mxu0 %v906
    %940 = vmatpush1.bf16.msra.mxu0 %v905
    %941 = vmatprep.subr.bf16.mxu0 %v904
    %942 = vmatpush1.bf16.msra.mxu0 %v903
    %943 = vmatprep.subr.bf16.mxu0 %v902
    %944 = vmatpush1.bf16.msra.mxu0 %v901
    %945 = vmatprep.subr.bf16.mxu0 %v900
    %946 = vmatpush1.bf16.msra.mxu0 %v899
    %947 = vmatprep.subr.bf16.mxu0 0
    %948 = vmatpush2.bf16.msra.mxu0 0
    %949 = vmatprep.subr.bf16.mxu0 0
    %950 = vmatpush2.bf16.msra.mxu0 0
    %951 = vmatprep.subr.bf16.mxu0 0
    %952 = vmatpush2.bf16.msra.mxu0 0
    %953 = vmatprep.subr.bf16.mxu0 0
    %954 = vmatpush2.bf16.msra.mxu0 0
    %955 = vmatprep.subr.bf16.mxu0 0
    %956 = vmatpush2.bf16.msra.mxu0 0
    %957 = vmatprep.subr.bf16.mxu0 0
    %958 = vmatpush2.bf16.msra.mxu0 0
    %959 = vmatprep.subr.bf16.mxu0 0
    %960 = vmatpush2.bf16.msra.mxu0 0
    %961 = vmatprep.subr.bf16.mxu0 0
    %962 = vmatpush2.bf16.msra.mxu0 0
    %963 = vmatprep.mubr.bf16.mxu0 0
    %964 = vmatmul.mubr.bf16.gmra.mxu0 %v834
    %v965 = vpop.f32.mrf.mxu0
    %v966 = vadd.f32 %v381, %v965
    %v967 = vpop.f32.mrf.mxu0
    %v968 = vadd.f32 %v385, %v967
    %v969 = vpop.f32.mrf.mxu0
    %v970 = vpop.f32.mrf.mxu0
    %971 = vdwg.mxu0
    %v972 = vld [vmem:[#allocation2 + $0x10] sm:$0xff]
    %v973 = vld [vmem:[#allocation2 + $0x18] sm:$0xff]
    %974 = vmatprep.subr.bf16.mxu0 %v469
    %975 = vmatpush1.bf16.msra.mxu0 %v468
    %976 = vmatprep.subr.bf16.mxu0 %v467
    %977 = vmatpush1.bf16.msra.mxu0 %v466
    %978 = vmatprep.subr.bf16.mxu0 %v465
    %979 = vmatpush1.bf16.msra.mxu0 %v464
    %980 = vmatprep.subr.bf16.mxu0 %v463
    %981 = vmatpush1.bf16.msra.mxu0 %v462
    %982 = vmatprep.subr.bf16.mxu0 %v461
    %983 = vmatpush1.bf16.msra.mxu0 %v460
    %984 = vmatprep.subr.bf16.mxu0 %v459
    %985 = vmatpush1.bf16.msra.mxu0 %v458
    %986 = vmatprep.subr.bf16.mxu0 %v457
    %987 = vmatpush1.bf16.msra.mxu0 %v456
    %988 = vmatprep.subr.bf16.mxu0 %v455
    %989 = vmatpush1.bf16.msra.mxu0 %v454
    %990 = vmatprep.subr.bf16.mxu0 0
    %991 = vmatpush2.bf16.msra.mxu0 0
    %992 = vmatprep.subr.bf16.mxu0 0
    %993 = vmatpush2.bf16.msra.mxu0 0
    %994 = vmatprep.subr.bf16.mxu0 0
    %995 = vmatpush2.bf16.msra.mxu0 0
    %996 = vmatprep.subr.bf16.mxu0 0
    %997 = vmatpush2.bf16.msra.mxu0 0
    %998 = vmatprep.subr.bf16.mxu0 0
    %999 = vmatpush2.bf16.msra.mxu0 0
    %1000 = vmatprep.subr.bf16.mxu0 0
    %1001 = vmatpush2.bf16.msra.mxu0 0
    %1002 = vmatprep.subr.bf16.mxu0 0
    %1003 = vmatpush2.bf16.msra.mxu0 0
    %1004 = vmatprep.subr.bf16.mxu0 0
    %1005 = vmatpush2.bf16.msra.mxu0 0
    %1006 = vmatprep.mubr.bf16.mxu0 0
    %1007 = vmatmul.mubr.bf16.gmra.mxu0 %v543
    %v1008 = vpop.f32.mrf.mxu0
    %v1009 = vadd.f32 0.0, %v1008
    %v1010 = vpop.f32.mrf.mxu0
    %v1011 = vadd.f32 0.0, %v1010
    %v1012 = vpop.f32.mrf.mxu0
    %v1013 = vpop.f32.mrf.mxu0
    %1014 = vdwg.mxu0
    %v1015 = vadd.f32 %v972, %v1009
    %v1016 = vxor.u32 %v1015, 2147483648
    %v1017 = vmul.f32 %v1016, 1.442695
    %v1018 = vpow.pop %v1017
    %v1019 = vadd.f32 %v1018, 1.0
    %v1020 = vrcp.pop %v1019
    %v1021 = vmul.f32 1.0, %v1020
    %1022 = vrot.lane.b32.xlu0 %v1021, 64
    %v1023 = vpop.permute.xlu0 %1022
    %v1024 = vadd.f32 %v1011, %v348
    %v1025 = vmul.f32 %v1021, %v1024
    %v1026 = vadd.f32 %v973, %v1025
    %v1027 = vtanh.pop %v1026
    %v1028 = vsub.f32 %v542, %v1027
    %v1029 = vmul.f32 %v1023, %v1028
    %v1030 = vadd.f32 %v1027, %v1029
    %v1031 = vpack.c.bf16 %v1030, %v1030
    %1032 = vmatprep.subr.bf16.mxu0 %v623
    %1033 = vmatpush1.bf16.msra.mxu0 %v622
    %1034 = vmatprep.subr.bf16.mxu0 %v621
    %1035 = vmatpush1.bf16.msra.mxu0 %v620
    %1036 = vmatprep.subr.bf16.mxu0 %v619
    %1037 = vmatpush1.bf16.msra.mxu0 %v618
    %1038 = vmatprep.subr.bf16.mxu0 %v617
    %1039 = vmatpush1.bf16.msra.mxu0 %v616
    %1040 = vmatprep.subr.bf16.mxu0 %v615
    %1041 = vmatpush1.bf16.msra.mxu0 %v614
    %1042 = vmatprep.subr.bf16.mxu0 %v613
    %1043 = vmatpush1.bf16.msra.mxu0 %v612
    %1044 = vmatprep.subr.bf16.mxu0 %v611
    %1045 = vmatpush1.bf16.msra.mxu0 %v610
    %1046 = vmatprep.subr.bf16.mxu0 %v609
    %1047 = vmatpush1.bf16.msra.mxu0 %v608
    %1048 = vmatprep.subr.bf16.mxu0 0
    %1049 = vmatpush2.bf16.msra.mxu0 0
    %1050 = vmatprep.subr.bf16.mxu0 0
    %1051 = vmatpush2.bf16.msra.mxu0 0
    %1052 = vmatprep.subr.bf16.mxu0 0
    %1053 = vmatpush2.bf16.msra.mxu0 0
    %1054 = vmatprep.subr.bf16.mxu0 0
    %1055 = vmatpush2.bf16.msra.mxu0 0
    %1056 = vmatprep.subr.bf16.mxu0 0
    %1057 = vmatpush2.bf16.msra.mxu0 0
    %1058 = vmatprep.subr.bf16.mxu0 0
    %1059 = vmatpush2.bf16.msra.mxu0 0
    %1060 = vmatprep.subr.bf16.mxu0 0
    %1061 = vmatpush2.bf16.msra.mxu0 0
    %1062 = vmatprep.subr.bf16.mxu0 0
    %1063 = vmatpush2.bf16.msra.mxu0 0
    %1064 = vmatprep.mubr.bf16.mxu0 0
    %1065 = vmatmul.mubr.bf16.gmra.mxu0 %v1031
    %v1066 = vpop.f32.mrf.mxu0
    %v1067 = vadd.f32 %v369, %v1066
    %v1068 = vpop.f32.mrf.mxu0
    %v1069 = vadd.f32 %v373, %v1068
    %v1070 = vpop.f32.mrf.mxu0
    %v1071 = vpop.f32.mrf.mxu0
    %1072 = vdwg.mxu0
    %v1073 = vld [vmem:[#allocation12] sm:$0xff]
    %v1074 = vld [vmem:[#allocation12 + $0x8] sm:$0xff]
    %v1075 = vld [vmem:[#allocation12 + $0x10] sm:$0xff]
    %v1076 = vld [vmem:[#allocation12 + $0x18] sm:$0xff]
    %v1077 = vld [vmem:[#allocation12 + $0x20] sm:$0xff]
    %v1078 = vld [vmem:[#allocation12 + $0x28] sm:$0xff]
    %v1079 = vld [vmem:[#allocation12 + $0x30] sm:$0xff]
    %v1080 = vld [vmem:[#allocation12 + $0x38] sm:$0xff]
    %v1081 = vld [vmem:[#allocation12 + $0x40] sm:$0xff]
    %v1082 = vld [vmem:[#allocation12 + $0x48] sm:$0xff]
    %v1083 = vld [vmem:[#allocation12 + $0x50] sm:$0xff]
    %v1084 = vld [vmem:[#allocation12 + $0x58] sm:$0xff]
    %v1085 = vld [vmem:[#allocation12 + $0x60] sm:$0xff]
    %v1086 = vld [vmem:[#allocation12 + $0x68] sm:$0xff]
    %v1087 = vld [vmem:[#allocation12 + $0x70] sm:$0xff]
    %v1088 = vld [vmem:[#allocation12 + $0x78] sm:$0xff]
    %v1105 = vunpack.c.l.b16 %v1073
    %v1106 = vunpack.c.h.b16 %v1073
    %v1107 = vunpack.c.l.b16 %v1074
    %v1108 = vunpack.c.h.b16 %v1074
    %v1109 = vunpack.c.l.b16 %v1075
    %v1110 = vunpack.c.h.b16 %v1075
    %v1111 = vunpack.c.l.b16 %v1076
    %v1112 = vunpack.c.h.b16 %v1076
    %v1113 = vunpack.c.l.b16 %v1077
    %v1114 = vunpack.c.h.b16 %v1077
    %v1115 = vunpack.c.l.b16 %v1078
    %v1116 = vunpack.c.h.b16 %v1078
    %v1117 = vunpack.c.l.b16 %v1079
    %v1118 = vunpack.c.h.b16 %v1079
    %v1119 = vunpack.c.l.b16 %v1080
    %v1120 = vunpack.c.h.b16 %v1080
    %v1121 = vunpack.c.l.b16 %v1081
    %v1122 = vunpack.c.h.b16 %v1081
    %v1123 = vunpack.c.l.b16 %v1082
    %v1124 = vunpack.c.h.b16 %v1082
    %v1125 = vunpack.c.l.b16 %v1083
    %v1126 = vunpack.c.h.b16 %v1083
    %v1127 = vunpack.c.l.b16 %v1084
    %v1128 = vunpack.c.h.b16 %v1084
    %v1129 = vunpack.c.l.b16 %v1085
    %v1130 = vunpack.c.h.b16 %v1085
    %v1131 = vunpack.c.l.b16 %v1086
    %v1132 = vunpack.c.h.b16 %v1086
    %v1133 = vunpack.c.l.b16 %v1087
    %v1134 = vunpack.c.h.b16 %v1087
    %v1135 = vunpack.c.l.b16 %v1088
    %v1136 = vunpack.c.h.b16 %v1088
    %v1137 = vpack.c.b16 %v1107, %v1105
    %v1138 = vpack.c.b16 %v1108, %v1106
    %v1139 = vpack.c.b16 %v1111, %v1109
    %v1140 = vpack.c.b16 %v1112, %v1110
    %v1141 = vpack.c.b16 %v1115, %v1113
    %v1142 = vpack.c.b16 %v1116, %v1114
    %v1143 = vpack.c.b16 %v1119, %v1117
    %v1144 = vpack.c.b16 %v1120, %v1118
    %v1145 = vpack.c.b16 %v1123, %v1121
    %v1146 = vpack.c.b16 %v1124, %v1122
    %v1147 = vpack.c.b16 %v1127, %v1125
    %v1148 = vpack.c.b16 %v1128, %v1126
    %v1149 = vpack.c.b16 %v1131, %v1129
    %v1150 = vpack.c.b16 %v1132, %v1130
    %v1151 = vpack.c.b16 %v1135, %v1133
    %v1152 = vpack.c.b16 %v1136, %v1134
    %1169 = vmatprep.subr.bf16.mxu0 %v1152
    %1170 = vmatpush1.bf16.msra.mxu0 %v1151
    %1171 = vmatprep.subr.bf16.mxu0 %v1150
    %1172 = vmatpush1.bf16.msra.mxu0 %v1149
    %1173 = vmatprep.subr.bf16.mxu0 %v1148
    %1174 = vmatpush1.bf16.msra.mxu0 %v1147
    %1175 = vmatprep.subr.bf16.mxu0 %v1146
    %1176 = vmatpush1.bf16.msra.mxu0 %v1145
    %1177 = vmatprep.subr.bf16.mxu0 %v1144
    %1178 = vmatpush1.bf16.msra.mxu0 %v1143
    %1179 = vmatprep.subr.bf16.mxu0 %v1142
    %1180 = vmatpush1.bf16.msra.mxu0 %v1141
    %1181 = vmatprep.subr.bf16.mxu0 %v1140
    %1182 = vmatpush1.bf16.msra.mxu0 %v1139
    %1183 = vmatprep.subr.bf16.mxu0 %v1138
    %1184 = vmatpush1.bf16.msra.mxu0 %v1137
    %1185 = vmatprep.subr.bf16.mxu0 0
    %1186 = vmatpush2.bf16.msra.mxu0 0
    %1187 = vmatprep.subr.bf16.mxu0 0
    %1188 = vmatpush2.bf16.msra.mxu0 0
    %1189 = vmatprep.subr.bf16.mxu0 0
    %1190 = vmatpush2.bf16.msra.mxu0 0
    %1191 = vmatprep.subr.bf16.mxu0 0
    %1192 = vmatpush2.bf16.msra.mxu0 0
    %1193 = vmatprep.subr.bf16.mxu0 0
    %1194 = vmatpush2.bf16.msra.mxu0 0
    %1195 = vmatprep.subr.bf16.mxu0 0
    %1196 = vmatpush2.bf16.msra.mxu0 0
    %1197 = vmatprep.subr.bf16.mxu0 0
    %1198 = vmatpush2.bf16.msra.mxu0 0
    %1199 = vmatprep.subr.bf16.mxu0 0
    %1200 = vmatpush2.bf16.msra.mxu0 0
    %1201 = vmatprep.mubr.bf16.mxu0 0
    %1202 = vmatmul.mubr.bf16.gmra.mxu0 0
    %v1203 = vpop.f32.mrf.mxu0
    %v1204 = vadd.f32 0.0, %v1203
    %v1205 = vpop.f32.mrf.mxu0
    %v1206 = vadd.f32 0.0, %v1205
    %v1207 = vpop.f32.mrf.mxu0
    %v1208 = vpop.f32.mrf.mxu0
    %1209 = vdwg.mxu0
    %v1210 = vadd.f32 %v966, %v1204
    %v1211 = vxor.u32 %v1210, 2147483648
    %v1212 = vmul.f32 %v1211, 1.442695
    %v1213 = vpow.pop %v1212
    %v1214 = vadd.f32 %v1213, 1.0
    %v1215 = vrcp.pop %v1214
    %v1216 = vmul.f32 1.0, %v1215
    %1217 = vrot.lane.b32.xlu0 %v1216, 64
    %v1218 = vpop.permute.xlu0 %1217
    %v1219 = vadd.f32 %v1206, %v362
    %v1220 = vmul.f32 %v1216, %v1219
    %v1221 = vadd.f32 %v968, %v1220
    %v1222 = vtanh.pop %v1221
    %v1223 = vsub.f32 0.0, %v1222
    %v1224 = vmul.f32 %v1218, %v1223
    %v1225 = vadd.f32 %v1222, %v1224
    %1226 = vmatprep.subr.bf16.mxu0 %v760
    %1227 = vmatpush1.bf16.msra.mxu0 %v759
    %1228 = vmatprep.subr.bf16.mxu0 %v758
    %1229 = vmatpush1.bf16.msra.mxu0 %v757
    %1230 = vmatprep.subr.bf16.mxu0 %v756
    %1231 = vmatpush1.bf16.msra.mxu0 %v755
    %1232 = vmatprep.subr.bf16.mxu0 %v754
    %1233 = vmatpush1.bf16.msra.mxu0 %v753
    %1234 = vmatprep.subr.bf16.mxu0 %v752
    %1235 = vmatpush1.bf16.msra.mxu0 %v751
    %1236 = vmatprep.subr.bf16.mxu0 %v750
    %1237 = vmatpush1.bf16.msra.mxu0 %v749
    %1238 = vmatprep.subr.bf16.mxu0 %v748
    %1239 = vmatpush1.bf16.msra.mxu0 %v747
    %1240 = vmatprep.subr.bf16.mxu0 %v746
    %1241 = vmatpush1.bf16.msra.mxu0 %v745
    %1242 = vmatprep.subr.bf16.mxu0 0
    %1243 = vmatpush2.bf16.msra.mxu0 0
    %1244 = vmatprep.subr.bf16.mxu0 0
    %1245 = vmatpush2.bf16.msra.mxu0 0
    %1246 = vmatprep.subr.bf16.mxu0 0
    %1247 = vmatpush2.bf16.msra.mxu0 0
    %1248 = vmatprep.subr.bf16.mxu0 0
    %1249 = vmatpush2.bf16.msra.mxu0 0
    %1250 = vmatprep.subr.bf16.mxu0 0
    %1251 = vmatpush2.bf16.msra.mxu0 0
    %1252 = vmatprep.subr.bf16.mxu0 0
    %1253 = vmatpush2.bf16.msra.mxu0 0
    %1254 = vmatprep.subr.bf16.mxu0 0
    %1255 = vmatpush2.bf16.msra.mxu0 0
    %1256 = vmatprep.subr.bf16.mxu0 0
    %1257 = vmatpush2.bf16.msra.mxu0 0
    %1258 = vmatprep.mubr.bf16.mxu0 0
    %1259 = vmatmul.mubr.bf16.gmra.mxu0 %v834
    %v1260 = vpop.f32.mrf.mxu0
    %v1261 = vadd.f32 0.0, %v1260
    %v1262 = vpop.f32.mrf.mxu0
    %v1263 = vadd.f32 0.0, %v1262
    %v1264 = vpop.f32.mrf.mxu0
    %v1265 = vpop.f32.mrf.mxu0
    %1266 = vdwg.mxu0
    %v1267 = vadd.f32 %v1067, %v1261
    %v1268 = vxor.u32 %v1267, 2147483648
    %v1269 = vmul.f32 %v1268, 1.442695
    %v1270 = vpow.pop %v1269
    %v1271 = vadd.f32 %v1270, 1.0
    %v1272 = vrcp.pop %v1271
    %v1273 = vmul.f32 1.0, %v1272
    %1274 = vrot.lane.b32.xlu0 %v1273, 64
    %v1275 = vpop.permute.xlu0 %1274
    %v1276 = vadd.f32 %v1263, %v355
    %v1277 = vmul.f32 %v1273, %v1276
    %v1278 = vadd.f32 %v1069, %v1277
    %v1279 = vtanh.pop %v1278
    %v1280 = vsub.f32 %v833, %v1279
    %v1281 = vmul.f32 %v1275, %v1280
    %v1282 = vadd.f32 %v1279, %v1281
    %v1283 = vpack.c.bf16 %v1282, %v1282
    %1284 = vmatprep.subr.bf16.mxu0 %v914
    %1285 = vmatpush1.bf16.msra.mxu0 %v913
    %1286 = vmatprep.subr.bf16.mxu0 %v912
    %1287 = vmatpush1.bf16.msra.mxu0 %v911
    %1288 = vmatprep.subr.bf16.mxu0 %v910
    %1289 = vmatpush1.bf16.msra.mxu0 %v909
    %1290 = vmatprep.subr.bf16.mxu0 %v908
    %1291 = vmatpush1.bf16.msra.mxu0 %v907
    %1292 = vmatprep.subr.bf16.mxu0 %v906
    %1293 = vmatpush1.bf16.msra.mxu0 %v905
    %1294 = vmatprep.subr.bf16.mxu0 %v904
    %1295 = vmatpush1.bf16.msra.mxu0 %v903
    %1296 = vmatprep.subr.bf16.mxu0 %v902
    %1297 = vmatpush1.bf16.msra.mxu0 %v901
    %1298 = vmatprep.subr.bf16.mxu0 %v900
    %1299 = vmatpush1.bf16.msra.mxu0 %v899
    %1300 = vmatprep.subr.bf16.mxu0 0
    %1301 = vmatpush2.bf16.msra.mxu0 0
    %1302 = vmatprep.subr.bf16.mxu0 0
    %1303 = vmatpush2.bf16.msra.mxu0 0
    %1304 = vmatprep.subr.bf16.mxu0 0
    %1305 = vmatpush2.bf16.msra.mxu0 0
    %1306 = vmatprep.subr.bf16.mxu0 0
    %1307 = vmatpush2.bf16.msra.mxu0 0
    %1308 = vmatprep.subr.bf16.mxu0 0
    %1309 = vmatpush2.bf16.msra.mxu0 0
    %1310 = vmatprep.subr.bf16.mxu0 0
    %1311 = vmatpush2.bf16.msra.mxu0 0
    %1312 = vmatprep.subr.bf16.mxu0 0
    %1313 = vmatpush2.bf16.msra.mxu0 0
    %1314 = vmatprep.subr.bf16.mxu0 0
    %1315 = vmatpush2.bf16.msra.mxu0 0
    %1316 = vmatprep.mubr.bf16.mxu0 0
    %1317 = vmatmul.mubr.bf16.gmra.mxu0 %v1283
    %v1318 = vpop.f32.mrf.mxu0
    %v1319 = vadd.f32 %v381, %v1318
    %v1320 = vpop.f32.mrf.mxu0
    %v1321 = vadd.f32 %v385, %v1320
    %v1322 = vpop.f32.mrf.mxu0
    %v1323 = vpop.f32.mrf.mxu0
    %1324 = vdwg.mxu0
    %v1325 = vld [vmem:[#allocation2 + $0x20] sm:$0xff]
    %v1326 = vld [vmem:[#allocation2 + $0x28] sm:$0xff]
    %1327 = vmatprep.subr.bf16.mxu0 %v469
    %1328 = vmatpush1.bf16.msra.mxu0 %v468
    %1329 = vmatprep.subr.bf16.mxu0 %v467
    %1330 = vmatpush1.bf16.msra.mxu0 %v466
    %1331 = vmatprep.subr.bf16.mxu0 %v465
    %1332 = vmatpush1.bf16.msra.mxu0 %v464
    %1333 = vmatprep.subr.bf16.mxu0 %v463
    %1334 = vmatpush1.bf16.msra.mxu0 %v462
    %1335 = vmatprep.subr.bf16.mxu0 %v461
    %1336 = vmatpush1.bf16.msra.mxu0 %v460
    %1337 = vmatprep.subr.bf16.mxu0 %v459
    %1338 = vmatpush1.bf16.msra.mxu0 %v458
    %1339 = vmatprep.subr.bf16.mxu0 %v457
    %1340 = vmatpush1.bf16.msra.mxu0 %v456
    %1341 = vmatprep.subr.bf16.mxu0 %v455
    %1342 = vmatpush1.bf16.msra.mxu0 %v454
    %1343 = vmatprep.subr.bf16.mxu0 0
    %1344 = vmatpush2.bf16.msra.mxu0 0
    %1345 = vmatprep.subr.bf16.mxu0 0
    %1346 = vmatpush2.bf16.msra.mxu0 0
    %1347 = vmatprep.subr.bf16.mxu0 0
    %1348 = vmatpush2.bf16.msra.mxu0 0
    %1349 = vmatprep.subr.bf16.mxu0 0
    %1350 = vmatpush2.bf16.msra.mxu0 0
    %1351 = vmatprep.subr.bf16.mxu0 0
    %1352 = vmatpush2.bf16.msra.mxu0 0
    %1353 = vmatprep.subr.bf16.mxu0 0
    %1354 = vmatpush2.bf16.msra.mxu0 0
    %1355 = vmatprep.subr.bf16.mxu0 0
    %1356 = vmatpush2.bf16.msra.mxu0 0
    %1357 = vmatprep.subr.bf16.mxu0 0
    %1358 = vmatpush2.bf16.msra.mxu0 0
    %1359 = vmatprep.mubr.bf16.mxu0 0
    %1360 = vmatmul.mubr.bf16.gmra.mxu0 %v1031
    %v1361 = vpop.f32.mrf.mxu0
    %v1362 = vadd.f32 0.0, %v1361
    %v1363 = vpop.f32.mrf.mxu0
    %v1364 = vadd.f32 0.0, %v1363
    %v1365 = vpop.f32.mrf.mxu0
    %v1366 = vpop.f32.mrf.mxu0
    %1367 = vdwg.mxu0
    %v1368 = vadd.f32 %v1325, %v1362
    %v1369 = vxor.u32 %v1368, 2147483648
    %v1370 = vmul.f32 %v1369, 1.442695
    %v1371 = vpow.pop %v1370
    %v1372 = vadd.f32 %v1371, 1.0
    %v1373 = vrcp.pop %v1372
    %v1374 = vmul.f32 1.0, %v1373
    %1375 = vrot.lane.b32.xlu0 %v1374, 64
    %v1376 = vpop.permute.xlu0 %1375
    %v1377 = vadd.f32 %v1364, %v348
    %v1378 = vmul.f32 %v1374, %v1377
    %v1379 = vadd.f32 %v1326, %v1378
    %v1380 = vtanh.pop %v1379
    %v1381 = vsub.f32 %v1030, %v1380
    %v1382 = vmul.f32 %v1376, %v1381
    %v1383 = vadd.f32 %v1380, %v1382
    %v1384 = vpack.c.bf16 %v1383, %v1383
    %1385 = vmatprep.subr.bf16.mxu0 %v623
    %1386 = vmatpush1.bf16.msra.mxu0 %v622
    %1387 = vmatprep.subr.bf16.mxu0 %v621
    %1388 = vmatpush1.bf16.msra.mxu0 %v620
    %1389 = vmatprep.subr.bf16.mxu0 %v619
    %1390 = vmatpush1.bf16.msra.mxu0 %v618
    %1391 = vmatprep.subr.bf16.mxu0 %v617
    %1392 = vmatpush1.bf16.msra.mxu0 %v616
    %1393 = vmatprep.subr.bf16.mxu0 %v615
    %1394 = vmatpush1.bf16.msra.mxu0 %v614
    %1395 = vmatprep.subr.bf16.mxu0 %v613
    %1396 = vmatpush1.bf16.msra.mxu0 %v612
    %1397 = vmatprep.subr.bf16.mxu0 %v611
    %1398 = vmatpush1.bf16.msra.mxu0 %v610
    %1399 = vmatprep.subr.bf16.mxu0 %v609
    %1400 = vmatpush1.bf16.msra.mxu0 %v608
    %1401 = vmatprep.subr.bf16.mxu0 0
    %1402 = vmatpush2.bf16.msra.mxu0 0
    %1403 = vmatprep.subr.bf16.mxu0 0
    %1404 = vmatpush2.bf16.msra.mxu0 0
    %1405 = vmatprep.subr.bf16.mxu0 0
    %1406 = vmatpush2.bf16.msra.mxu0 0
    %1407 = vmatprep.subr.bf16.mxu0 0
    %1408 = vmatpush2.bf16.msra.mxu0 0
    %1409 = vmatprep.subr.bf16.mxu0 0
    %1410 = vmatpush2.bf16.msra.mxu0 0
    %1411 = vmatprep.subr.bf16.mxu0 0
    %1412 = vmatpush2.bf16.msra.mxu0 0
    %1413 = vmatprep.subr.bf16.mxu0 0
    %1414 = vmatpush2.bf16.msra.mxu0 0
    %1415 = vmatprep.subr.bf16.mxu0 0
    %1416 = vmatpush2.bf16.msra.mxu0 0
    %1417 = vmatprep.mubr.bf16.mxu0 0
    %1418 = vmatmul.mubr.bf16.gmra.mxu0 %v1384
    %v1419 = vpop.f32.mrf.mxu0
    %v1420 = vadd.f32 %v369, %v1419
    %v1421 = vpop.f32.mrf.mxu0
    %v1422 = vadd.f32 %v373, %v1421
    %v1423 = vpop.f32.mrf.mxu0
    %v1424 = vpop.f32.mrf.mxu0
    %1425 = vdwg.mxu0
    %v1426 = vpack.c.bf16 %v1225, %v1225
    %1427 = vmatprep.subr.bf16.mxu0 %v1152
    %1428 = vmatpush1.bf16.msra.mxu0 %v1151
    %1429 = vmatprep.subr.bf16.mxu0 %v1150
    %1430 = vmatpush1.bf16.msra.mxu0 %v1149
    %1431 = vmatprep.subr.bf16.mxu0 %v1148
    %1432 = vmatpush1.bf16.msra.mxu0 %v1147
    %1433 = vmatprep.subr.bf16.mxu0 %v1146
    %1434 = vmatpush1.bf16.msra.mxu0 %v1145
    %1435 = vmatprep.subr.bf16.mxu0 %v1144
    %1436 = vmatpush1.bf16.msra.mxu0 %v1143
    %1437 = vmatprep.subr.bf16.mxu0 %v1142
    %1438 = vmatpush1.bf16.msra.mxu0 %v1141
    %1439 = vmatprep.subr.bf16.mxu0 %v1140
    %1440 = vmatpush1.bf16.msra.mxu0 %v1139
    %1441 = vmatprep.subr.bf16.mxu0 %v1138
    %1442 = vmatpush1.bf16.msra.mxu0 %v1137
    %1443 = vmatprep.subr.bf16.mxu0 0
    %1444 = vmatpush2.bf16.msra.mxu0 0
    %1445 = vmatprep.subr.bf16.mxu0 0
    %1446 = vmatpush2.bf16.msra.mxu0 0
    %1447 = vmatprep.subr.bf16.mxu0 0
    %1448 = vmatpush2.bf16.msra.mxu0 0
    %1449 = vmatprep.subr.bf16.mxu0 0
    %1450 = vmatpush2.bf16.msra.mxu0 0
    %1451 = vmatprep.subr.bf16.mxu0 0
    %1452 = vmatpush2.bf16.msra.mxu0 0
    %1453 = vmatprep.subr.bf16.mxu0 0
    %1454 = vmatpush2.bf16.msra.mxu0 0
    %1455 = vmatprep.subr.bf16.mxu0 0
    %1456 = vmatpush2.bf16.msra.mxu0 0
    %1457 = vmatprep.subr.bf16.mxu0 0
    %1458 = vmatpush2.bf16.msra.mxu0 0
    %1459 = vmatprep.mubr.bf16.mxu0 0
    %1460 = vmatmul.mubr.bf16.gmra.mxu0 %v1426
    %v1461 = vpop.f32.mrf.mxu0
    %v1462 = vadd.f32 0.0, %v1461
    %v1463 = vpop.f32.mrf.mxu0
    %v1464 = vadd.f32 0.0, %v1463
    %v1465 = vpop.f32.mrf.mxu0
    %v1466 = vpop.f32.mrf.mxu0
    %1467 = vdwg.mxu0
    %v1468 = vadd.f32 %v1319, %v1462
    %v1469 = vxor.u32 %v1468, 2147483648
    %v1470 = vmul.f32 %v1469, 1.442695
    %v1471 = vpow.pop %v1470
    %v1472 = vadd.f32 %v1471, 1.0
    %v1473 = vrcp.pop %v1472
    %v1474 = vmul.f32 1.0, %v1473
    %1475 = vrot.lane.b32.xlu0 %v1474, 64
    %v1476 = vpop.permute.xlu0 %1475
    %v1477 = vadd.f32 %v1464, %v362
    %v1478 = vmul.f32 %v1474, %v1477
    %v1479 = vadd.f32 %v1321, %v1478
    %v1480 = vtanh.pop %v1479
    %v1481 = vsub.f32 %v1225, %v1480
    %v1482 = vmul.f32 %v1476, %v1481
    %v1483 = vadd.f32 %v1480, %v1482
    %1484 = vmatprep.subr.bf16.mxu0 %v760
    %1485 = vmatpush1.bf16.msra.mxu0 %v759
    %1486 = vmatprep.subr.bf16.mxu0 %v758
    %1487 = vmatpush1.bf16.msra.mxu0 %v757
    %1488 = vmatprep.subr.bf16.mxu0 %v756
    %1489 = vmatpush1.bf16.msra.mxu0 %v755
    %1490 = vmatprep.subr.bf16.mxu0 %v754
    %1491 = vmatpush1.bf16.msra.mxu0 %v753
    %1492 = vmatprep.subr.bf16.mxu0 %v752
    %1493 = vmatpush1.bf16.msra.mxu0 %v751
    %1494 = vmatprep.subr.bf16.mxu0 %v750
    %1495 = vmatpush1.bf16.msra.mxu0 %v749
    %1496 = vmatprep.subr.bf16.mxu0 %v748
    %1497 = vmatpush1.bf16.msra.mxu0 %v747
    %1498 = vmatprep.subr.bf16.mxu0 %v746
    %1499 = vmatpush1.bf16.msra.mxu0 %v745
    %1500 = vmatprep.subr.bf16.mxu0 0
    %1501 = vmatpush2.bf16.msra.mxu0 0
    %1502 = vmatprep.subr.bf16.mxu0 0
    %1503 = vmatpush2.bf16.msra.mxu0 0
    %1504 = vmatprep.subr.bf16.mxu0 0
    %1505 = vmatpush2.bf16.msra.mxu0 0
    %1506 = vmatprep.subr.bf16.mxu0 0
    %1507 = vmatpush2.bf16.msra.mxu0 0
    %1508 = vmatprep.subr.bf16.mxu0 0
    %1509 = vmatpush2.bf16.msra.mxu0 0
    %1510 = vmatprep.subr.bf16.mxu0 0
    %1511 = vmatpush2.bf16.msra.mxu0 0
    %1512 = vmatprep.subr.bf16.mxu0 0
    %1513 = vmatpush2.bf16.msra.mxu0 0
    %1514 = vmatprep.subr.bf16.mxu0 0
    %1515 = vmatpush2.bf16.msra.mxu0 0
    %1516 = vmatprep.mubr.bf16.mxu0 0
    %1517 = vmatmul.mubr.bf16.gmra.mxu0 %v1283
    %v1518 = vpop.f32.mrf.mxu0
    %v1519 = vadd.f32 0.0, %v1518
    %v1520 = vpop.f32.mrf.mxu0
    %v1521 = vadd.f32 0.0, %v1520
    %v1522 = vpop.f32.mrf.mxu0
    %v1523 = vpop.f32.mrf.mxu0
    %1524 = vdwg.mxu0
    %v1525 = vadd.f32 %v1420, %v1519
    %v1526 = vxor.u32 %v1525, 2147483648
    %v1527 = vmul.f32 %v1526, 1.442695
    %v1528 = vpow.pop %v1527
    %v1529 = vadd.f32 %v1528, 1.0
    %v1530 = vrcp.pop %v1529
    %v1531 = vmul.f32 1.0, %v1530
    %1532 = vrot.lane.b32.xlu0 %v1531, 64
    %v1533 = vpop.permute.xlu0 %1532
    %v1534 = vadd.f32 %v1521, %v355
    %v1535 = vmul.f32 %v1531, %v1534
    %v1536 = vadd.f32 %v1422, %v1535
    %v1537 = vtanh.pop %v1536
    %v1538 = vsub.f32 %v1282, %v1537
    %v1539 = vmul.f32 %v1533, %v1538
    %v1540 = vadd.f32 %v1537, %v1539
    %v1541 = vpack.c.bf16 %v1540, %v1540
    %1542 = vmatprep.subr.bf16.mxu0 %v914
    %1543 = vmatpush1.bf16.msra.mxu0 %v913
    %1544 = vmatprep.subr.bf16.mxu0 %v912
    %1545 = vmatpush1.bf16.msra.mxu0 %v911
    %1546 = vmatprep.subr.bf16.mxu0 %v910
    %1547 = vmatpush1.bf16.msra.mxu0 %v909
    %1548 = vmatprep.subr.bf16.mxu0 %v908
    %1549 = vmatpush1.bf16.msra.mxu0 %v907
    %1550 = vmatprep.subr.bf16.mxu0 %v906
    %1551 = vmatpush1.bf16.msra.mxu0 %v905
    %1552 = vmatprep.subr.bf16.mxu0 %v904
    %1553 = vmatpush1.bf16.msra.mxu0 %v903
    %1554 = vmatprep.subr.bf16.mxu0 %v902
    %1555 = vmatpush1.bf16.msra.mxu0 %v901
    %1556 = vmatprep.subr.bf16.mxu0 %v900
    %1557 = vmatpush1.bf16.msra.mxu0 %v899
    %1558 = vmatprep.subr.bf16.mxu0 0
    %1559 = vmatpush2.bf16.msra.mxu0 0
    %1560 = vmatprep.subr.bf16.mxu0 0
    %1561 = vmatpush2.bf16.msra.mxu0 0
    %1562 = vmatprep.subr.bf16.mxu0 0
    %1563 = vmatpush2.bf16.msra.mxu0 0
    %1564 = vmatprep.subr.bf16.mxu0 0
    %1565 = vmatpush2.bf16.msra.mxu0 0
    %1566 = vmatprep.subr.bf16.mxu0 0
    %1567 = vmatpush2.bf16.msra.mxu0 0
    %1568 = vmatprep.subr.bf16.mxu0 0
    %1569 = vmatpush2.bf16.msra.mxu0 0
    %1570 = vmatprep.subr.bf16.mxu0 0
    %1571 = vmatpush2.bf16.msra.mxu0 0
    %1572 = vmatprep.subr.bf16.mxu0 0
    %1573 = vmatpush2.bf16.msra.mxu0 0
    %1574 = vmatprep.mubr.bf16.mxu0 0
    %1575 = vmatmul.mubr.bf16.gmra.mxu0 %v1541
    %v1576 = vpop.f32.mrf.mxu0
    %v1577 = vadd.f32 %v381, %v1576
    %v1578 = vpop.f32.mrf.mxu0
    %v1579 = vadd.f32 %v385, %v1578
    %v1580 = vpop.f32.mrf.mxu0
    %v1581 = vpop.f32.mrf.mxu0
    %1582 = vdwg.mxu0
    %v1583 = vld [vmem:[#allocation2 + $0x30] sm:$0xff]
    %v1584 = vld [vmem:[#allocation2 + $0x38] sm:$0xff]
    %1585 = vmatprep.subr.bf16.mxu0 %v469
    %1586 = vmatpush1.bf16.msra.mxu0 %v468
    %1587 = vmatprep.subr.bf16.mxu0 %v467
    %1588 = vmatpush1.bf16.msra.mxu0 %v466
    %1589 = vmatprep.subr.bf16.mxu0 %v465
    %1590 = vmatpush1.bf16.msra.mxu0 %v464
    %1591 = vmatprep.subr.bf16.mxu0 %v463
    %1592 = vmatpush1.bf16.msra.mxu0 %v462
    %1593 = vmatprep.subr.bf16.mxu0 %v461
    %1594 = vmatpush1.bf16.msra.mxu0 %v460
    %1595 = vmatprep.subr.bf16.mxu0 %v459
    %1596 = vmatpush1.bf16.msra.mxu0 %v458
    %1597 = vmatprep.subr.bf16.mxu0 %v457
    %1598 = vmatpush1.bf16.msra.mxu0 %v456
    %1599 = vmatprep.subr.bf16.mxu0 %v455
    %1600 = vmatpush1.bf16.msra.mxu0 %v454
    %1601 = vmatprep.subr.bf16.mxu0 0
    %1602 = vmatpush2.bf16.msra.mxu0 0
    %1603 = vmatprep.subr.bf16.mxu0 0
    %1604 = vmatpush2.bf16.msra.mxu0 0
    %1605 = vmatprep.subr.bf16.mxu0 0
    %1606 = vmatpush2.bf16.msra.mxu0 0
    %1607 = vmatprep.subr.bf16.mxu0 0
    %1608 = vmatpush2.bf16.msra.mxu0 0
    %1609 = vmatprep.subr.bf16.mxu0 0
    %1610 = vmatpush2.bf16.msra.mxu0 0
    %1611 = vmatprep.subr.bf16.mxu0 0
    %1612 = vmatpush2.bf16.msra.mxu0 0
    %1613 = vmatprep.subr.bf16.mxu0 0
    %1614 = vmatpush2.bf16.msra.mxu0 0
    %1615 = vmatprep.subr.bf16.mxu0 0
    %1616 = vmatpush2.bf16.msra.mxu0 0
    %1617 = vmatprep.mubr.bf16.mxu0 0
    %1618 = vmatmul.mubr.bf16.gmra.mxu0 %v1384
    %v1619 = vpop.f32.mrf.mxu0
    %v1620 = vadd.f32 0.0, %v1619
    %v1621 = vpop.f32.mrf.mxu0
    %v1622 = vadd.f32 0.0, %v1621
    %v1623 = vpop.f32.mrf.mxu0
    %v1624 = vpop.f32.mrf.mxu0
    %1625 = vdwg.mxu0
    %v1626 = vadd.f32 %v1583, %v1620
    %v1627 = vxor.u32 %v1626, 2147483648
    %v1628 = vmul.f32 %v1627, 1.442695
    %v1629 = vpow.pop %v1628
    %v1630 = vadd.f32 %v1629, 1.0
    %v1631 = vrcp.pop %v1630
    %v1632 = vmul.f32 1.0, %v1631
    %1633 = vrot.lane.b32.xlu0 %v1632, 64
    %v1634 = vpop.permute.xlu0 %1633
    %v1635 = vadd.f32 %v1622, %v348
    %v1636 = vmul.f32 %v1632, %v1635
    %v1637 = vadd.f32 %v1584, %v1636
    %v1638 = vtanh.pop %v1637
    %v1639 = vsub.f32 %v1383, %v1638
    %v1640 = vmul.f32 %v1634, %v1639
    %v1641 = vadd.f32 %v1638, %v1640
    %v1642 = vpack.c.bf16 %v1641, %v1641
    %1643 = vmatprep.subr.bf16.mxu0 %v623
    %1644 = vmatpush1.bf16.msra.mxu0 %v622
    %1645 = vmatprep.subr.bf16.mxu0 %v621
    %1646 = vmatpush1.bf16.msra.mxu0 %v620
    %1647 = vmatprep.subr.bf16.mxu0 %v619
    %1648 = vmatpush1.bf16.msra.mxu0 %v618
    %1649 = vmatprep.subr.bf16.mxu0 %v617
    %1650 = vmatpush1.bf16.msra.mxu0 %v616
    %1651 = vmatprep.subr.bf16.mxu0 %v615
    %1652 = vmatpush1.bf16.msra.mxu0 %v614
    %1653 = vmatprep.subr.bf16.mxu0 %v613
    %1654 = vmatpush1.bf16.msra.mxu0 %v612
    %1655 = vmatprep.subr.bf16.mxu0 %v611
    %1656 = vmatpush1.bf16.msra.mxu0 %v610
    %1657 = vmatprep.subr.bf16.mxu0 %v609
    %1658 = vmatpush1.bf16.msra.mxu0 %v608
    %1659 = vmatprep.subr.bf16.mxu0 0
    %1660 = vmatpush2.bf16.msra.mxu0 0
    %1661 = vmatprep.subr.bf16.mxu0 0
    %1662 = vmatpush2.bf16.msra.mxu0 0
    %1663 = vmatprep.subr.bf16.mxu0 0
    %1664 = vmatpush2.bf16.msra.mxu0 0
    %1665 = vmatprep.subr.bf16.mxu0 0
    %1666 = vmatpush2.bf16.msra.mxu0 0
    %1667 = vmatprep.subr.bf16.mxu0 0
    %1668 = vmatpush2.bf16.msra.mxu0 0
    %1669 = vmatprep.subr.bf16.mxu0 0
    %1670 = vmatpush2.bf16.msra.mxu0 0
    %1671 = vmatprep.subr.bf16.mxu0 0
    %1672 = vmatpush2.bf16.msra.mxu0 0
    %1673 = vmatprep.subr.bf16.mxu0 0
    %1674 = vmatpush2.bf16.msra.mxu0 0
    %1675 = vmatprep.mubr.bf16.mxu0 0
    %1676 = vmatmul.mubr.bf16.gmra.mxu0 %v1642
    %v1677 = vpop.f32.mrf.mxu0
    %v1678 = vadd.f32 %v369, %v1677
    %v1679 = vpop.f32.mrf.mxu0
    %v1680 = vadd.f32 %v373, %v1679
    %v1681 = vpop.f32.mrf.mxu0
    %v1682 = vpop.f32.mrf.mxu0
    %1683 = vdwg.mxu0
    %v1684 = vpack.c.bf16 %v1483, %v1483
    %1685 = vmatprep.subr.bf16.mxu0 %v1152
    %1686 = vmatpush1.bf16.msra.mxu0 %v1151
    %1687 = vmatprep.subr.bf16.mxu0 %v1150
    %1688 = vmatpush1.bf16.msra.mxu0 %v1149
    %1689 = vmatprep.subr.bf16.mxu0 %v1148
    %1690 = vmatpush1.bf16.msra.mxu0 %v1147
    %1691 = vmatprep.subr.bf16.mxu0 %v1146
    %1692 = vmatpush1.bf16.msra.mxu0 %v1145
    %1693 = vmatprep.subr.bf16.mxu0 %v1144
    %1694 = vmatpush1.bf16.msra.mxu0 %v1143
    %1695 = vmatprep.subr.bf16.mxu0 %v1142
    %1696 = vmatpush1.bf16.msra.mxu0 %v1141
    %1697 = vmatprep.subr.bf16.mxu0 %v1140
    %1698 = vmatpush1.bf16.msra.mxu0 %v1139
    %1699 = vmatprep.subr.bf16.mxu0 %v1138
    %1700 = vmatpush1.bf16.msra.mxu0 %v1137
    %1701 = vmatprep.subr.bf16.mxu0 0
    %1702 = vmatpush2.bf16.msra.mxu0 0
    %1703 = vmatprep.subr.bf16.mxu0 0
    %1704 = vmatpush2.bf16.msra.mxu0 0
    %1705 = vmatprep.subr.bf16.mxu0 0
    %1706 = vmatpush2.bf16.msra.mxu0 0
    %1707 = vmatprep.subr.bf16.mxu0 0
    %1708 = vmatpush2.bf16.msra.mxu0 0
    %1709 = vmatprep.subr.bf16.mxu0 0
    %1710 = vmatpush2.bf16.msra.mxu0 0
    %1711 = vmatprep.subr.bf16.mxu0 0
    %1712 = vmatpush2.bf16.msra.mxu0 0
    %1713 = vmatprep.subr.bf16.mxu0 0
    %1714 = vmatpush2.bf16.msra.mxu0 0
    %1715 = vmatprep.subr.bf16.mxu0 0
    %1716 = vmatpush2.bf16.msra.mxu0 0
    %1717 = vmatprep.mubr.bf16.mxu0 0
    %1718 = vmatmul.mubr.bf16.gmra.mxu0 %v1684
    %v1719 = vpop.f32.mrf.mxu0
    %v1720 = vadd.f32 0.0, %v1719
    %v1721 = vpop.f32.mrf.mxu0
    %v1722 = vadd.f32 0.0, %v1721
    %v1723 = vpop.f32.mrf.mxu0
    %v1724 = vpop.f32.mrf.mxu0
    %1725 = vdwg.mxu0
    %v1726 = vadd.f32 %v1577, %v1720
    %v1727 = vxor.u32 %v1726, 2147483648
    %v1728 = vmul.f32 %v1727, 1.442695
    %v1729 = vpow.pop %v1728
    %v1730 = vadd.f32 %v1729, 1.0
    %v1731 = vrcp.pop %v1730
    %v1732 = vmul.f32 1.0, %v1731
    %1733 = vrot.lane.b32.xlu0 %v1732, 64
    %v1734 = vpop.permute.xlu0 %1733
    %v1735 = vadd.f32 %v1722, %v362
    %v1736 = vmul.f32 %v1732, %v1735
    %v1737 = vadd.f32 %v1579, %v1736
    %v1738 = vtanh.pop %v1737
    %v1739 = vsub.f32 %v1483, %v1738
    %v1740 = vmul.f32 %v1734, %v1739
    %v1741 = vadd.f32 %v1738, %v1740
    %1742 = vmatprep.subr.bf16.mxu0 %v760
    %1743 = vmatpush1.bf16.msra.mxu0 %v759
    %1744 = vmatprep.subr.bf16.mxu0 %v758
    %1745 = vmatpush1.bf16.msra.mxu0 %v757
    %1746 = vmatprep.subr.bf16.mxu0 %v756
    %1747 = vmatpush1.bf16.msra.mxu0 %v755
    %1748 = vmatprep.subr.bf16.mxu0 %v754
    %1749 = vmatpush1.bf16.msra.mxu0 %v753
    %1750 = vmatprep.subr.bf16.mxu0 %v752
    %1751 = vmatpush1.bf16.msra.mxu0 %v751
    %1752 = vmatprep.subr.bf16.mxu0 %v750
    %1753 = vmatpush1.bf16.msra.mxu0 %v749
    %1754 = vmatprep.subr.bf16.mxu0 %v748
    %1755 = vmatpush1.bf16.msra.mxu0 %v747
    %1756 = vmatprep.subr.bf16.mxu0 %v746
    %1757 = vmatpush1.bf16.msra.mxu0 %v745
    %1758 = vmatprep.subr.bf16.mxu0 0
    %1759 = vmatpush2.bf16.msra.mxu0 0
    %1760 = vmatprep.subr.bf16.mxu0 0
    %1761 = vmatpush2.bf16.msra.mxu0 0
    %1762 = vmatprep.subr.bf16.mxu0 0
    %1763 = vmatpush2.bf16.msra.mxu0 0
    %1764 = vmatprep.subr.bf16.mxu0 0
    %1765 = vmatpush2.bf16.msra.mxu0 0
    %1766 = vmatprep.subr.bf16.mxu0 0
    %1767 = vmatpush2.bf16.msra.mxu0 0
    %1768 = vmatprep.subr.bf16.mxu0 0
    %1769 = vmatpush2.bf16.msra.mxu0 0
    %1770 = vmatprep.subr.bf16.mxu0 0
    %1771 = vmatpush2.bf16.msra.mxu0 0
    %1772 = vmatprep.subr.bf16.mxu0 0
    %1773 = vmatpush2.bf16.msra.mxu0 0
    %1774 = vmatprep.mubr.bf16.mxu0 0
    %1775 = vmatmul.mubr.bf16.gmra.mxu0 %v1541
    %v1776 = vpop.f32.mrf.mxu0
    %v1777 = vadd.f32 0.0, %v1776
    %v1778 = vpop.f32.mrf.mxu0
    %v1779 = vadd.f32 0.0, %v1778
    %v1780 = vpop.f32.mrf.mxu0
    %v1781 = vpop.f32.mrf.mxu0
    %1782 = vdwg.mxu0
    %v1783 = vadd.f32 %v1678, %v1777
    %v1784 = vxor.u32 %v1783, 2147483648
    %v1785 = vmul.f32 %v1784, 1.442695
    %v1786 = vpow.pop %v1785
    %v1787 = vadd.f32 %v1786, 1.0
    %v1788 = vrcp.pop %v1787
    %v1789 = vmul.f32 1.0, %v1788
    %1790 = vrot.lane.b32.xlu0 %v1789, 64
    %v1791 = vpop.permute.xlu0 %1790
    %v1792 = vadd.f32 %v1779, %v355
    %v1793 = vmul.f32 %v1789, %v1792
    %v1794 = vadd.f32 %v1680, %v1793
    %v1795 = vtanh.pop %v1794
    %v1796 = vsub.f32 %v1540, %v1795
    %v1797 = vmul.f32 %v1791, %v1796
    %v1798 = vadd.f32 %v1795, %v1797
    %v1799 = vpack.c.bf16 %v1798, %v1798
    %1800 = vmatprep.subr.bf16.mxu0 %v914
    %1801 = vmatpush1.bf16.msra.mxu0 %v913
    %1802 = vmatprep.subr.bf16.mxu0 %v912
    %1803 = vmatpush1.bf16.msra.mxu0 %v911
    %1804 = vmatprep.subr.bf16.mxu0 %v910
    %1805 = vmatpush1.bf16.msra.mxu0 %v909
    %1806 = vmatprep.subr.bf16.mxu0 %v908
    %1807 = vmatpush1.bf16.msra.mxu0 %v907
    %1808 = vmatprep.subr.bf16.mxu0 %v906
    %1809 = vmatpush1.bf16.msra.mxu0 %v905
    %1810 = vmatprep.subr.bf16.mxu0 %v904
    %1811 = vmatpush1.bf16.msra.mxu0 %v903
    %1812 = vmatprep.subr.bf16.mxu0 %v902
    %1813 = vmatpush1.bf16.msra.mxu0 %v901
    %1814 = vmatprep.subr.bf16.mxu0 %v900
    %1815 = vmatpush1.bf16.msra.mxu0 %v899
    %1816 = vmatprep.subr.bf16.mxu0 0
    %1817 = vmatpush2.bf16.msra.mxu0 0
    %1818 = vmatprep.subr.bf16.mxu0 0
    %1819 = vmatpush2.bf16.msra.mxu0 0
    %1820 = vmatprep.subr.bf16.mxu0 0
    %1821 = vmatpush2.bf16.msra.mxu0 0
    %1822 = vmatprep.subr.bf16.mxu0 0
    %1823 = vmatpush2.bf16.msra.mxu0 0
    %1824 = vmatprep.subr.bf16.mxu0 0
    %1825 = vmatpush2.bf16.msra.mxu0 0
    %1826 = vmatprep.subr.bf16.mxu0 0
    %1827 = vmatpush2.bf16.msra.mxu0 0
    %1828 = vmatprep.subr.bf16.mxu0 0
    %1829 = vmatpush2.bf16.msra.mxu0 0
    %1830 = vmatprep.subr.bf16.mxu0 0
    %1831 = vmatpush2.bf16.msra.mxu0 0
    %1832 = vmatprep.mubr.bf16.mxu0 0
    %1833 = vmatmul.mubr.bf16.gmra.mxu0 %v1799
    %v1834 = vpop.f32.mrf.mxu0
    %v1835 = vadd.f32 %v381, %v1834
    %v1836 = vpop.f32.mrf.mxu0
    %v1837 = vadd.f32 %v385, %v1836
    %v1838 = vpop.f32.mrf.mxu0
    %v1839 = vpop.f32.mrf.mxu0
    %1840 = vdwg.mxu0
    %v1841 = vld [vmem:[#allocation2 + $0x40] sm:$0xff]
    %v1842 = vld [vmem:[#allocation2 + $0x48] sm:$0xff]
    %1843 = vmatprep.subr.bf16.mxu0 %v469
    %1844 = vmatpush1.bf16.msra.mxu0 %v468
    %1845 = vmatprep.subr.bf16.mxu0 %v467
    %1846 = vmatpush1.bf16.msra.mxu0 %v466
    %1847 = vmatprep.subr.bf16.mxu0 %v465
    %1848 = vmatpush1.bf16.msra.mxu0 %v464
    %1849 = vmatprep.subr.bf16.mxu0 %v463
    %1850 = vmatpush1.bf16.msra.mxu0 %v462
    %1851 = vmatprep.subr.bf16.mxu0 %v461
    %1852 = vmatpush1.bf16.msra.mxu0 %v460
    %1853 = vmatprep.subr.bf16.mxu0 %v459
    %1854 = vmatpush1.bf16.msra.mxu0 %v458
    %1855 = vmatprep.subr.bf16.mxu0 %v457
    %1856 = vmatpush1.bf16.msra.mxu0 %v456
    %1857 = vmatprep.subr.bf16.mxu0 %v455
    %1858 = vmatpush1.bf16.msra.mxu0 %v454
    %1859 = vmatprep.subr.bf16.mxu0 0
    %1860 = vmatpush2.bf16.msra.mxu0 0
    %1861 = vmatprep.subr.bf16.mxu0 0
    %1862 = vmatpush2.bf16.msra.mxu0 0
    %1863 = vmatprep.subr.bf16.mxu0 0
    %1864 = vmatpush2.bf16.msra.mxu0 0
    %1865 = vmatprep.subr.bf16.mxu0 0
    %1866 = vmatpush2.bf16.msra.mxu0 0
    %1867 = vmatprep.subr.bf16.mxu0 0
    %1868 = vmatpush2.bf16.msra.mxu0 0
    %1869 = vmatprep.subr.bf16.mxu0 0
    %1870 = vmatpush2.bf16.msra.mxu0 0
    %1871 = vmatprep.subr.bf16.mxu0 0
    %1872 = vmatpush2.bf16.msra.mxu0 0
    %1873 = vmatprep.subr.bf16.mxu0 0
    %1874 = vmatpush2.bf16.msra.mxu0 0
    %1875 = vmatprep.mubr.bf16.mxu0 0
    %1876 = vmatmul.mubr.bf16.gmra.mxu0 %v1642
    %v1877 = vpop.f32.mrf.mxu0
    %v1878 = vadd.f32 0.0, %v1877
    %v1879 = vpop.f32.mrf.mxu0
    %v1880 = vadd.f32 0.0, %v1879
    %v1881 = vpop.f32.mrf.mxu0
    %v1882 = vpop.f32.mrf.mxu0
    %1883 = vdwg.mxu0
    %v1884 = vadd.f32 %v1841, %v1878
    %v1885 = vxor.u32 %v1884, 2147483648
    %v1886 = vmul.f32 %v1885, 1.442695
    %v1887 = vpow.pop %v1886
    %v1888 = vadd.f32 %v1887, 1.0
    %v1889 = vrcp.pop %v1888
    %v1890 = vmul.f32 1.0, %v1889
    %1891 = vrot.lane.b32.xlu0 %v1890, 64
    %v1892 = vpop.permute.xlu0 %1891
    %v1893 = vadd.f32 %v1880, %v348
    %v1894 = vmul.f32 %v1890, %v1893
    %v1895 = vadd.f32 %v1842, %v1894
    %v1896 = vtanh.pop %v1895
    %v1897 = vsub.f32 %v1641, %v1896
    %v1898 = vmul.f32 %v1892, %v1897
    %v1899 = vadd.f32 %v1896, %v1898
    %v1900 = vpack.c.bf16 %v1899, %v1899
    %1901 = vmatprep.subr.bf16.mxu0 %v623
    %1902 = vmatpush1.bf16.msra.mxu0 %v622
    %1903 = vmatprep.subr.bf16.mxu0 %v621
    %1904 = vmatpush1.bf16.msra.mxu0 %v620
    %1905 = vmatprep.subr.bf16.mxu0 %v619
    %1906 = vmatpush1.bf16.msra.mxu0 %v618
    %1907 = vmatprep.subr.bf16.mxu0 %v617
    %1908 = vmatpush1.bf16.msra.mxu0 %v616
    %1909 = vmatprep.subr.bf16.mxu0 %v615
    %1910 = vmatpush1.bf16.msra.mxu0 %v614
    %1911 = vmatprep.subr.bf16.mxu0 %v613
    %1912 = vmatpush1.bf16.msra.mxu0 %v612
    %1913 = vmatprep.subr.bf16.mxu0 %v611
    %1914 = vmatpush1.bf16.msra.mxu0 %v610
    %1915 = vmatprep.subr.bf16.mxu0 %v609
    %1916 = vmatpush1.bf16.msra.mxu0 %v608
    %1917 = vmatprep.subr.bf16.mxu0 0
    %1918 = vmatpush2.bf16.msra.mxu0 0
    %1919 = vmatprep.subr.bf16.mxu0 0
    %1920 = vmatpush2.bf16.msra.mxu0 0
    %1921 = vmatprep.subr.bf16.mxu0 0
    %1922 = vmatpush2.bf16.msra.mxu0 0
    %1923 = vmatprep.subr.bf16.mxu0 0
    %1924 = vmatpush2.bf16.msra.mxu0 0
    %1925 = vmatprep.subr.bf16.mxu0 0
    %1926 = vmatpush2.bf16.msra.mxu0 0
    %1927 = vmatprep.subr.bf16.mxu0 0
    %1928 = vmatpush2.bf16.msra.mxu0 0
    %1929 = vmatprep.subr.bf16.mxu0 0
    %1930 = vmatpush2.bf16.msra.mxu0 0
    %1931 = vmatprep.subr.bf16.mxu0 0
    %1932 = vmatpush2.bf16.msra.mxu0 0
    %1933 = vmatprep.mubr.bf16.mxu0 0
    %1934 = vmatmul.mubr.bf16.gmra.mxu0 %v1900
    %v1935 = vpop.f32.mrf.mxu0
    %v1936 = vadd.f32 %v369, %v1935
    %v1937 = vpop.f32.mrf.mxu0
    %v1938 = vadd.f32 %v373, %v1937
    %v1939 = vpop.f32.mrf.mxu0
    %v1940 = vpop.f32.mrf.mxu0
    %1941 = vdwg.mxu0
    %v1942 = vpack.c.bf16 %v1741, %v1741
    %1943 = vmatprep.subr.bf16.mxu0 %v1152
    %1944 = vmatpush1.bf16.msra.mxu0 %v1151
    %1945 = vmatprep.subr.bf16.mxu0 %v1150
    %1946 = vmatpush1.bf16.msra.mxu0 %v1149
    %1947 = vmatprep.subr.bf16.mxu0 %v1148
    %1948 = vmatpush1.bf16.msra.mxu0 %v1147
    %1949 = vmatprep.subr.bf16.mxu0 %v1146
    %1950 = vmatpush1.bf16.msra.mxu0 %v1145
    %1951 = vmatprep.subr.bf16.mxu0 %v1144
    %1952 = vmatpush1.bf16.msra.mxu0 %v1143
    %1953 = vmatprep.subr.bf16.mxu0 %v1142
    %1954 = vmatpush1.bf16.msra.mxu0 %v1141
    %1955 = vmatprep.subr.bf16.mxu0 %v1140
    %1956 = vmatpush1.bf16.msra.mxu0 %v1139
    %1957 = vmatprep.subr.bf16.mxu0 %v1138
    %1958 = vmatpush1.bf16.msra.mxu0 %v1137
    %1959 = vmatprep.subr.bf16.mxu0 0
    %1960 = vmatpush2.bf16.msra.mxu0 0
    %1961 = vmatprep.subr.bf16.mxu0 0
    %1962 = vmatpush2.bf16.msra.mxu0 0
    %1963 = vmatprep.subr.bf16.mxu0 0
    %1964 = vmatpush2.bf16.msra.mxu0 0
    %1965 = vmatprep.subr.bf16.mxu0 0
    %1966 = vmatpush2.bf16.msra.mxu0 0
    %1967 = vmatprep.subr.bf16.mxu0 0
    %1968 = vmatpush2.bf16.msra.mxu0 0
    %1969 = vmatprep.subr.bf16.mxu0 0
    %1970 = vmatpush2.bf16.msra.mxu0 0
    %1971 = vmatprep.subr.bf16.mxu0 0
    %1972 = vmatpush2.bf16.msra.mxu0 0
    %1973 = vmatprep.subr.bf16.mxu0 0
    %1974 = vmatpush2.bf16.msra.mxu0 0
    %1975 = vmatprep.mubr.bf16.mxu0 0
    %1976 = vmatmul.mubr.bf16.gmra.mxu0 %v1942
    %v1977 = vpop.f32.mrf.mxu0
    %v1978 = vadd.f32 0.0, %v1977
    %v1979 = vpop.f32.mrf.mxu0
    %v1980 = vadd.f32 0.0, %v1979
    %v1981 = vpop.f32.mrf.mxu0
    %v1982 = vpop.f32.mrf.mxu0
    %1983 = vdwg.mxu0
    %v1984 = vadd.f32 %v1835, %v1978
    %v1985 = vxor.u32 %v1984, 2147483648
    %v1986 = vmul.f32 %v1985, 1.442695
    %v1987 = vpow.pop %v1986
    %v1988 = vadd.f32 %v1987, 1.0
    %v1989 = vrcp.pop %v1988
    %v1990 = vmul.f32 1.0, %v1989
    %1991 = vrot.lane.b32.xlu0 %v1990, 64
    %v1992 = vpop.permute.xlu0 %1991
    %v1993 = vadd.f32 %v1980, %v362
    %v1994 = vmul.f32 %v1990, %v1993
    %v1995 = vadd.f32 %v1837, %v1994
    %v1996 = vtanh.pop %v1995
    %v1997 = vsub.f32 %v1741, %v1996
    %v1998 = vmul.f32 %v1992, %v1997
    %v1999 = vadd.f32 %v1996, %v1998
    %2000 = vmatprep.subr.bf16.mxu0 %v760
    %2001 = vmatpush1.bf16.msra.mxu0 %v759
    %2002 = vmatprep.subr.bf16.mxu0 %v758
    %2003 = vmatpush1.bf16.msra.mxu0 %v757
    %2004 = vmatprep.subr.bf16.mxu0 %v756
    %2005 = vmatpush1.bf16.msra.mxu0 %v755
    %2006 = vmatprep.subr.bf16.mxu0 %v754
    %2007 = vmatpush1.bf16.msra.mxu0 %v753
    %2008 = vmatprep.subr.bf16.mxu0 %v752
    %2009 = vmatpush1.bf16.msra.mxu0 %v751
    %2010 = vmatprep.subr.bf16.mxu0 %v750
    %2011 = vmatpush1.bf16.msra.mxu0 %v749
    %2012 = vmatprep.subr.bf16.mxu0 %v748
    %2013 = vmatpush1.bf16.msra.mxu0 %v747
    %2014 = vmatprep.subr.bf16.mxu0 %v746
    %2015 = vmatpush1.bf16.msra.mxu0 %v745
    %2016 = vmatprep.subr.bf16.mxu0 0
    %2017 = vmatpush2.bf16.msra.mxu0 0
    %2018 = vmatprep.subr.bf16.mxu0 0
    %2019 = vmatpush2.bf16.msra.mxu0 0
    %2020 = vmatprep.subr.bf16.mxu0 0
    %2021 = vmatpush2.bf16.msra.mxu0 0
    %2022 = vmatprep.subr.bf16.mxu0 0
    %2023 = vmatpush2.bf16.msra.mxu0 0
    %2024 = vmatprep.subr.bf16.mxu0 0
    %2025 = vmatpush2.bf16.msra.mxu0 0
    %2026 = vmatprep.subr.bf16.mxu0 0
    %2027 = vmatpush2.bf16.msra.mxu0 0
    %2028 = vmatprep.subr.bf16.mxu0 0
    %2029 = vmatpush2.bf16.msra.mxu0 0
    %2030 = vmatprep.subr.bf16.mxu0 0
    %2031 = vmatpush2.bf16.msra.mxu0 0
    %2032 = vmatprep.mubr.bf16.mxu0 0
    %2033 = vmatmul.mubr.bf16.gmra.mxu0 %v1799
    %v2034 = vpop.f32.mrf.mxu0
    %v2035 = vadd.f32 0.0, %v2034
    %v2036 = vpop.f32.mrf.mxu0
    %v2037 = vadd.f32 0.0, %v2036
    %v2038 = vpop.f32.mrf.mxu0
    %v2039 = vpop.f32.mrf.mxu0
    %2040 = vdwg.mxu0
    %v2041 = vadd.f32 %v1936, %v2035
    %v2042 = vxor.u32 %v2041, 2147483648
    %v2043 = vmul.f32 %v2042, 1.442695
    %v2044 = vpow.pop %v2043
    %v2045 = vadd.f32 %v2044, 1.0
    %v2046 = vrcp.pop %v2045
    %v2047 = vmul.f32 1.0, %v2046
    %2048 = vrot.lane.b32.xlu0 %v2047, 64
    %v2049 = vpop.permute.xlu0 %2048
    %v2050 = vadd.f32 %v2037, %v355
    %v2051 = vmul.f32 %v2047, %v2050
    %v2052 = vadd.f32 %v1938, %v2051
    %v2053 = vtanh.pop %v2052
    %v2054 = vsub.f32 %v1798, %v2053
    %v2055 = vmul.f32 %v2049, %v2054
    %v2056 = vadd.f32 %v2053, %v2055
    %v2057 = vpack.c.bf16 %v2056, %v2056
    %2058 = vmatprep.subr.bf16.mxu0 %v914
    %2059 = vmatpush1.bf16.msra.mxu0 %v913
    %2060 = vmatprep.subr.bf16.mxu0 %v912
    %2061 = vmatpush1.bf16.msra.mxu0 %v911
    %2062 = vmatprep.subr.bf16.mxu0 %v910
    %2063 = vmatpush1.bf16.msra.mxu0 %v909
    %2064 = vmatprep.subr.bf16.mxu0 %v908
    %2065 = vmatpush1.bf16.msra.mxu0 %v907
    %2066 = vmatprep.subr.bf16.mxu0 %v906
    %2067 = vmatpush1.bf16.msra.mxu0 %v905
    %2068 = vmatprep.subr.bf16.mxu0 %v904
    %2069 = vmatpush1.bf16.msra.mxu0 %v903
    %2070 = vmatprep.subr.bf16.mxu0 %v902
    %2071 = vmatpush1.bf16.msra.mxu0 %v901
    %2072 = vmatprep.subr.bf16.mxu0 %v900
    %2073 = vmatpush1.bf16.msra.mxu0 %v899
    %2074 = vmatprep.subr.bf16.mxu0 0
    %2075 = vmatpush2.bf16.msra.mxu0 0
    %2076 = vmatprep.subr.bf16.mxu0 0
    %2077 = vmatpush2.bf16.msra.mxu0 0
    %2078 = vmatprep.subr.bf16.mxu0 0
    %2079 = vmatpush2.bf16.msra.mxu0 0
    %2080 = vmatprep.subr.bf16.mxu0 0
    %2081 = vmatpush2.bf16.msra.mxu0 0
    %2082 = vmatprep.subr.bf16.mxu0 0
    %2083 = vmatpush2.bf16.msra.mxu0 0
    %2084 = vmatprep.subr.bf16.mxu0 0
    %2085 = vmatpush2.bf16.msra.mxu0 0
    %2086 = vmatprep.subr.bf16.mxu0 0
    %2087 = vmatpush2.bf16.msra.mxu0 0
    %2088 = vmatprep.subr.bf16.mxu0 0
    %2089 = vmatpush2.bf16.msra.mxu0 0
    %2090 = vmatprep.mubr.bf16.mxu0 0
    %2091 = vmatmul.mubr.bf16.gmra.mxu0 %v2057
    %v2092 = vpop.f32.mrf.mxu0
    %v2093 = vadd.f32 %v381, %v2092
    %v2094 = vpop.f32.mrf.mxu0
    %v2095 = vadd.f32 %v385, %v2094
    %v2096 = vpop.f32.mrf.mxu0
    %v2097 = vpop.f32.mrf.mxu0
    %2098 = vdwg.mxu0
    %v2099 = vld [vmem:[#allocation2 + $0x50] sm:$0xff]
    %v2100 = vld [vmem:[#allocation2 + $0x58] sm:$0xff]
    %2101 = vmatprep.subr.bf16.mxu0 %v469
    %2102 = vmatpush1.bf16.msra.mxu0 %v468
    %2103 = vmatprep.subr.bf16.mxu0 %v467
    %2104 = vmatpush1.bf16.msra.mxu0 %v466
    %2105 = vmatprep.subr.bf16.mxu0 %v465
    %2106 = vmatpush1.bf16.msra.mxu0 %v464
    %2107 = vmatprep.subr.bf16.mxu0 %v463
    %2108 = vmatpush1.bf16.msra.mxu0 %v462
    %2109 = vmatprep.subr.bf16.mxu0 %v461
    %2110 = vmatpush1.bf16.msra.mxu0 %v460
    %2111 = vmatprep.subr.bf16.mxu0 %v459
    %2112 = vmatpush1.bf16.msra.mxu0 %v458
    %2113 = vmatprep.subr.bf16.mxu0 %v457
    %2114 = vmatpush1.bf16.msra.mxu0 %v456
    %2115 = vmatprep.subr.bf16.mxu0 %v455
    %2116 = vmatpush1.bf16.msra.mxu0 %v454
    %2117 = vmatprep.subr.bf16.mxu0 0
    %2118 = vmatpush2.bf16.msra.mxu0 0
    %2119 = vmatprep.subr.bf16.mxu0 0
    %2120 = vmatpush2.bf16.msra.mxu0 0
    %2121 = vmatprep.subr.bf16.mxu0 0
    %2122 = vmatpush2.bf16.msra.mxu0 0
    %2123 = vmatprep.subr.bf16.mxu0 0
    %2124 = vmatpush2.bf16.msra.mxu0 0
    %2125 = vmatprep.subr.bf16.mxu0 0
    %2126 = vmatpush2.bf16.msra.mxu0 0
    %2127 = vmatprep.subr.bf16.mxu0 0
    %2128 = vmatpush2.bf16.msra.mxu0 0
    %2129 = vmatprep.subr.bf16.mxu0 0
    %2130 = vmatpush2.bf16.msra.mxu0 0
    %2131 = vmatprep.subr.bf16.mxu0 0
    %2132 = vmatpush2.bf16.msra.mxu0 0
    %2133 = vmatprep.mubr.bf16.mxu0 0
    %2134 = vmatmul.mubr.bf16.gmra.mxu0 %v1900
    %v2135 = vpop.f32.mrf.mxu0
    %v2136 = vadd.f32 0.0, %v2135
    %v2137 = vpop.f32.mrf.mxu0
    %v2138 = vadd.f32 0.0, %v2137
    %v2139 = vpop.f32.mrf.mxu0
    %v2140 = vpop.f32.mrf.mxu0
    %2141 = vdwg.mxu0
    %v2142 = vadd.f32 %v2099, %v2136
    %v2143 = vxor.u32 %v2142, 2147483648
    %v2144 = vmul.f32 %v2143, 1.442695
    %v2145 = vpow.pop %v2144
    %v2146 = vadd.f32 %v2145, 1.0
    %v2147 = vrcp.pop %v2146
    %v2148 = vmul.f32 1.0, %v2147
    %2149 = vrot.lane.b32.xlu0 %v2148, 64
    %v2150 = vpop.permute.xlu0 %2149
    %v2151 = vadd.f32 %v2138, %v348
    %v2152 = vmul.f32 %v2148, %v2151
    %v2153 = vadd.f32 %v2100, %v2152
    %v2154 = vtanh.pop %v2153
    %v2155 = vsub.f32 %v1899, %v2154
    %v2156 = vmul.f32 %v2150, %v2155
    %v2157 = vadd.f32 %v2154, %v2156
    %v2158 = vpack.c.bf16 %v2157, %v2157
    %2159 = vmatprep.subr.bf16.mxu0 %v623
    %2160 = vmatpush1.bf16.msra.mxu0 %v622
    %2161 = vmatprep.subr.bf16.mxu0 %v621
    %2162 = vmatpush1.bf16.msra.mxu0 %v620
    %2163 = vmatprep.subr.bf16.mxu0 %v619
    %2164 = vmatpush1.bf16.msra.mxu0 %v618
    %2165 = vmatprep.subr.bf16.mxu0 %v617
    %2166 = vmatpush1.bf16.msra.mxu0 %v616
    %2167 = vmatprep.subr.bf16.mxu0 %v615
    %2168 = vmatpush1.bf16.msra.mxu0 %v614
    %2169 = vmatprep.subr.bf16.mxu0 %v613
    %2170 = vmatpush1.bf16.msra.mxu0 %v612
    %2171 = vmatprep.subr.bf16.mxu0 %v611
    %2172 = vmatpush1.bf16.msra.mxu0 %v610
    %2173 = vmatprep.subr.bf16.mxu0 %v609
    %2174 = vmatpush1.bf16.msra.mxu0 %v608
    %2175 = vmatprep.subr.bf16.mxu0 0
    %2176 = vmatpush2.bf16.msra.mxu0 0
    %2177 = vmatprep.subr.bf16.mxu0 0
    %2178 = vmatpush2.bf16.msra.mxu0 0
    %2179 = vmatprep.subr.bf16.mxu0 0
    %2180 = vmatpush2.bf16.msra.mxu0 0
    %2181 = vmatprep.subr.bf16.mxu0 0
    %2182 = vmatpush2.bf16.msra.mxu0 0
    %2183 = vmatprep.subr.bf16.mxu0 0
    %2184 = vmatpush2.bf16.msra.mxu0 0
    %2185 = vmatprep.subr.bf16.mxu0 0
    %2186 = vmatpush2.bf16.msra.mxu0 0
    %2187 = vmatprep.subr.bf16.mxu0 0
    %2188 = vmatpush2.bf16.msra.mxu0 0
    %2189 = vmatprep.subr.bf16.mxu0 0
    %2190 = vmatpush2.bf16.msra.mxu0 0
    %2191 = vmatprep.mubr.bf16.mxu0 0
    %2192 = vmatmul.mubr.bf16.gmra.mxu0 %v2158
    %v2193 = vpop.f32.mrf.mxu0
    %v2194 = vadd.f32 %v369, %v2193
    %v2195 = vpop.f32.mrf.mxu0
    %v2196 = vadd.f32 %v373, %v2195
    %v2197 = vpop.f32.mrf.mxu0
    %v2198 = vpop.f32.mrf.mxu0
    %2199 = vdwg.mxu0
    %v2200 = vpack.c.bf16 %v1999, %v1999
    %2201 = vmatprep.subr.bf16.mxu0 %v1152
    %2202 = vmatpush1.bf16.msra.mxu0 %v1151
    %2203 = vmatprep.subr.bf16.mxu0 %v1150
    %2204 = vmatpush1.bf16.msra.mxu0 %v1149
    %2205 = vmatprep.subr.bf16.mxu0 %v1148
    %2206 = vmatpush1.bf16.msra.mxu0 %v1147
    %2207 = vmatprep.subr.bf16.mxu0 %v1146
    %2208 = vmatpush1.bf16.msra.mxu0 %v1145
    %2209 = vmatprep.subr.bf16.mxu0 %v1144
    %2210 = vmatpush1.bf16.msra.mxu0 %v1143
    %2211 = vmatprep.subr.bf16.mxu0 %v1142
    %2212 = vmatpush1.bf16.msra.mxu0 %v1141
    %2213 = vmatprep.subr.bf16.mxu0 %v1140
    %2214 = vmatpush1.bf16.msra.mxu0 %v1139
    %2215 = vmatprep.subr.bf16.mxu0 %v1138
    %2216 = vmatpush1.bf16.msra.mxu0 %v1137
    %2217 = vmatprep.subr.bf16.mxu0 0
    %2218 = vmatpush2.bf16.msra.mxu0 0
    %2219 = vmatprep.subr.bf16.mxu0 0
    %2220 = vmatpush2.bf16.msra.mxu0 0
    %2221 = vmatprep.subr.bf16.mxu0 0
    %2222 = vmatpush2.bf16.msra.mxu0 0
    %2223 = vmatprep.subr.bf16.mxu0 0
    %2224 = vmatpush2.bf16.msra.mxu0 0
    %2225 = vmatprep.subr.bf16.mxu0 0
    %2226 = vmatpush2.bf16.msra.mxu0 0
    %2227 = vmatprep.subr.bf16.mxu0 0
    %2228 = vmatpush2.bf16.msra.mxu0 0
    %2229 = vmatprep.subr.bf16.mxu0 0
    %2230 = vmatpush2.bf16.msra.mxu0 0
    %2231 = vmatprep.subr.bf16.mxu0 0
    %2232 = vmatpush2.bf16.msra.mxu0 0
    %2233 = vmatprep.mubr.bf16.mxu0 0
    %2234 = vmatmul.mubr.bf16.gmra.mxu0 %v2200
    %v2235 = vpop.f32.mrf.mxu0
    %v2236 = vadd.f32 0.0, %v2235
    %v2237 = vpop.f32.mrf.mxu0
    %v2238 = vadd.f32 0.0, %v2237
    %v2239 = vpop.f32.mrf.mxu0
    %v2240 = vpop.f32.mrf.mxu0
    %2241 = vdwg.mxu0
    %v2242 = vadd.f32 %v2093, %v2236
    %v2243 = vxor.u32 %v2242, 2147483648
    %v2244 = vmul.f32 %v2243, 1.442695
    %v2245 = vpow.pop %v2244
    %v2246 = vadd.f32 %v2245, 1.0
    %v2247 = vrcp.pop %v2246
    %v2248 = vmul.f32 1.0, %v2247
    %2249 = vrot.lane.b32.xlu0 %v2248, 64
    %v2250 = vpop.permute.xlu0 %2249
    %v2251 = vadd.f32 %v2238, %v362
    %v2252 = vmul.f32 %v2248, %v2251
    %v2253 = vadd.f32 %v2095, %v2252
    %v2254 = vtanh.pop %v2253
    %v2255 = vsub.f32 %v1999, %v2254
    %v2256 = vmul.f32 %v2250, %v2255
    %v2257 = vadd.f32 %v2254, %v2256
    %2258 = vmatprep.subr.bf16.mxu0 %v760
    %2259 = vmatpush1.bf16.msra.mxu0 %v759
    %2260 = vmatprep.subr.bf16.mxu0 %v758
    %2261 = vmatpush1.bf16.msra.mxu0 %v757
    %2262 = vmatprep.subr.bf16.mxu0 %v756
    %2263 = vmatpush1.bf16.msra.mxu0 %v755
    %2264 = vmatprep.subr.bf16.mxu0 %v754
    %2265 = vmatpush1.bf16.msra.mxu0 %v753
    %2266 = vmatprep.subr.bf16.mxu0 %v752
    %2267 = vmatpush1.bf16.msra.mxu0 %v751
    %2268 = vmatprep.subr.bf16.mxu0 %v750
    %2269 = vmatpush1.bf16.msra.mxu0 %v749
    %2270 = vmatprep.subr.bf16.mxu0 %v748
    %2271 = vmatpush1.bf16.msra.mxu0 %v747
    %2272 = vmatprep.subr.bf16.mxu0 %v746
    %2273 = vmatpush1.bf16.msra.mxu0 %v745
    %2274 = vmatprep.subr.bf16.mxu0 0
    %2275 = vmatpush2.bf16.msra.mxu0 0
    %2276 = vmatprep.subr.bf16.mxu0 0
    %2277 = vmatpush2.bf16.msra.mxu0 0
    %2278 = vmatprep.subr.bf16.mxu0 0
    %2279 = vmatpush2.bf16.msra.mxu0 0
    %2280 = vmatprep.subr.bf16.mxu0 0
    %2281 = vmatpush2.bf16.msra.mxu0 0
    %2282 = vmatprep.subr.bf16.mxu0 0
    %2283 = vmatpush2.bf16.msra.mxu0 0
    %2284 = vmatprep.subr.bf16.mxu0 0
    %2285 = vmatpush2.bf16.msra.mxu0 0
    %2286 = vmatprep.subr.bf16.mxu0 0
    %2287 = vmatpush2.bf16.msra.mxu0 0
    %2288 = vmatprep.subr.bf16.mxu0 0
    %2289 = vmatpush2.bf16.msra.mxu0 0
    %2290 = vmatprep.mubr.bf16.mxu0 0
    %2291 = vmatmul.mubr.bf16.gmra.mxu0 %v2057
    %v2292 = vpop.f32.mrf.mxu0
    %v2293 = vadd.f32 0.0, %v2292
    %v2294 = vpop.f32.mrf.mxu0
    %v2295 = vadd.f32 0.0, %v2294
    %v2296 = vpop.f32.mrf.mxu0
    %v2297 = vpop.f32.mrf.mxu0
    %2298 = vdwg.mxu0
    %v2299 = vadd.f32 %v2194, %v2293
    %v2300 = vxor.u32 %v2299, 2147483648
    %v2301 = vmul.f32 %v2300, 1.442695
    %v2302 = vpow.pop %v2301
    %v2303 = vadd.f32 %v2302, 1.0
    %v2304 = vrcp.pop %v2303
    %v2305 = vmul.f32 1.0, %v2304
    %2306 = vrot.lane.b32.xlu0 %v2305, 64
    %v2307 = vpop.permute.xlu0 %2306
    %v2308 = vadd.f32 %v2295, %v355
    %v2309 = vmul.f32 %v2305, %v2308
    %v2310 = vadd.f32 %v2196, %v2309
    %v2311 = vtanh.pop %v2310
    %v2312 = vsub.f32 %v2056, %v2311
    %v2313 = vmul.f32 %v2307, %v2312
    %v2314 = vadd.f32 %v2311, %v2313
    %v2315 = vpack.c.bf16 %v2314, %v2314
    %2316 = vmatprep.subr.bf16.mxu0 %v914
    %2317 = vmatpush1.bf16.msra.mxu0 %v913
    %2318 = vmatprep.subr.bf16.mxu0 %v912
    %2319 = vmatpush1.bf16.msra.mxu0 %v911
    %2320 = vmatprep.subr.bf16.mxu0 %v910
    %2321 = vmatpush1.bf16.msra.mxu0 %v909
    %2322 = vmatprep.subr.bf16.mxu0 %v908
    %2323 = vmatpush1.bf16.msra.mxu0 %v907
    %2324 = vmatprep.subr.bf16.mxu0 %v906
    %2325 = vmatpush1.bf16.msra.mxu0 %v905
    %2326 = vmatprep.subr.bf16.mxu0 %v904
    %2327 = vmatpush1.bf16.msra.mxu0 %v903
    %2328 = vmatprep.subr.bf16.mxu0 %v902
    %2329 = vmatpush1.bf16.msra.mxu0 %v901
    %2330 = vmatprep.subr.bf16.mxu0 %v900
    %2331 = vmatpush1.bf16.msra.mxu0 %v899
    %2332 = vmatprep.subr.bf16.mxu0 0
    %2333 = vmatpush2.bf16.msra.mxu0 0
    %2334 = vmatprep.subr.bf16.mxu0 0
    %2335 = vmatpush2.bf16.msra.mxu0 0
    %2336 = vmatprep.subr.bf16.mxu0 0
    %2337 = vmatpush2.bf16.msra.mxu0 0
    %2338 = vmatprep.subr.bf16.mxu0 0
    %2339 = vmatpush2.bf16.msra.mxu0 0
    %2340 = vmatprep.subr.bf16.mxu0 0
    %2341 = vmatpush2.bf16.msra.mxu0 0
    %2342 = vmatprep.subr.bf16.mxu0 0
    %2343 = vmatpush2.bf16.msra.mxu0 0
    %2344 = vmatprep.subr.bf16.mxu0 0
    %2345 = vmatpush2.bf16.msra.mxu0 0
    %2346 = vmatprep.subr.bf16.mxu0 0
    %2347 = vmatpush2.bf16.msra.mxu0 0
    %2348 = vmatprep.mubr.bf16.mxu0 0
    %2349 = vmatmul.mubr.bf16.gmra.mxu0 %v2315
    %v2350 = vpop.f32.mrf.mxu0
    %v2351 = vadd.f32 %v381, %v2350
    %v2352 = vpop.f32.mrf.mxu0
    %v2353 = vadd.f32 %v385, %v2352
    %v2354 = vpop.f32.mrf.mxu0
    %v2355 = vpop.f32.mrf.mxu0
    %2356 = vdwg.mxu0
    %v2357 = vld [vmem:[#allocation2 + $0x60] sm:$0xff]
    %v2358 = vld [vmem:[#allocation2 + $0x68] sm:$0xff]
    %2359 = vmatprep.subr.bf16.mxu0 %v469
    %2360 = vmatpush1.bf16.msra.mxu0 %v468
    %2361 = vmatprep.subr.bf16.mxu0 %v467
    %2362 = vmatpush1.bf16.msra.mxu0 %v466
    %2363 = vmatprep.subr.bf16.mxu0 %v465
    %2364 = vmatpush1.bf16.msra.mxu0 %v464
    %2365 = vmatprep.subr.bf16.mxu0 %v463
    %2366 = vmatpush1.bf16.msra.mxu0 %v462
    %2367 = vmatprep.subr.bf16.mxu0 %v461
    %2368 = vmatpush1.bf16.msra.mxu0 %v460
    %2369 = vmatprep.subr.bf16.mxu0 %v459
    %2370 = vmatpush1.bf16.msra.mxu0 %v458
    %2371 = vmatprep.subr.bf16.mxu0 %v457
    %2372 = vmatpush1.bf16.msra.mxu0 %v456
    %2373 = vmatprep.subr.bf16.mxu0 %v455
    %2374 = vmatpush1.bf16.msra.mxu0 %v454
    %2375 = vmatprep.subr.bf16.mxu0 0
    %2376 = vmatpush2.bf16.msra.mxu0 0
    %2377 = vmatprep.subr.bf16.mxu0 0
    %2378 = vmatpush2.bf16.msra.mxu0 0
    %2379 = vmatprep.subr.bf16.mxu0 0
    %2380 = vmatpush2.bf16.msra.mxu0 0
    %2381 = vmatprep.subr.bf16.mxu0 0
    %2382 = vmatpush2.bf16.msra.mxu0 0
    %2383 = vmatprep.subr.bf16.mxu0 0
    %2384 = vmatpush2.bf16.msra.mxu0 0
    %2385 = vmatprep.subr.bf16.mxu0 0
    %2386 = vmatpush2.bf16.msra.mxu0 0
    %2387 = vmatprep.subr.bf16.mxu0 0
    %2388 = vmatpush2.bf16.msra.mxu0 0
    %2389 = vmatprep.subr.bf16.mxu0 0
    %2390 = vmatpush2.bf16.msra.mxu0 0
    %2391 = vmatprep.mubr.bf16.mxu0 0
    %2392 = vmatmul.mubr.bf16.gmra.mxu0 %v2158
    %v2393 = vpop.f32.mrf.mxu0
    %v2394 = vadd.f32 0.0, %v2393
    %v2395 = vpop.f32.mrf.mxu0
    %v2396 = vadd.f32 0.0, %v2395
    %v2397 = vpop.f32.mrf.mxu0
    %v2398 = vpop.f32.mrf.mxu0
    %2399 = vdwg.mxu0
    %v2400 = vadd.f32 %v2357, %v2394
    %v2401 = vxor.u32 %v2400, 2147483648
    %v2402 = vmul.f32 %v2401, 1.442695
    %v2403 = vpow.pop %v2402
    %v2404 = vadd.f32 %v2403, 1.0
    %v2405 = vrcp.pop %v2404
    %v2406 = vmul.f32 1.0, %v2405
    %2407 = vrot.lane.b32.xlu0 %v2406, 64
    %v2408 = vpop.permute.xlu0 %2407
    %v2409 = vadd.f32 %v2396, %v348
    %v2410 = vmul.f32 %v2406, %v2409
    %v2411 = vadd.f32 %v2358, %v2410
    %v2412 = vtanh.pop %v2411
    %v2413 = vsub.f32 %v2157, %v2412
    %v2414 = vmul.f32 %v2408, %v2413
    %v2415 = vadd.f32 %v2412, %v2414
    %v2416 = vpack.c.bf16 %v2415, %v2415
    %2417 = vmatprep.subr.bf16.mxu0 %v623
    %2418 = vmatpush1.bf16.msra.mxu0 %v622
    %2419 = vmatprep.subr.bf16.mxu0 %v621
    %2420 = vmatpush1.bf16.msra.mxu0 %v620
    %2421 = vmatprep.subr.bf16.mxu0 %v619
    %2422 = vmatpush1.bf16.msra.mxu0 %v618
    %2423 = vmatprep.subr.bf16.mxu0 %v617
    %2424 = vmatpush1.bf16.msra.mxu0 %v616
    %2425 = vmatprep.subr.bf16.mxu0 %v615
    %2426 = vmatpush1.bf16.msra.mxu0 %v614
    %2427 = vmatprep.subr.bf16.mxu0 %v613
    %2428 = vmatpush1.bf16.msra.mxu0 %v612
    %2429 = vmatprep.subr.bf16.mxu0 %v611
    %2430 = vmatpush1.bf16.msra.mxu0 %v610
    %2431 = vmatprep.subr.bf16.mxu0 %v609
    %2432 = vmatpush1.bf16.msra.mxu0 %v608
    %2433 = vmatprep.subr.bf16.mxu0 0
    %2434 = vmatpush2.bf16.msra.mxu0 0
    %2435 = vmatprep.subr.bf16.mxu0 0
    %2436 = vmatpush2.bf16.msra.mxu0 0
    %2437 = vmatprep.subr.bf16.mxu0 0
    %2438 = vmatpush2.bf16.msra.mxu0 0
    %2439 = vmatprep.subr.bf16.mxu0 0
    %2440 = vmatpush2.bf16.msra.mxu0 0
    %2441 = vmatprep.subr.bf16.mxu0 0
    %2442 = vmatpush2.bf16.msra.mxu0 0
    %2443 = vmatprep.subr.bf16.mxu0 0
    %2444 = vmatpush2.bf16.msra.mxu0 0
    %2445 = vmatprep.subr.bf16.mxu0 0
    %2446 = vmatpush2.bf16.msra.mxu0 0
    %2447 = vmatprep.subr.bf16.mxu0 0
    %2448 = vmatpush2.bf16.msra.mxu0 0
    %2449 = vmatprep.mubr.bf16.mxu0 0
    %2450 = vmatmul.mubr.bf16.gmra.mxu0 %v2416
    %v2451 = vpop.f32.mrf.mxu0
    %v2452 = vadd.f32 %v369, %v2451
    %v2453 = vpop.f32.mrf.mxu0
    %v2454 = vadd.f32 %v373, %v2453
    %v2455 = vpop.f32.mrf.mxu0
    %v2456 = vpop.f32.mrf.mxu0
    %2457 = vdwg.mxu0
    %v2458 = vpack.c.bf16 %v2257, %v2257
    %2459 = vmatprep.subr.bf16.mxu0 %v1152
    %2460 = vmatpush1.bf16.msra.mxu0 %v1151
    %2461 = vmatprep.subr.bf16.mxu0 %v1150
    %2462 = vmatpush1.bf16.msra.mxu0 %v1149
    %2463 = vmatprep.subr.bf16.mxu0 %v1148
    %2464 = vmatpush1.bf16.msra.mxu0 %v1147
    %2465 = vmatprep.subr.bf16.mxu0 %v1146
    %2466 = vmatpush1.bf16.msra.mxu0 %v1145
    %2467 = vmatprep.subr.bf16.mxu0 %v1144
    %2468 = vmatpush1.bf16.msra.mxu0 %v1143
    %2469 = vmatprep.subr.bf16.mxu0 %v1142
    %2470 = vmatpush1.bf16.msra.mxu0 %v1141
    %2471 = vmatprep.subr.bf16.mxu0 %v1140
    %2472 = vmatpush1.bf16.msra.mxu0 %v1139
    %2473 = vmatprep.subr.bf16.mxu0 %v1138
    %2474 = vmatpush1.bf16.msra.mxu0 %v1137
    %2475 = vmatprep.subr.bf16.mxu0 0
    %2476 = vmatpush2.bf16.msra.mxu0 0
    %2477 = vmatprep.subr.bf16.mxu0 0
    %2478 = vmatpush2.bf16.msra.mxu0 0
    %2479 = vmatprep.subr.bf16.mxu0 0
    %2480 = vmatpush2.bf16.msra.mxu0 0
    %2481 = vmatprep.subr.bf16.mxu0 0
    %2482 = vmatpush2.bf16.msra.mxu0 0
    %2483 = vmatprep.subr.bf16.mxu0 0
    %2484 = vmatpush2.bf16.msra.mxu0 0
    %2485 = vmatprep.subr.bf16.mxu0 0
    %2486 = vmatpush2.bf16.msra.mxu0 0
    %2487 = vmatprep.subr.bf16.mxu0 0
    %2488 = vmatpush2.bf16.msra.mxu0 0
    %2489 = vmatprep.subr.bf16.mxu0 0
    %2490 = vmatpush2.bf16.msra.mxu0 0
    %2491 = vmatprep.mubr.bf16.mxu0 0
    %2492 = vmatmul.mubr.bf16.gmra.mxu0 %v2458
    %v2493 = vpop.f32.mrf.mxu0
    %v2494 = vadd.f32 0.0, %v2493
    %v2495 = vpop.f32.mrf.mxu0
    %v2496 = vadd.f32 0.0, %v2495
    %v2497 = vpop.f32.mrf.mxu0
    %v2498 = vpop.f32.mrf.mxu0
    %2499 = vdwg.mxu0
    %v2500 = vadd.f32 %v2351, %v2494
    %v2501 = vxor.u32 %v2500, 2147483648
    %v2502 = vmul.f32 %v2501, 1.442695
    %v2503 = vpow.pop %v2502
    %v2504 = vadd.f32 %v2503, 1.0
    %v2505 = vrcp.pop %v2504
    %v2506 = vmul.f32 1.0, %v2505
    %2507 = vrot.lane.b32.xlu0 %v2506, 64
    %v2508 = vpop.permute.xlu0 %2507
    %v2509 = vadd.f32 %v2496, %v362
    %v2510 = vmul.f32 %v2506, %v2509
    %v2511 = vadd.f32 %v2353, %v2510
    %v2512 = vtanh.pop %v2511
    %v2513 = vsub.f32 %v2257, %v2512
    %v2514 = vmul.f32 %v2508, %v2513
    %v2515 = vadd.f32 %v2512, %v2514
    %2516 = vmatprep.subr.bf16.mxu0 %v760
    %2517 = vmatpush1.bf16.msra.mxu0 %v759
    %2518 = vmatprep.subr.bf16.mxu0 %v758
    %2519 = vmatpush1.bf16.msra.mxu0 %v757
    %2520 = vmatprep.subr.bf16.mxu0 %v756
    %2521 = vmatpush1.bf16.msra.mxu0 %v755
    %2522 = vmatprep.subr.bf16.mxu0 %v754
    %2523 = vmatpush1.bf16.msra.mxu0 %v753
    %2524 = vmatprep.subr.bf16.mxu0 %v752
    %2525 = vmatpush1.bf16.msra.mxu0 %v751
    %2526 = vmatprep.subr.bf16.mxu0 %v750
    %2527 = vmatpush1.bf16.msra.mxu0 %v749
    %2528 = vmatprep.subr.bf16.mxu0 %v748
    %2529 = vmatpush1.bf16.msra.mxu0 %v747
    %2530 = vmatprep.subr.bf16.mxu0 %v746
    %2531 = vmatpush1.bf16.msra.mxu0 %v745
    %2532 = vmatprep.subr.bf16.mxu0 0
    %2533 = vmatpush2.bf16.msra.mxu0 0
    %2534 = vmatprep.subr.bf16.mxu0 0
    %2535 = vmatpush2.bf16.msra.mxu0 0
    %2536 = vmatprep.subr.bf16.mxu0 0
    %2537 = vmatpush2.bf16.msra.mxu0 0
    %2538 = vmatprep.subr.bf16.mxu0 0
    %2539 = vmatpush2.bf16.msra.mxu0 0
    %2540 = vmatprep.subr.bf16.mxu0 0
    %2541 = vmatpush2.bf16.msra.mxu0 0
    %2542 = vmatprep.subr.bf16.mxu0 0
    %2543 = vmatpush2.bf16.msra.mxu0 0
    %2544 = vmatprep.subr.bf16.mxu0 0
    %2545 = vmatpush2.bf16.msra.mxu0 0
    %2546 = vmatprep.subr.bf16.mxu0 0
    %2547 = vmatpush2.bf16.msra.mxu0 0
    %2548 = vmatprep.mubr.bf16.mxu0 0
    %2549 = vmatmul.mubr.bf16.gmra.mxu0 %v2315
    %v2550 = vpop.f32.mrf.mxu0
    %v2551 = vadd.f32 0.0, %v2550
    %v2552 = vpop.f32.mrf.mxu0
    %v2553 = vadd.f32 0.0, %v2552
    %v2554 = vpop.f32.mrf.mxu0
    %v2555 = vpop.f32.mrf.mxu0
    %2556 = vdwg.mxu0
    %v2557 = vadd.f32 %v2452, %v2551
    %v2558 = vxor.u32 %v2557, 2147483648
    %v2559 = vmul.f32 %v2558, 1.442695
    %v2560 = vpow.pop %v2559
    %v2561 = vadd.f32 %v2560, 1.0
    %v2562 = vrcp.pop %v2561
    %v2563 = vmul.f32 1.0, %v2562
    %2564 = vrot.lane.b32.xlu0 %v2563, 64
    %v2565 = vpop.permute.xlu0 %2564
    %v2566 = vadd.f32 %v2553, %v355
    %v2567 = vmul.f32 %v2563, %v2566
    %v2568 = vadd.f32 %v2454, %v2567
    %v2569 = vtanh.pop %v2568
    %v2570 = vsub.f32 %v2314, %v2569
    %v2571 = vmul.f32 %v2565, %v2570
    %v2572 = vadd.f32 %v2569, %v2571
    %v2573 = vpack.c.bf16 %v2572, %v2572
    %2574 = vmatprep.subr.bf16.mxu0 %v914
    %2575 = vmatpush1.bf16.msra.mxu0 %v913
    %2576 = vmatprep.subr.bf16.mxu0 %v912
    %2577 = vmatpush1.bf16.msra.mxu0 %v911
    %2578 = vmatprep.subr.bf16.mxu0 %v910
    %2579 = vmatpush1.bf16.msra.mxu0 %v909
    %2580 = vmatprep.subr.bf16.mxu0 %v908
    %2581 = vmatpush1.bf16.msra.mxu0 %v907
    %2582 = vmatprep.subr.bf16.mxu0 %v906
    %2583 = vmatpush1.bf16.msra.mxu0 %v905
    %2584 = vmatprep.subr.bf16.mxu0 %v904
    %2585 = vmatpush1.bf16.msra.mxu0 %v903
    %2586 = vmatprep.subr.bf16.mxu0 %v902
    %2587 = vmatpush1.bf16.msra.mxu0 %v901
    %2588 = vmatprep.subr.bf16.mxu0 %v900
    %2589 = vmatpush1.bf16.msra.mxu0 %v899
    %2590 = vmatprep.subr.bf16.mxu0 0
    %2591 = vmatpush2.bf16.msra.mxu0 0
    %2592 = vmatprep.subr.bf16.mxu0 0
    %2593 = vmatpush2.bf16.msra.mxu0 0
    %2594 = vmatprep.subr.bf16.mxu0 0
    %2595 = vmatpush2.bf16.msra.mxu0 0
    %2596 = vmatprep.subr.bf16.mxu0 0
    %2597 = vmatpush2.bf16.msra.mxu0 0
    %2598 = vmatprep.subr.bf16.mxu0 0
    %2599 = vmatpush2.bf16.msra.mxu0 0
    %2600 = vmatprep.subr.bf16.mxu0 0
    %2601 = vmatpush2.bf16.msra.mxu0 0
    %2602 = vmatprep.subr.bf16.mxu0 0
    %2603 = vmatpush2.bf16.msra.mxu0 0
    %2604 = vmatprep.subr.bf16.mxu0 0
    %2605 = vmatpush2.bf16.msra.mxu0 0
    %2606 = vmatprep.mubr.bf16.mxu0 0
    %2607 = vmatmul.mubr.bf16.gmra.mxu0 %v2573
    %v2608 = vpop.f32.mrf.mxu0
    %v2609 = vadd.f32 %v381, %v2608
    %v2610 = vpop.f32.mrf.mxu0
    %v2611 = vadd.f32 %v385, %v2610
    %v2612 = vpop.f32.mrf.mxu0
    %v2613 = vpop.f32.mrf.mxu0
    %2614 = vdwg.mxu0
    %v2615 = vld [vmem:[#allocation2 + $0x70] sm:$0xff]
    %v2616 = vld [vmem:[#allocation2 + $0x78] sm:$0xff]
    %2617 = vmatprep.subr.bf16.mxu0 %v469
    %2618 = vmatpush1.bf16.msra.mxu0 %v468
    %2619 = vmatprep.subr.bf16.mxu0 %v467
    %2620 = vmatpush1.bf16.msra.mxu0 %v466
    %2621 = vmatprep.subr.bf16.mxu0 %v465
    %2622 = vmatpush1.bf16.msra.mxu0 %v464
    %2623 = vmatprep.subr.bf16.mxu0 %v463
    %2624 = vmatpush1.bf16.msra.mxu0 %v462
    %2625 = vmatprep.subr.bf16.mxu0 %v461
    %2626 = vmatpush1.bf16.msra.mxu0 %v460
    %2627 = vmatprep.subr.bf16.mxu0 %v459
    %2628 = vmatpush1.bf16.msra.mxu0 %v458
    %2629 = vmatprep.subr.bf16.mxu0 %v457
    %2630 = vmatpush1.bf16.msra.mxu0 %v456
    %2631 = vmatprep.subr.bf16.mxu0 %v455
    %2632 = vmatpush1.bf16.msra.mxu0 %v454
    %2633 = vmatprep.subr.bf16.mxu0 0
    %2634 = vmatpush2.bf16.msra.mxu0 0
    %2635 = vmatprep.subr.bf16.mxu0 0
    %2636 = vmatpush2.bf16.msra.mxu0 0
    %2637 = vmatprep.subr.bf16.mxu0 0
    %2638 = vmatpush2.bf16.msra.mxu0 0
    %2639 = vmatprep.subr.bf16.mxu0 0
    %2640 = vmatpush2.bf16.msra.mxu0 0
    %2641 = vmatprep.subr.bf16.mxu0 0
    %2642 = vmatpush2.bf16.msra.mxu0 0
    %2643 = vmatprep.subr.bf16.mxu0 0
    %2644 = vmatpush2.bf16.msra.mxu0 0
    %2645 = vmatprep.subr.bf16.mxu0 0
    %2646 = vmatpush2.bf16.msra.mxu0 0
    %2647 = vmatprep.subr.bf16.mxu0 0
    %2648 = vmatpush2.bf16.msra.mxu0 0
    %2649 = vmatprep.mubr.bf16.mxu0 0
    %2650 = vmatmul.mubr.bf16.gmra.mxu0 %v2416
    %v2651 = vpop.f32.mrf.mxu0
    %v2652 = vadd.f32 0.0, %v2651
    %v2653 = vpop.f32.mrf.mxu0
    %v2654 = vadd.f32 0.0, %v2653
    %v2655 = vpop.f32.mrf.mxu0
    %v2656 = vpop.f32.mrf.mxu0
    %2657 = vdwg.mxu0
    %v2658 = vadd.f32 %v2615, %v2652
    %v2659 = vxor.u32 %v2658, 2147483648
    %v2660 = vmul.f32 %v2659, 1.442695
    %v2661 = vpow.pop %v2660
    %v2662 = vadd.f32 %v2661, 1.0
    %v2663 = vrcp.pop %v2662
    %v2664 = vmul.f32 1.0, %v2663
    %2665 = vrot.lane.b32.xlu0 %v2664, 64
    %v2666 = vpop.permute.xlu0 %2665
    %v2667 = vadd.f32 %v2654, %v348
    %v2668 = vmul.f32 %v2664, %v2667
    %v2669 = vadd.f32 %v2616, %v2668
    %v2670 = vtanh.pop %v2669
    %v2671 = vsub.f32 %v2415, %v2670
    %v2672 = vmul.f32 %v2666, %v2671
    %v2673 = vadd.f32 %v2670, %v2672
    %v2674 = vpack.c.bf16 %v2673, %v2673
    %2675 = vmatprep.subr.bf16.mxu0 %v623
    %2676 = vmatpush1.bf16.msra.mxu0 %v622
    %2677 = vmatprep.subr.bf16.mxu0 %v621
    %2678 = vmatpush1.bf16.msra.mxu0 %v620
    %2679 = vmatprep.subr.bf16.mxu0 %v619
    %2680 = vmatpush1.bf16.msra.mxu0 %v618
    %2681 = vmatprep.subr.bf16.mxu0 %v617
    %2682 = vmatpush1.bf16.msra.mxu0 %v616
    %2683 = vmatprep.subr.bf16.mxu0 %v615
    %2684 = vmatpush1.bf16.msra.mxu0 %v614
    %2685 = vmatprep.subr.bf16.mxu0 %v613
    %2686 = vmatpush1.bf16.msra.mxu0 %v612
    %2687 = vmatprep.subr.bf16.mxu0 %v611
    %2688 = vmatpush1.bf16.msra.mxu0 %v610
    %2689 = vmatprep.subr.bf16.mxu0 %v609
    %2690 = vmatpush1.bf16.msra.mxu0 %v608
    %2691 = vmatprep.subr.bf16.mxu0 0
    %2692 = vmatpush2.bf16.msra.mxu0 0
    %2693 = vmatprep.subr.bf16.mxu0 0
    %2694 = vmatpush2.bf16.msra.mxu0 0
    %2695 = vmatprep.subr.bf16.mxu0 0
    %2696 = vmatpush2.bf16.msra.mxu0 0
    %2697 = vmatprep.subr.bf16.mxu0 0
    %2698 = vmatpush2.bf16.msra.mxu0 0
    %2699 = vmatprep.subr.bf16.mxu0 0
    %2700 = vmatpush2.bf16.msra.mxu0 0
    %2701 = vmatprep.subr.bf16.mxu0 0
    %2702 = vmatpush2.bf16.msra.mxu0 0
    %2703 = vmatprep.subr.bf16.mxu0 0
    %2704 = vmatpush2.bf16.msra.mxu0 0
    %2705 = vmatprep.subr.bf16.mxu0 0
    %2706 = vmatpush2.bf16.msra.mxu0 0
    %2707 = vmatprep.mubr.bf16.mxu0 0
    %2708 = vmatmul.mubr.bf16.gmra.mxu0 %v2674
    %v2709 = vpop.f32.mrf.mxu0
    %v2710 = vadd.f32 %v369, %v2709
    %v2711 = vpop.f32.mrf.mxu0
    %v2712 = vadd.f32 %v373, %v2711
    %v2713 = vpop.f32.mrf.mxu0
    %v2714 = vpop.f32.mrf.mxu0
    %2715 = vdwg.mxu0
    %v2716 = vpack.c.bf16 %v2515, %v2515
    %2717 = vmatprep.subr.bf16.mxu0 %v1152
    %2718 = vmatpush1.bf16.msra.mxu0 %v1151
    %2719 = vmatprep.subr.bf16.mxu0 %v1150
    %2720 = vmatpush1.bf16.msra.mxu0 %v1149
    %2721 = vmatprep.subr.bf16.mxu0 %v1148
    %2722 = vmatpush1.bf16.msra.mxu0 %v1147
    %2723 = vmatprep.subr.bf16.mxu0 %v1146
    %2724 = vmatpush1.bf16.msra.mxu0 %v1145
    %2725 = vmatprep.subr.bf16.mxu0 %v1144
    %2726 = vmatpush1.bf16.msra.mxu0 %v1143
    %2727 = vmatprep.subr.bf16.mxu0 %v1142
    %2728 = vmatpush1.bf16.msra.mxu0 %v1141
    %2729 = vmatprep.subr.bf16.mxu0 %v1140
    %2730 = vmatpush1.bf16.msra.mxu0 %v1139
    %2731 = vmatprep.subr.bf16.mxu0 %v1138
    %2732 = vmatpush1.bf16.msra.mxu0 %v1137
    %2733 = vmatprep.subr.bf16.mxu0 0
    %2734 = vmatpush2.bf16.msra.mxu0 0
    %2735 = vmatprep.subr.bf16.mxu0 0
    %2736 = vmatpush2.bf16.msra.mxu0 0
    %2737 = vmatprep.subr.bf16.mxu0 0
    %2738 = vmatpush2.bf16.msra.mxu0 0
    %2739 = vmatprep.subr.bf16.mxu0 0
    %2740 = vmatpush2.bf16.msra.mxu0 0
    %2741 = vmatprep.subr.bf16.mxu0 0
    %2742 = vmatpush2.bf16.msra.mxu0 0
    %2743 = vmatprep.subr.bf16.mxu0 0
    %2744 = vmatpush2.bf16.msra.mxu0 0
    %2745 = vmatprep.subr.bf16.mxu0 0
    %2746 = vmatpush2.bf16.msra.mxu0 0
    %2747 = vmatprep.subr.bf16.mxu0 0
    %2748 = vmatpush2.bf16.msra.mxu0 0
    %2749 = vmatprep.mubr.bf16.mxu0 0
    %2750 = vmatmul.mubr.bf16.gmra.mxu0 %v2716
    %v2751 = vpop.f32.mrf.mxu0
    %v2752 = vadd.f32 0.0, %v2751
    %v2753 = vpop.f32.mrf.mxu0
    %v2754 = vadd.f32 0.0, %v2753
    %v2755 = vpop.f32.mrf.mxu0
    %v2756 = vpop.f32.mrf.mxu0
    %2757 = vdwg.mxu0
    %v2758 = vadd.f32 %v2609, %v2752
    %v2759 = vxor.u32 %v2758, 2147483648
    %v2760 = vmul.f32 %v2759, 1.442695
    %v2761 = vpow.pop %v2760
    %v2762 = vadd.f32 %v2761, 1.0
    %v2763 = vrcp.pop %v2762
    %v2764 = vmul.f32 1.0, %v2763
    %2765 = vrot.lane.b32.xlu0 %v2764, 64
    %v2766 = vpop.permute.xlu0 %2765
    %v2767 = vadd.f32 %v2754, %v362
    %v2768 = vmul.f32 %v2764, %v2767
    %v2769 = vadd.f32 %v2611, %v2768
    %v2770 = vtanh.pop %v2769
    %v2771 = vsub.f32 %v2515, %v2770
    %v2772 = vmul.f32 %v2766, %v2771
    %v2773 = vadd.f32 %v2770, %v2772
    %2774 = vmatprep.subr.bf16.mxu0 %v760
    %2775 = vmatpush1.bf16.msra.mxu0 %v759
    %2776 = vmatprep.subr.bf16.mxu0 %v758
    %2777 = vmatpush1.bf16.msra.mxu0 %v757
    %2778 = vmatprep.subr.bf16.mxu0 %v756
    %2779 = vmatpush1.bf16.msra.mxu0 %v755
    %2780 = vmatprep.subr.bf16.mxu0 %v754
    %2781 = vmatpush1.bf16.msra.mxu0 %v753
    %2782 = vmatprep.subr.bf16.mxu0 %v752
    %2783 = vmatpush1.bf16.msra.mxu0 %v751
    %2784 = vmatprep.subr.bf16.mxu0 %v750
    %2785 = vmatpush1.bf16.msra.mxu0 %v749
    %2786 = vmatprep.subr.bf16.mxu0 %v748
    %2787 = vmatpush1.bf16.msra.mxu0 %v747
    %2788 = vmatprep.subr.bf16.mxu0 %v746
    %2789 = vmatpush1.bf16.msra.mxu0 %v745
    %2790 = vmatprep.subr.bf16.mxu0 0
    %2791 = vmatpush2.bf16.msra.mxu0 0
    %2792 = vmatprep.subr.bf16.mxu0 0
    %2793 = vmatpush2.bf16.msra.mxu0 0
    %2794 = vmatprep.subr.bf16.mxu0 0
    %2795 = vmatpush2.bf16.msra.mxu0 0
    %2796 = vmatprep.subr.bf16.mxu0 0
    %2797 = vmatpush2.bf16.msra.mxu0 0
    %2798 = vmatprep.subr.bf16.mxu0 0
    %2799 = vmatpush2.bf16.msra.mxu0 0
    %2800 = vmatprep.subr.bf16.mxu0 0
    %2801 = vmatpush2.bf16.msra.mxu0 0
    %2802 = vmatprep.subr.bf16.mxu0 0
    %2803 = vmatpush2.bf16.msra.mxu0 0
    %2804 = vmatprep.subr.bf16.mxu0 0
    %2805 = vmatpush2.bf16.msra.mxu0 0
    %2806 = vmatprep.mubr.bf16.mxu0 0
    %2807 = vmatmul.mubr.bf16.gmra.mxu0 %v2573
    %v2808 = vpop.f32.mrf.mxu0
    %v2809 = vadd.f32 0.0, %v2808
    %v2810 = vpop.f32.mrf.mxu0
    %v2811 = vadd.f32 0.0, %v2810
    %v2812 = vpop.f32.mrf.mxu0
    %v2813 = vpop.f32.mrf.mxu0
    %2814 = vdwg.mxu0
    %v2815 = vadd.f32 %v2710, %v2809
    %v2816 = vxor.u32 %v2815, 2147483648
    %v2817 = vmul.f32 %v2816, 1.442695
    %v2818 = vpow.pop %v2817
    %v2819 = vadd.f32 %v2818, 1.0
    %v2820 = vrcp.pop %v2819
    %v2821 = vmul.f32 1.0, %v2820
    %2822 = vrot.lane.b32.xlu0 %v2821, 64
    %v2823 = vpop.permute.xlu0 %2822
    %v2824 = vadd.f32 %v2811, %v355
    %v2825 = vmul.f32 %v2821, %v2824
    %v2826 = vadd.f32 %v2712, %v2825
    %v2827 = vtanh.pop %v2826
    %v2828 = vsub.f32 %v2572, %v2827
    %v2829 = vmul.f32 %v2823, %v2828
    %v2830 = vadd.f32 %v2827, %v2829
    %v2831 = vpack.c.bf16 %v2830, %v2830
    %2832 = vmatprep.subr.bf16.mxu0 %v914
    %2833 = vmatpush1.bf16.msra.mxu0 %v913
    %2834 = vmatprep.subr.bf16.mxu0 %v912
    %2835 = vmatpush1.bf16.msra.mxu0 %v911
    %2836 = vmatprep.subr.bf16.mxu0 %v910
    %2837 = vmatpush1.bf16.msra.mxu0 %v909
    %2838 = vmatprep.subr.bf16.mxu0 %v908
    %2839 = vmatpush1.bf16.msra.mxu0 %v907
    %2840 = vmatprep.subr.bf16.mxu0 %v906
    %2841 = vmatpush1.bf16.msra.mxu0 %v905
    %2842 = vmatprep.subr.bf16.mxu0 %v904
    %2843 = vmatpush1.bf16.msra.mxu0 %v903
    %2844 = vmatprep.subr.bf16.mxu0 %v902
    %2845 = vmatpush1.bf16.msra.mxu0 %v901
    %2846 = vmatprep.subr.bf16.mxu0 %v900
    %2847 = vmatpush1.bf16.msra.mxu0 %v899
    %2848 = vmatprep.subr.bf16.mxu0 0
    %2849 = vmatpush2.bf16.msra.mxu0 0
    %2850 = vmatprep.subr.bf16.mxu0 0
    %2851 = vmatpush2.bf16.msra.mxu0 0
    %2852 = vmatprep.subr.bf16.mxu0 0
    %2853 = vmatpush2.bf16.msra.mxu0 0
    %2854 = vmatprep.subr.bf16.mxu0 0
    %2855 = vmatpush2.bf16.msra.mxu0 0
    %2856 = vmatprep.subr.bf16.mxu0 0
    %2857 = vmatpush2.bf16.msra.mxu0 0
    %2858 = vmatprep.subr.bf16.mxu0 0
    %2859 = vmatpush2.bf16.msra.mxu0 0
    %2860 = vmatprep.subr.bf16.mxu0 0
    %2861 = vmatpush2.bf16.msra.mxu0 0
    %2862 = vmatprep.subr.bf16.mxu0 0
    %2863 = vmatpush2.bf16.msra.mxu0 0
    %2864 = vmatprep.mubr.bf16.mxu0 0
    %2865 = vmatmul.mubr.bf16.gmra.mxu0 %v2831
    %v2866 = vpop.f32.mrf.mxu0
    %v2867 = vadd.f32 %v381, %v2866
    %v2868 = vpop.f32.mrf.mxu0
    %v2869 = vadd.f32 %v385, %v2868
    %v2870 = vpop.f32.mrf.mxu0
    %v2871 = vpop.f32.mrf.mxu0
    %2872 = vdwg.mxu0
    %v2873 = vpack.c.bf16 %v2773, %v2773
    %2874 = vmatprep.subr.bf16.mxu0 %v1152
    %2875 = vmatpush1.bf16.msra.mxu0 %v1151
    %2876 = vmatprep.subr.bf16.mxu0 %v1150
    %2877 = vmatpush1.bf16.msra.mxu0 %v1149
    %2878 = vmatprep.subr.bf16.mxu0 %v1148
    %2879 = vmatpush1.bf16.msra.mxu0 %v1147
    %2880 = vmatprep.subr.bf16.mxu0 %v1146
    %2881 = vmatpush1.bf16.msra.mxu0 %v1145
    %2882 = vmatprep.subr.bf16.mxu0 %v1144
    %2883 = vmatpush1.bf16.msra.mxu0 %v1143
    %2884 = vmatprep.subr.bf16.mxu0 %v1142
    %2885 = vmatpush1.bf16.msra.mxu0 %v1141
    %2886 = vmatprep.subr.bf16.mxu0 %v1140
    %2887 = vmatpush1.bf16.msra.mxu0 %v1139
    %2888 = vmatprep.subr.bf16.mxu0 %v1138
    %2889 = vmatpush1.bf16.msra.mxu0 %v1137
    %2890 = vmatprep.subr.bf16.mxu0 0
    %2891 = vmatpush2.bf16.msra.mxu0 0
    %2892 = vmatprep.subr.bf16.mxu0 0
    %2893 = vmatpush2.bf16.msra.mxu0 0
    %2894 = vmatprep.subr.bf16.mxu0 0
    %2895 = vmatpush2.bf16.msra.mxu0 0
    %2896 = vmatprep.subr.bf16.mxu0 0
    %2897 = vmatpush2.bf16.msra.mxu0 0
    %2898 = vmatprep.subr.bf16.mxu0 0
    %2899 = vmatpush2.bf16.msra.mxu0 0
    %2900 = vmatprep.subr.bf16.mxu0 0
    %2901 = vmatpush2.bf16.msra.mxu0 0
    %2902 = vmatprep.subr.bf16.mxu0 0
    %2903 = vmatpush2.bf16.msra.mxu0 0
    %2904 = vmatprep.subr.bf16.mxu0 0
    %2905 = vmatpush2.bf16.msra.mxu0 0
    %2906 = vmatprep.mubr.bf16.mxu0 0
    %2907 = vmatmul.mubr.bf16.gmra.mxu0 %v2873
    %v2908 = vpop.f32.mrf.mxu0
    %v2909 = vadd.f32 0.0, %v2908
    %v2910 = vpop.f32.mrf.mxu0
    %v2911 = vadd.f32 0.0, %v2910
    %v2912 = vpop.f32.mrf.mxu0
    %v2913 = vpop.f32.mrf.mxu0
    %2914 = vdwg.mxu0
    %v2915 = vadd.f32 %v2867, %v2909
    %v2916 = vxor.u32 %v2915, 2147483648
    %v2917 = vmul.f32 %v2916, 1.442695
    %v2918 = vpow.pop %v2917
    %v2919 = vadd.f32 %v2918, 1.0
    %v2920 = vrcp.pop %v2919
    %v2921 = vmul.f32 1.0, %v2920
    %2922 = vrot.lane.b32.xlu0 %v2921, 64
    %v2923 = vpop.permute.xlu0 %2922
    %v2924 = vadd.f32 %v2911, %v362
    %v2925 = vmul.f32 %v2921, %v2924
    %v2926 = vadd.f32 %v2869, %v2925
    %v2927 = vtanh.pop %v2926
    %v2928 = vsub.f32 %v2773, %v2927
    %v2929 = vmul.f32 %v2923, %v2928
    %v2930 = vadd.f32 %v2927, %v2929
    %v2931 = vpack.c.bf16 %v2930, %v2930
    %v2932 = vld [vmem:[%s13] sm:$0xf]
    %v2933 = vld [vmem:[%s13 + $0x4] sm:$0xf]
    %v2934 = vld [vmem:[%s13 + $0x8] sm:$0xf]
    %v2935 = vld [vmem:[%s13 + $0xc] sm:$0xf]
    %v2936 = vld [vmem:[%s13 + $0x10] sm:$0xf]
    %v2937 = vld [vmem:[%s13 + $0x14] sm:$0xf]
    %v2938 = vld [vmem:[%s13 + $0x18] sm:$0xf]
    %v2939 = vld [vmem:[%s13 + $0x1c] sm:$0xf]
    %v2940 = vld [vmem:[%s13 + $0x20] sm:$0xf]
    %v2941 = vld [vmem:[%s13 + $0x24] sm:$0xf]
    %v2942 = vld [vmem:[%s13 + $0x28] sm:$0xf]
    %v2943 = vld [vmem:[%s13 + $0x2c] sm:$0xf]
    %v2944 = vld [vmem:[%s13 + $0x30] sm:$0xf]
    %v2945 = vld [vmem:[%s13 + $0x34] sm:$0xf]
    %v2946 = vld [vmem:[%s13 + $0x38] sm:$0xf]
    %v2947 = vld [vmem:[%s13 + $0x3c] sm:$0xf]
    %v2948 = vld [vmem:[%s14] sm:$0x1]
    %v2950 = vlaneseq
    %v2951 = vshrl.u32 %v2950, 7
    %v2952 = vsub.s32 0, %v2951
    %v2953 = vrot.slane %v2948, %v2952
    %v2971 = vunpack.c.l.b16 %v2932
    %v2972 = vunpack.c.l.b16 %v2933
    %v2973 = vunpack.c.l.b16 %v2934
    %v2974 = vunpack.c.l.b16 %v2935
    %v2975 = vunpack.c.l.b16 %v2936
    %v2976 = vunpack.c.l.b16 %v2937
    %v2977 = vunpack.c.l.b16 %v2938
    %v2978 = vunpack.c.l.b16 %v2939
    %v2979 = vunpack.c.l.b16 %v2940
    %v2980 = vunpack.c.l.b16 %v2941
    %v2981 = vunpack.c.l.b16 %v2942
    %v2982 = vunpack.c.l.b16 %v2943
    %v2983 = vunpack.c.l.b16 %v2944
    %v2984 = vunpack.c.l.b16 %v2945
    %v2985 = vunpack.c.l.b16 %v2946
    %v2986 = vunpack.c.l.b16 %v2947
    %v2987 = vpack.c.b16 %v2972, %v2971
    %v2988 = vpack.c.b16 %v2974, %v2973
    %v2989 = vpack.c.b16 %v2976, %v2975
    %v2990 = vpack.c.b16 %v2978, %v2977
    %v2991 = vpack.c.b16 %v2980, %v2979
    %v2992 = vpack.c.b16 %v2982, %v2981
    %v2993 = vpack.c.b16 %v2984, %v2983
    %v2994 = vpack.c.b16 %v2986, %v2985
    %3003 = vmatprep.subr.bf16.mxu0 0
    %3004 = vmatpush1.bf16.msra.mxu0 %v2994
    %3005 = vmatprep.subr.bf16.mxu0 0
    %3006 = vmatpush1.bf16.msra.mxu0 %v2993
    %3007 = vmatprep.subr.bf16.mxu0 0
    %3008 = vmatpush1.bf16.msra.mxu0 %v2992
    %3009 = vmatprep.subr.bf16.mxu0 0
    %3010 = vmatpush1.bf16.msra.mxu0 %v2991
    %3011 = vmatprep.subr.bf16.mxu0 0
    %3012 = vmatpush1.bf16.msra.mxu0 %v2990
    %3013 = vmatprep.subr.bf16.mxu0 0
    %3014 = vmatpush1.bf16.msra.mxu0 %v2989
    %3015 = vmatprep.subr.bf16.mxu0 0
    %3016 = vmatpush1.bf16.msra.mxu0 %v2988
    %3017 = vmatprep.subr.bf16.mxu0 0
    %3018 = vmatpush1.bf16.msra.mxu0 %v2987
    %3019 = vmatprep.subr.bf16.mxu0 0
    %3020 = vmatpush2.bf16.msra.mxu0 0
    %3021 = vmatprep.subr.bf16.mxu0 0
    %3022 = vmatpush2.bf16.msra.mxu0 0
    %3023 = vmatprep.subr.bf16.mxu0 0
    %3024 = vmatpush2.bf16.msra.mxu0 0
    %3025 = vmatprep.subr.bf16.mxu0 0
    %3026 = vmatpush2.bf16.msra.mxu0 0
    %3027 = vmatprep.subr.bf16.mxu0 0
    %3028 = vmatpush2.bf16.msra.mxu0 0
    %3029 = vmatprep.subr.bf16.mxu0 0
    %3030 = vmatpush2.bf16.msra.mxu0 0
    %3031 = vmatprep.subr.bf16.mxu0 0
    %3032 = vmatpush2.bf16.msra.mxu0 0
    %3033 = vmatprep.subr.bf16.mxu0 0
    %3034 = vmatpush2.bf16.msra.mxu0 0
    %3035 = vmatprep.mubr.bf16.mxu0 0
    %3036 = vmatmul.mubr.bf16.gmra.mxu0 %v2931
    %v3037 = vpop.f32.mrf.mxu0
    %v3038 = vadd.f32 %v2953, %v3037
    %v3039 = vpop.f32.mrf.mxu0
    %v3040 = vpop.f32.mrf.mxu0
    %v3041 = vpop.f32.mrf.mxu0
    %3042 = vdwg.mxu0
    %3043 = vst [vmem:[#allocation14] sm:$0xff] %v3038
    // Predicated region
    $region86: #{_forward_padded.1} parent=1 // pred_check
      _
    $region87: #{_forward_padded.1} parent=1 // pred_check_branch
      %3045 = sbr.rel (0) target = $region89
    $region88: #{_forward_padded.1} parent=1 // pred_region
      %s3047 = ssub.s32 128, 128
      %3048 = vsyncadd [#allocation5], %s3047
      %s3050 = sshll.u32 [#allocation14], 4
      %s3051 = int_to_ptr.vmem [resolvable:$true] %s3050
      %3053 = dma.vmem_to_hbm [thread:$0]  %s3051, 128, %s15, [#allocation5]
    $region89: #{_forward_padded.1} parent=1 // pred_fallthru
      _
    // Predicated region
    $region90: #{_forward_padded.1} parent=1 // pred_check
      _
    $region91: #{_forward_padded.1} parent=1 // pred_check_branch
      %3055 = sbr.rel (0) target = $region93
    $region92: #{_forward_padded.1} parent=1 // pred_region
      %3056 = dma.done [#allocation5], 128
    $region93: #{_forward_padded.1} parent=1 // pred_fallthru
      _
    %3057 = vsyncpa [#allocation4], 1
    %3058 = vsyncpa [#allocation7], 1
    %3059 = vsyncpa [#allocation10], 1
    %3060 = vsyncpa [#allocation13], 1
    %3061 = vsyncpa [#allocation5], 1

</llo_original>
